<compile_context>
chip_gen: v6e
topology: v6e:2x2x1
jax: 0.10.0
libtpu: 0.0.40
codegen_flags: <defaults>
</compile_context>

<pallas_src>
import functools

import jax
import jax.numpy as jnp
from jax.experimental import pallas as pl
from jax.experimental.pallas import tpu as pltpu


# ----------------------------------------------------------------------------
# Hardware-aware tiling helpers
# ----------------------------------------------------------------------------
@functools.lru_cache(maxsize=None)
def _vmem_capacity_bytes():
    try:
        return int(pltpu.get_tpu_info().vmem_capacity_bytes)
    except Exception:
        return 64 * 1024 * 1024  # conservative default (v7x per-core VMEM)


def _compiler_params():
    cap = _vmem_capacity_bytes()
    return pltpu.CompilerParams(
        dimension_semantics=("parallel", "parallel"),
        vmem_limit_bytes=int(cap * 0.7),
    )


def _pick_tile_h(H, bytes_per_row, fixed_bytes=0, multiple_of=1):
    """Largest row-tile (divisor of H) that fits a fraction of VMEM."""
    budget = max(1 << 20, _vmem_capacity_bytes() // 5)
    avail = max(1, budget - min(fixed_bytes, budget // 2))
    max_rows = max(1, avail // max(1, bytes_per_row))
    cap = int(min(H, max_rows, max(4, H // 2)))
    for th in range(cap, 0, -1):
        if H % th == 0 and th % multiple_of == 0:
            return th
    return H  # full extent is always legal w.r.t. the (8,128) rule


def _make_row_halos(x, th):
    """Tiny per-tile halo tensor (N, n_tiles, 2, W, C).

    [:, i, 0] = row i*th - 1 (zeros for i == 0)
    [:, i, 1] = row (i+1)*th (zeros for i == n_tiles - 1)
    Only 2 rows per tile are gathered -> negligible HBM traffic (replaces a
    full-tensor jnp.pad round trip).
    """
    N, H, W, C = x.shape
    n_t = H // th
    halo = jnp.zeros((N, n_t, 2, W, C), x.dtype)
    if n_t > 1:
        top = x[:, th - 1:H - 1:th]  # rows th-1, 2th-1, ...
        bot = x[:, th:H:th]          # rows th, 2th, ...
        halo = halo.at[:, 1:, 0].set(top)
        halo = halo.at[:, :-1, 1].set(bot)
    return halo


# ----------------------------------------------------------------------------
# Pallas kernels
# ----------------------------------------------------------------------------
def _conv3x3_same_acc(x_ref, halo_ref, w_ref, xslab_ref):
    """3x3 'same' conv accumulate (no bias). Returns f32 (TH, W, Cout).

    Only leading-dim (row) slices are used; the kw shift is handled with two
    pltpu.roll calls on the accumulated column groups + an edge mask, so no
    strided full-tile copies are materialized.
    """
    _, TH, W, Cin = x_ref.shape
    Cout = w_ref.shape[3]

    # Assemble the (TH+2, W, Cin) row slab (1 VMEM copy pass + 2 halo rows).
    xslab_ref[0] = halo_ref[0, 0, 0]
    xslab_ref[pl.ds(1, TH)] = x_ref[0]
    xslab_ref[TH + 1] = halo_ref[0, 0, 1]

    accL = jnp.zeros((TH * W, Cout), jnp.float32)
    accM = jnp.zeros((TH * W, Cout), jnp.float32)
    accR = jnp.zeros((TH * W, Cout), jnp.float32)
    for kh in range(3):
        s2d = xslab_ref[pl.ds(kh, TH)].reshape(TH * W, Cin)
        accL = accL + jnp.dot(s2d, w_ref[kh, 0], preferred_element_type=jnp.float32)
        accM = accM + jnp.dot(s2d, w_ref[kh, 1], preferred_element_type=jnp.float32)
        accR = accR + jnp.dot(s2d, w_ref[kh, 2], preferred_element_type=jnp.float32)

    # kw = 0 term needs column w-1 -> roll +1; kw = 2 term needs w+1 -> roll -1.
    accL = pltpu.roll(accL.reshape(TH, W, Cout), shift=1, axis=1)
    accR = pltpu.roll(accR.reshape(TH, W, Cout), shift=W - 1, axis=1)
    col = jax.lax.broadcasted_iota(jnp.int32, (TH, W, 1), 1)
    return (accM.reshape(TH, W, Cout)
            + jnp.where(col > 0, accL, 0.0)
            + jnp.where(col < W - 1, accR, 0.0))


def _conv3x3_kernel(x_ref, halo_ref, w_ref, b_ref, o_ref, xslab_ref, *, relu):
    acc = _conv3x3_same_acc(x_ref, halo_ref, w_ref, xslab_ref) + b_ref[...]
    if relu:
        acc = jnp.maximum(acc, 0.0)
    o_ref[0] = acc.astype(o_ref.dtype)


def _head_tail_kernel(x_ref, halo_ref, w3_ref, b3_ref, w1_ref, b1_ref, o_ref,
                      xslab_ref):
    # Fused: Conv3x3 -> ReLU -> Conv1x1 (Cout=1) -> ReLU, lane-dense (TH, W) out.
    acc = _conv3x3_same_acc(x_ref, halo_ref, w3_ref, xslab_ref) + b3_ref[...]
    acc = jnp.maximum(acc, 0.0)
    C2 = acc.shape[-1]
    w1 = w1_ref[...].astype(jnp.float32).reshape(1, 1, C2)
    z = jnp.sum(acc * w1, axis=-1) + b1_ref[...]          # (TH, W) + (1, 1)
    o_ref[0] = jnp.maximum(z, 0.0).astype(o_ref.dtype)


def _conv1x1_kernel(x_ref, w_ref, b_ref, o_ref, *, relu):
    _, TH, W, Cin = x_ref.shape
    Cout = o_ref.shape[3]
    y = jnp.dot(x_ref[0].reshape(TH * W, Cin), w_ref[...],
                preferred_element_type=jnp.float32) + b_ref[...]
    if relu:
        y = jnp.maximum(y, 0.0)
    o_ref[0] = y.reshape(TH, W, Cout).astype(o_ref.dtype)


def _convt2x2_kernel(x_ref, w_ref, b_ref, o_ref):
    # ConvTranspose2d(k=2, s=2) as one fused matmul; output written already
    # parity-interleaved:  o[0, i, di, j, dj*Cout + c] = out[2i+di, 2j+dj, c].
    _, TH, W, Cin = x_ref.shape
    C4 = w_ref.shape[1]
    C2 = C4 // 2
    y = jnp.dot(x_ref[0].reshape(TH * W, Cin), w_ref[...],
                preferred_element_type=jnp.float32) + b_ref[...]
    y = y.reshape(TH, W, C4).astype(o_ref.dtype)
    o_ref[0, :, 0, :, :] = y[:, :, :C2]
    o_ref[0, :, 1, :, :] = y[:, :, C2:]


# ----------------------------------------------------------------------------
# Pallas wrappers (NHWC)
# ----------------------------------------------------------------------------
def conv1x1(x, w, b, relu=False):
    N, H, W, Cin = x.shape
    Cout = w.shape[1]
    isz = x.dtype.itemsize
    th = _pick_tile_h(H, 2 * W * (Cin + Cout) * isz,
                      fixed_bytes=Cin * Cout * w.dtype.itemsize)
    ce = pl.CostEstimate(
        flops=2 * N * H * W * Cin * Cout, transcendentals=0,
        bytes_accessed=N * H * W * (Cin + Cout) * isz + Cin * Cout * w.dtype.itemsize)
    return pl.pallas_call(
        functools.partial(_conv1x1_kernel, relu=relu),
        out_shape=jax.ShapeDtypeStruct((N, H, W, Cout), x.dtype),
        grid=(N, H // th),
        in_specs=[
            pl.BlockSpec((1, th, W, Cin), lambda n, i: (n, i, 0, 0)),
            pl.BlockSpec((Cin, Cout), lambda n, i: (0, 0)),
            pl.BlockSpec((1, Cout), lambda n, i: (0, 0)),
        ],
        out_specs=pl.BlockSpec((1, th, W, Cout), lambda n, i: (n, i, 0, 0)),
        compiler_params=_compiler_params(),
        cost_estimate=ce,
    )(x, w, b.astype(jnp.float32).reshape(1, Cout))


def conv3x3(x, w, b, relu=False):
    # w: (3, 3, Cin, Cout), stride=1, padding=1 (PyTorch cross-correlation).
    N, H, W, Cin = x.shape
    Cout = w.shape[-1]
    isz = x.dtype.itemsize
    th = _pick_tile_h(H, W * (3 * Cin + 2 * Cout) * isz,
                      fixed_bytes=9 * Cin * Cout * w.dtype.itemsize)
    halo = _make_row_halos(x, th)
    ce = pl.CostEstimate(
        flops=2 * 9 * N * H * W * Cin * Cout, transcendentals=0,
        bytes_accessed=N * H * W * (Cin + Cout) * isz
        + 9 * Cin * Cout * w.dtype.itemsize)
    return pl.pallas_call(
        functools.partial(_conv3x3_kernel, relu=relu),
        out_shape=jax.ShapeDtypeStruct((N, H, W, Cout), x.dtype),
        grid=(N, H // th),
        in_specs=[
            pl.BlockSpec((1, th, W, Cin), lambda n, i: (n, i, 0, 0)),
            pl.BlockSpec((1, 1, 2, W, Cin), lambda n, i: (n, i, 0, 0, 0)),
            pl.BlockSpec((3, 3, Cin, Cout), lambda n, i: (0, 0, 0, 0)),
            pl.BlockSpec((1, Cout), lambda n, i: (0, 0)),
        ],
        out_specs=pl.BlockSpec((1, th, W, Cout), lambda n, i: (n, i, 0, 0)),
        scratch_shapes=[pltpu.VMEM((th + 2, W, Cin), x.dtype)],
        compiler_params=_compiler_params(),
        cost_estimate=ce,
    )(x, halo, w, b.astype(jnp.float32).reshape(1, Cout))


def conv_transpose2x2(x, w, b):
    # w: (Cin, Cout, 2, 2) PyTorch ConvTranspose2d layout, stride=2, padding=0.
    N, H, W, Cin = x.shape
    Cout = w.shape[1]
    isz = x.dtype.itemsize
    wcat = jnp.transpose(w, (0, 2, 3, 1)).reshape(Cin, 4 * Cout)  # col=(di*2+dj)*Cout+c
    bcat = jnp.tile(b.astype(jnp.float32), 4).reshape(1, 4 * Cout)
    th = _pick_tile_h(H, 2 * W * (Cin + 4 * Cout) * isz,
                      fixed_bytes=4 * Cin * Cout * w.dtype.itemsize)
    ce = pl.CostEstimate(
        flops=2 * 4 * N * H * W * Cin * Cout, transcendentals=0,
        bytes_accessed=N * H * W * (Cin + 4 * Cout) * isz
        + 4 * Cin * Cout * w.dtype.itemsize)
    out = pl.pallas_call(
        _convt2x2_kernel,
        out_shape=jax.ShapeDtypeStruct((N, H, 2, W, 2 * Cout), x.dtype),
        grid=(N, H // th),
        in_specs=[
            pl.BlockSpec((1, th, W, Cin), lambda n, i: (n, i, 0, 0)),
            pl.BlockSpec((Cin, 4 * Cout), lambda n, i: (0, 0)),
            pl.BlockSpec((1, 4 * Cout), lambda n, i: (0, 0)),
        ],
        out_specs=pl.BlockSpec((1, th, 2, W, 2 * Cout), lambda n, i: (n, i, 0, 0, 0)),
        compiler_params=_compiler_params(),
        cost_estimate=ce,
    )(x, wcat, bcat)
    # Free contiguous reshape (no transpose / extra HBM pass).
    return out.reshape(N, 2 * H, 2 * W, Cout)


def head_tail(x, w3, b3, w1, b1):
    """Fused Conv3x3 -> ReLU -> Conv1x1(Cout=1) -> ReLU; returns (N, H, W) f32."""
    N, H, W, C1 = x.shape
    C2 = w3.shape[-1]
    assert w1.shape == (C2, 1), "fused head tail implemented for output_shape[1] == 1"
    isz = x.dtype.itemsize
    th = _pick_tile_h(H, W * (3 * C1 * isz + 2 * 4),
                      fixed_bytes=9 * C1 * C2 * w3.dtype.itemsize,
                      multiple_of=8)
    halo = _make_row_halos(x, th)
    ce = pl.CostEstimate(
        flops=2 * N * H * W * (9 * C1 * C2 + C2), transcendentals=0,
        bytes_accessed=N * H * W * (C1 * isz + 4) + 9 * C1 * C2 * w3.dtype.itemsize)
    return pl.pallas_call(
        _head_tail_kernel,
        out_shape=jax.ShapeDtypeStruct((N, H, W), jnp.float32),
        grid=(N, H // th),
        in_specs=[
            pl.BlockSpec((1, th, W, C1), lambda n, i: (n, i, 0, 0)),
            pl.BlockSpec((1, 1, 2, W, C1), lambda n, i: (n, i, 0, 0, 0)),
            pl.BlockSpec((3, 3, C1, C2), lambda n, i: (0, 0, 0, 0)),
            pl.BlockSpec((1, C2), lambda n, i: (0, 0)),
            pl.BlockSpec((1, C2), lambda n, i: (0, 0)),
            pl.BlockSpec((1, 1), lambda n, i: (0, 0)),
        ],
        out_specs=pl.BlockSpec((1, th, W), lambda n, i: (n, i, 0)),
        scratch_shapes=[pltpu.VMEM((th + 2, W, C1), x.dtype)],
        compiler_params=_compiler_params(),
        cost_estimate=ce,
    )(x, halo, w3, b3.astype(jnp.float32).reshape(1, C2),
      w1.astype(jnp.float32).reshape(1, C2),
      b1.astype(jnp.float32).reshape(1, 1))


# ----------------------------------------------------------------------------
# DepthPro (simplified) forward
# ----------------------------------------------------------------------------
def init_params(key, in_ch=3, dim_decoder=32, output_shape=(8, 1)):
    ks = jax.random.split(key, 8)
    s = 0.05
    half = dim_decoder // 2
    bf = jnp.bfloat16
    p = {
        # TODO(synk): real Encoder uses DINOv2-L/16 patch + image ViT encoders with
        # multi-resolution sliding windows; simplified to a 2x2 patch-embed
        # projection implemented as a Pallas 1x1-conv matmul.
        "enc_w": (jax.random.normal(ks[0], (4 * in_ch, dim_decoder)) * s).astype(bf),
        "enc_b": jnp.zeros((dim_decoder,), jnp.float32),
        # TODO(synk): real Decoder is a multi-resolution feature-fusion stack;
        # simplified to a 3x3 conv (features) and a 1x1 conv (features_0).
        "dec_w": (jax.random.normal(ks[1], (3, 3, dim_decoder, dim_decoder)) * s).astype(bf),
        "dec_b": jnp.zeros((dim_decoder,), jnp.float32),
        "dec0_w": (jax.random.normal(ks[2], (dim_decoder, dim_decoder)) * s).astype(bf),
        "dec0_b": jnp.zeros((dim_decoder,), jnp.float32),
        # Head (faithful to DepthPro.__init__ nn.Sequential)
        "h0_w": (jax.random.normal(ks[3], (3, 3, dim_decoder, half)) * s).astype(bf),
        "h0_b": jnp.zeros((half,), jnp.float32),
        "h1_w": (jax.random.normal(ks[4], (half, half, 2, 2)) * s).astype(bf),  # ConvTranspose2d
        "h1_b": jnp.zeros((half,), jnp.float32),
        "h2_w": (jax.random.normal(ks[5], (3, 3, half, output_shape[0])) * s).astype(bf),
        "h2_b": jnp.zeros((output_shape[0],), jnp.float32),
        "h4_w": (jax.random.normal(ks[6], (output_shape[0], output_shape[1])) * s).astype(jnp.float32),
        "h4_b": jnp.zeros((output_shape[1],), jnp.float32),  # head[4].bias.data.fill_(0)
        # TODO(synk): full FovNetwork (separate ViT fov encoder + conv head) not
        # implemented; simplified to global-mean-pool + linear over features_0.
        "fov_w": (jax.random.normal(ks[7], (dim_decoder, 1)) * s).astype(jnp.float32),
        "fov_b": jnp.full((1,), 60.0, jnp.float32),
    }
    return p


@jax.jit
def depth_pro_forward(x_nchw, p):
    """Returns (canonical_inverse_depth [N,1,H,W] f32, fov_deg [N,1] f32)."""
    N, C, H, W = x_nchw.shape
    x = jnp.transpose(x_nchw, (0, 2, 3, 1)).astype(jnp.bfloat16)  # NHWC, bf16

    # --- Encoder (simplified 2x2 patch embed, H/2 x W/2) ---
    # TODO(synk): the space-to-depth stays in XLA (3-channel input is a tiny
    # fraction of total HBM traffic); folding it into the kernel index_map is
    # possible but low value for this stand-in encoder.
    patches = x.reshape(N, H // 2, 2, W // 2, 2, C)
    patches = jnp.transpose(patches, (0, 1, 3, 2, 4, 5)).reshape(N, H // 2, W // 2, 4 * C)
    enc = conv1x1(patches, p["enc_w"], p["enc_b"], relu=True)

    # --- Decoder (simplified) -> features, features_0 ---
    features = conv3x3(enc, p["dec_w"], p["dec_b"], relu=False)
    features_0 = conv1x1(enc, p["dec0_w"], p["dec0_b"], relu=False)

    # --- Head (faithful): Conv3x3 -> ConvT2x2/s2 -> Conv3x3 -> ReLU -> Conv1x1 -> ReLU ---
    h = conv3x3(features, p["h0_w"], p["h0_b"], relu=False)
    h = conv_transpose2x2(h, p["h1_w"], p["h1_b"])
    depth_hw = head_tail(h, p["h2_w"], p["h2_b"], p["h4_w"], p["h4_b"])  # (N, H, W) f32
    canonical_inverse_depth = depth_hw[:, None, :, :]  # NCHW, C=1 (free expand_dims)

    # --- FOV head (simplified; uses detached features_0, as in the original) ---
    pooled = jnp.mean(jax.lax.stop_gradient(features_0).astype(jnp.float32), axis=(1, 2))
    fov_deg = pooled @ p["fov_w"] + p["fov_b"]  # (N, 1)

    return canonical_inverse_depth, fov_deg


if __name__ == "__main__":
    key = jax.random.PRNGKey(0)
    k_x, k_p = jax.random.split(key)

    N, C, H, W = 2, 3, 16, 16          # small stand-in for the 1536x1536 RGB input
    dim_decoder = 32                   # stand-in for config.decoder_features=256
    output_shape = (8, 1)              # stand-in for config.output_shape=(32, 1)

    x = jax.random.uniform(k_x, (N, C, H, W), jnp.float32)
    params = init_params(k_p, in_ch=C, dim_decoder=dim_decoder, output_shape=output_shape)

    depth, fov_deg = depth_pro_forward(x, params)
    jax.block_until_ready((depth, fov_deg))

    assert depth.shape == (N, output_shape[1], H, W)
    assert fov_deg.shape == (N, 1)
    assert bool(jnp.all(jnp.isfinite(depth))) and bool(jnp.all(depth >= 0.0))
    assert bool(jnp.all(jnp.isfinite(fov_deg)))
    print("KERNEL_OK")
</pallas_src>

<mosaic_0001>
module attributes {stable_mosaic.version = 11 : i64} {
  func.func @_conv1x1_kernel(%arg0: i32, %arg1: i32, %arg2: memref<1x4x8x12xbf16, #tpu.memory_space<vmem>>, %arg3: memref<12x32xbf16, #tpu.memory_space<vmem>>, %arg4: memref<1x32xf32, #tpu.memory_space<vmem>>, %arg5: memref<1x4x8x32xbf16, #tpu.memory_space<vmem>>) attributes {dimension_semantics = [#tpu.dimension_semantics<parallel>, #tpu.dimension_semantics<parallel>], iteration_bounds = array<i64: 2, 2>, scalar_prefetch = 0 : i64, scratch_operands = 0 : i64, tpu.core_type = #tpu.core_type<tc>, window_params = [{transform_indices = @transform_0, window_bounds = array<i64: 1, 4, 8, 12>}, {pipeline_mode = #tpu.pipeline_mode<synchronous>, transform_indices = @transform_1, window_bounds = array<i64: 12, 32>}, {pipeline_mode = #tpu.pipeline_mode<synchronous>, transform_indices = @transform_2, window_bounds = array<i64: 1, 32>}, {transform_indices = @transform_3, window_bounds = array<i64: 1, 4, 8, 32>}]} {
    %c0 = arith.constant 0 : index
    %c0_0 = arith.constant 0 : index
    %c0_1 = arith.constant 0 : index
    %c0_2 = arith.constant 0 : index
    %0 = vector.load %arg2[%c0, %c0_0, %c0_1, %c0_2] : memref<1x4x8x12xbf16, #tpu.memory_space<vmem>>, vector<1x4x8x12xbf16>
    %1 = vector.shape_cast %0 : vector<1x4x8x12xbf16> to vector<4x8x12xbf16>
    %2 = vector.shape_cast %1 : vector<4x8x12xbf16> to vector<32x12xbf16>
    %c0_3 = arith.constant 0 : index
    %c0_4 = arith.constant 0 : index
    %3 = vector.load %arg3[%c0_3, %c0_4] : memref<12x32xbf16, #tpu.memory_space<vmem>>, vector<12x32xbf16>
    %cst = arith.constant dense<0.000000e+00> : vector<32x32xf32>
    %4 = tpu.matmul %2, %3, %cst {dimension_numbers = #tpu.dot_dimension_numbers<[1], [0], [0], [1], [0, 0, 1, 1], [], []>} : vector<32x12xbf16>, vector<12x32xbf16>, vector<32x32xf32> -> vector<32x32xf32>
    %c0_5 = arith.constant 0 : index
    %c0_6 = arith.constant 0 : index
    %5 = vector.load %arg4[%c0_5, %c0_6] : memref<1x32xf32, #tpu.memory_space<vmem>>, vector<1x32xf32>
    %6 = vector.broadcast %5 : vector<1x32xf32> to vector<32x32xf32>
    %7 = arith.addf %4, %6 : vector<32x32xf32>
    %cst_7 = arith.constant 0.000000e+00 : f32
    %8 = vector.broadcast %cst_7 : f32 to vector<32x32xf32>
    %9 = arith.maximumf %7, %8 : vector<32x32xf32>
    %10 = vector.shape_cast %9 : vector<32x32xf32> to vector<4x8x32xf32>
    %11 = arith.truncf %10 : vector<4x8x32xf32> to vector<4x8x32xbf16>
    %c0_8 = arith.constant 0 : index
    %c0_9 = arith.constant 0 : index
    %c0_10 = arith.constant 0 : index
    %c0_11 = arith.constant 0 : index
    %12 = vector.load %arg5[%c0_8, %c0_9, %c0_10, %c0_11] : memref<1x4x8x32xbf16, #tpu.memory_space<vmem>>, vector<1x4x8x32xbf16>
    %13 = vector.shape_cast %12 : vector<1x4x8x32xbf16> to vector<4x8x32xbf16>
    %14 = vector.shape_cast %11 : vector<4x8x32xbf16> to vector<1x4x8x32xbf16>
    tpu.vector_store %arg5[%c0_8, %c0_9, %c0_10, %c0_11], %14 {strides = array<i32>} : memref<1x4x8x32xbf16, #tpu.memory_space<vmem>>, vector<1x4x8x32xbf16>,
    return
  }
  func.func @transform_0(%arg0: i32, %arg1: i32) -> (i32, i32, i32, i32) {
    %c0_i32 = arith.constant 0 : i32
    %c0_i32_0 = arith.constant 0 : i32
    %c0_i32_1 = arith.constant 0 : i32
    return %arg0, %arg1, %c0_i32, %c0_i32_0 : i32, i32, i32, i32
  }
  func.func @transform_1(%arg0: i32, %arg1: i32) -> (i32, i32) {
    %c0_i32 = arith.constant 0 : i32
    %c0_i32_0 = arith.constant 0 : i32
    %c0_i32_1 = arith.constant 0 : i32
    return %c0_i32, %c0_i32_0 : i32, i32
  }
  func.func @transform_2(%arg0: i32, %arg1: i32) -> (i32, i32) {
    %c0_i32 = arith.constant 0 : i32
    %c0_i32_0 = arith.constant 0 : i32
    %c0_i32_1 = arith.constant 0 : i32
    return %c0_i32, %c0_i32_0 : i32, i32
  }
  func.func @transform_3(%arg0: i32, %arg1: i32) -> (i32, i32, i32, i32) {
    %c0_i32 = arith.constant 0 : i32
    %c0_i32_0 = arith.constant 0 : i32
    %c0_i32_1 = arith.constant 0 : i32
    return %arg0, %arg1, %c0_i32, %c0_i32_0 : i32, i32, i32, i32
  }
}

module attributes {stable_mosaic.version = 11 : i64} {
  func.func @_conv3x3_kernel(%arg0: i32, %arg1: i32, %arg2: memref<1x4x8x32xbf16, #tpu.memory_space<vmem>>, %arg3: memref<1x1x2x8x32xbf16, #tpu.memory_space<vmem>>, %arg4: memref<3x3x32x32xbf16, #tpu.memory_space<vmem>>, %arg5: memref<1x32xf32, #tpu.memory_space<vmem>>, %arg6: memref<1x4x8x32xbf16, #tpu.memory_space<vmem>>, %arg7: memref<6x8x32xbf16, #tpu.memory_space<vmem>>) attributes {dimension_semantics = [#tpu.dimension_semantics<parallel>, #tpu.dimension_semantics<parallel>], iteration_bounds = array<i64: 2, 2>, scalar_prefetch = 0 : i64, scratch_operands = 1 : i64, tpu.core_type = #tpu.core_type<tc>, window_params = [{transform_indices = @transform_0, window_bounds = array<i64: 1, 4, 8, 32>}, {transform_indices = @transform_1, window_bounds = array<i64: 1, 1, 2, 8, 32>}, {pipeline_mode = #tpu.pipeline_mode<synchronous>, transform_indices = @transform_2, window_bounds = array<i64: 3, 3, 32, 32>}, {pipeline_mode = #tpu.pipeline_mode<synchronous>, transform_indices = @transform_3, window_bounds = array<i64: 1, 32>}, {transform_indices = @transform_4, window_bounds = array<i64: 1, 4, 8, 32>}]} {
    %c0 = arith.constant 0 : index
    %c0_0 = arith.constant 0 : index
    %c0_1 = arith.constant 0 : index
    %c0_2 = arith.constant 0 : index
    %c0_3 = arith.constant 0 : index
    %0 = vector.load %arg3[%c0, %c0_0, %c0_1, %c0_2, %c0_3] : memref<1x1x2x8x32xbf16, #tpu.memory_space<vmem>>, vector<1x1x1x8x32xbf16>
    %1 = vector.shape_cast %0 : vector<1x1x1x8x32xbf16> to vector<8x32xbf16>
    %c0_4 = arith.constant 0 : index
    %c0_5 = arith.constant 0 : index
    %c0_6 = arith.constant 0 : index
    %2 = vector.load %arg7[%c0_4, %c0_5, %c0_6] : memref<6x8x32xbf16, #tpu.memory_space<vmem>>, vector<1x8x32xbf16>
    %3 = vector.shape_cast %2 : vector<1x8x32xbf16> to vector<8x32xbf16>
    %4 = vector.shape_cast %1 : vector<8x32xbf16> to vector<1x8x32xbf16>
    tpu.vector_store %arg7[%c0_4, %c0_5, %c0_6], %4 {strides = array<i32>} : memref<6x8x32xbf16, #tpu.memory_space<vmem>>, vector<1x8x32xbf16>,
    %c0_7 = arith.constant 0 : index
    %c0_8 = arith.constant 0 : index
    %c0_9 = arith.constant 0 : index
    %c0_10 = arith.constant 0 : index
    %5 = vector.load %arg2[%c0_7, %c0_8, %c0_9, %c0_10] : memref<1x4x8x32xbf16, #tpu.memory_space<vmem>>, vector<1x4x8x32xbf16>
    %6 = vector.shape_cast %5 : vector<1x4x8x32xbf16> to vector<4x8x32xbf16>
    %c1 = arith.constant 1 : index
    %c0_11 = arith.constant 0 : index
    %c0_12 = arith.constant 0 : index
    %7 = vector.load %arg7[%c1, %c0_11, %c0_12] : memref<6x8x32xbf16, #tpu.memory_space<vmem>>, vector<4x8x32xbf16>
    tpu.vector_store %arg7[%c1, %c0_11, %c0_12], %6 {strides = array<i32>} : memref<6x8x32xbf16, #tpu.memory_space<vmem>>, vector<4x8x32xbf16>,
    %c0_13 = arith.constant 0 : index
    %c0_14 = arith.constant 0 : index
    %c1_15 = arith.constant 1 : index
    %c0_16 = arith.constant 0 : index
    %c0_17 = arith.constant 0 : index
    %8 = vector.load %arg3[%c0_13, %c0_14, %c1_15, %c0_16, %c0_17] : memref<1x1x2x8x32xbf16, #tpu.memory_space<vmem>>, vector<1x1x1x8x32xbf16>
    %9 = vector.shape_cast %8 : vector<1x1x1x8x32xbf16> to vector<8x32xbf16>
    %c5 = arith.constant 5 : index
    %c0_18 = arith.constant 0 : index
    %c0_19 = arith.constant 0 : index
    %10 = vector.load %arg7[%c5, %c0_18, %c0_19] : memref<6x8x32xbf16, #tpu.memory_space<vmem>>, vector<1x8x32xbf16>
    %11 = vector.shape_cast %10 : vector<1x8x32xbf16> to vector<8x32xbf16>
    %12 = vector.shape_cast %9 : vector<8x32xbf16> to vector<1x8x32xbf16>
    tpu.vector_store %arg7[%c5, %c0_18, %c0_19], %12 {strides = array<i32>} : memref<6x8x32xbf16, #tpu.memory_space<vmem>>, vector<1x8x32xbf16>,
    %cst = arith.constant 0.000000e+00 : f32
    %13 = vector.broadcast %cst : f32 to vector<32x32xf32>
    %cst_20 = arith.constant 0.000000e+00 : f32
    %14 = vector.broadcast %cst_20 : f32 to vector<32x32xf32>
    %cst_21 = arith.constant 0.000000e+00 : f32
    %15 = vector.broadcast %cst_21 : f32 to vector<32x32xf32>
    %c0_22 = arith.constant 0 : index
    %c0_23 = arith.constant 0 : index
    %c0_24 = arith.constant 0 : index
    %16 = vector.load %arg7[%c0_22, %c0_23, %c0_24] : memref<6x8x32xbf16, #tpu.memory_space<vmem>>, vector<4x8x32xbf16>
    %17 = vector.shape_cast %16 : vector<4x8x32xbf16> to vector<32x32xbf16>
    %c0_25 = arith.constant 0 : index
    %c0_26 = arith.constant 0 : index
    %c0_27 = arith.constant 0 : index
    %c0_28 = arith.constant 0 : index
    %18 = vector.load %arg4[%c0_25, %c0_26, %c0_27, %c0_28] : memref<3x3x32x32xbf16, #tpu.memory_space<vmem>>, vector<1x1x32x32xbf16>
    %19 = vector.shape_cast %18 : vector<1x1x32x32xbf16> to vector<32x32xbf16>
    %cst_29 = arith.constant dense<0.000000e+00> : vector<32x32xf32>
    %20 = tpu.matmul %17, %19, %cst_29 {dimension_numbers = #tpu.dot_dimension_numbers<[1], [0], [0], [1], [0, 0, 1, 1], [], []>} : vector<32x32xbf16>, vector<32x32xbf16>, vector<32x32xf32> -> vector<32x32xf32>
    %21 = arith.addf %13, %20 : vector<32x32xf32>
    %c0_30 = arith.constant 0 : index
    %c1_31 = arith.constant 1 : index
    %c0_32 = arith.constant 0 : index
    %c0_33 = arith.constant 0 : index
    %22 = vector.load %arg4[%c0_30, %c1_31, %c0_32, %c0_33] : memref<3x3x32x32xbf16, #tpu.memory_space<vmem>>, vector<1x1x32x32xbf16>
    %23 = vector.shape_cast %22 : vector<1x1x32x32xbf16> to vector<32x32xbf16>
    %cst_34 = arith.constant dense<0.000000e+00> : vector<32x32xf32>
    %24 = tpu.matmul %17, %23, %cst_34 {dimension_numbers = #tpu.dot_dimension_numbers<[1], [0], [0], [1], [0, 0, 1, 1], [], []>} : vector<32x32xbf16>, vector<32x32xbf16>, vector<32x32xf32> -> vector<32x32xf32>
    %25 = arith.addf %14, %24 : vector<32x32xf32>
    %c0_35 = arith.constant 0 : index
    %c2 = arith.constant 2 : index
    %c0_36 = arith.constant 0 : index
    %c0_37 = arith.constant 0 : index
    %26 = vector.load %arg4[%c0_35, %c2, %c0_36, %c0_37] : memref<3x3x32x32xbf16, #tpu.memory_space<vmem>>, vector<1x1x32x32xbf16>
    %27 = vector.shape_cast %26 : vector<1x1x32x32xbf16> to vector<32x32xbf16>
    %cst_38 = arith.constant dense<0.000000e+00> : vector<32x32xf32>
    %28 = tpu.matmul %17, %27, %cst_38 {dimension_numbers = #tpu.dot_dimension_numbers<[1], [0], [0], [1], [0, 0, 1, 1], [], []>} : vector<32x32xbf16>, vector<32x32xbf16>, vector<32x32xf32> -> vector<32x32xf32>
    %29 = arith.addf %15, %28 : vector<32x32xf32>
    %c1_39 = arith.constant 1 : index
    %c0_40 = arith.constant 0 : index
    %c0_41 = arith.constant 0 : index
    %30 = vector.load %arg7[%c1_39, %c0_40, %c0_41] : memref<6x8x32xbf16, #tpu.memory_space<vmem>>, vector<4x8x32xbf16>
    %31 = vector.shape_cast %30 : vector<4x8x32xbf16> to vector<32x32xbf16>
    %c1_42 = arith.constant 1 : index
    %c0_43 = arith.constant 0 : index
    %c0_44 = arith.constant 0 : index
    %c0_45 = arith.constant 0 : index
    %32 = vector.load %arg4[%c1_42, %c0_43, %c0_44, %c0_45] : memref<3x3x32x32xbf16, #tpu.memory_space<vmem>>, vector<1x1x32x32xbf16>
    %33 = vector.shape_cast %32 : vector<1x1x32x32xbf16> to vector<32x32xbf16>
    %cst_46 = arith.constant dense<0.000000e+00> : vector<32x32xf32>
    %34 = tpu.matmul %31, %33, %cst_46 {dimension_numbers = #tpu.dot_dimension_numbers<[1], [0], [0], [1], [0, 0, 1, 1], [], []>} : vector<32x32xbf16>, vector<32x32xbf16>, vector<32x32xf32> -> vector<32x32xf32>
    %35 = arith.addf %21, %34 : vector<32x32xf32>
    %c1_47 = arith.constant 1 : index
    %c1_48 = arith.constant 1 : index
    %c0_49 = arith.constant 0 : index
    %c0_50 = arith.constant 0 : index
    %36 = vector.load %arg4[%c1_47, %c1_48, %c0_49, %c0_50] : memref<3x3x32x32xbf16, #tpu.memory_space<vmem>>, vector<1x1x32x32xbf16>
    %37 = vector.shape_cast %36 : vector<1x1x32x32xbf16> to vector<32x32xbf16>
    %cst_51 = arith.constant dense<0.000000e+00> : vector<32x32xf32>
    %38 = tpu.matmul %31, %37, %cst_51 {dimension_numbers = #tpu.dot_dimension_numbers<[1], [0], [0], [1], [0, 0, 1, 1], [], []>} : vector<32x32xbf16>, vector<32x32xbf16>, vector<32x32xf32> -> vector<32x32xf32>
    %39 = arith.addf %25, %38 : vector<32x32xf32>
    %c1_52 = arith.constant 1 : index
    %c2_53 = arith.constant 2 : index
    %c0_54 = arith.constant 0 : index
    %c0_55 = arith.constant 0 : index
    %40 = vector.load %arg4[%c1_52, %c2_53, %c0_54, %c0_55] : memref<3x3x32x32xbf16, #tpu.memory_space<vmem>>, vector<1x1x32x32xbf16>
    %41 = vector.shape_cast %40 : vector<1x1x32x32xbf16> to vector<32x32xbf16>
    %cst_56 = arith.constant dense<0.000000e+00> : vector<32x32xf32>
    %42 = tpu.matmul %31, %41, %cst_56 {dimension_numbers = #tpu.dot_dimension_numbers<[1], [0], [0], [1], [0, 0, 1, 1], [], []>} : vector<32x32xbf16>, vector<32x32xbf16>, vector<32x32xf32> -> vector<32x32xf32>
    %43 = arith.addf %29, %42 : vector<32x32xf32>
    %c2_57 = arith.constant 2 : index
    %c0_58 = arith.constant 0 : index
    %c0_59 = arith.constant 0 : index
    %44 = vector.load %arg7[%c2_57, %c0_58, %c0_59] : memref<6x8x32xbf16, #tpu.memory_space<vmem>>, vector<4x8x32xbf16>
    %45 = vector.shape_cast %44 : vector<4x8x32xbf16> to vector<32x32xbf16>
    %c2_60 = arith.constant 2 : index
    %c0_61 = arith.constant 0 : index
    %c0_62 = arith.constant 0 : index
    %c0_63 = arith.constant 0 : index
    %46 = vector.load %arg4[%c2_60, %c0_61, %c0_62, %c0_63] : memref<3x3x32x32xbf16, #tpu.memory_space<vmem>>, vector<1x1x32x32xbf16>
    %47 = vector.shape_cast %46 : vector<1x1x32x32xbf16> to vector<32x32xbf16>
    %cst_64 = arith.constant dense<0.000000e+00> : vector<32x32xf32>
    %48 = tpu.matmul %45, %47, %cst_64 {dimension_numbers = #tpu.dot_dimension_numbers<[1], [0], [0], [1], [0, 0, 1, 1], [], []>} : vector<32x32xbf16>, vector<32x32xbf16>, vector<32x32xf32> -> vector<32x32xf32>
    %49 = arith.addf %35, %48 : vector<32x32xf32>
    %c2_65 = arith.constant 2 : index
    %c1_66 = arith.constant 1 : index
    %c0_67 = arith.constant 0 : index
    %c0_68 = arith.constant 0 : index
    %50 = vector.load %arg4[%c2_65, %c1_66, %c0_67, %c0_68] : memref<3x3x32x32xbf16, #tpu.memory_space<vmem>>, vector<1x1x32x32xbf16>
    %51 = vector.shape_cast %50 : vector<1x1x32x32xbf16> to vector<32x32xbf16>
    %cst_69 = arith.constant dense<0.000000e+00> : vector<32x32xf32>
    %52 = tpu.matmul %45, %51, %cst_69 {dimension_numbers = #tpu.dot_dimension_numbers<[1], [0], [0], [1], [0, 0, 1, 1], [], []>} : vector<32x32xbf16>, vector<32x32xbf16>, vector<32x32xf32> -> vector<32x32xf32>
    %53 = arith.addf %39, %52 : vector<32x32xf32>
    %c2_70 = arith.constant 2 : index
    %c2_71 = arith.constant 2 : index
    %c0_72 = arith.constant 0 : index
    %c0_73 = arith.constant 0 : index
    %54 = vector.load %arg4[%c2_70, %c2_71, %c0_72, %c0_73] : memref<3x3x32x32xbf16, #tpu.memory_space<vmem>>, vector<1x1x32x32xbf16>
    %55 = vector.shape_cast %54 : vector<1x1x32x32xbf16> to vector<32x32xbf16>
    %cst_74 = arith.constant dense<0.000000e+00> : vector<32x32xf32>
    %56 = tpu.matmul %45, %55, %cst_74 {dimension_numbers = #tpu.dot_dimension_numbers<[1], [0], [0], [1], [0, 0, 1, 1], [], []>} : vector<32x32xbf16>, vector<32x32xbf16>, vector<32x32xf32> -> vector<32x32xf32>
    %57 = arith.addf %43, %56 : vector<32x32xf32>
    %58 = vector.shape_cast %49 : vector<32x32xf32> to vector<4x8x32xf32>
    %c1_i32 = arith.constant 1 : i32
    %59 = tpu.dynamic_rotate %58 by %c1_i32 dim 1 : vector<4x8x32xf32>, i32 -> vector<4x8x32xf32>
    %60 = vector.shape_cast %57 : vector<32x32xf32> to vector<4x8x32xf32>
    %c7_i32 = arith.constant 7 : i32
    %61 = tpu.dynamic_rotate %60 by %c7_i32 dim 1 : vector<4x8x32xf32>, i32 -> vector<4x8x32xf32>
    %62 = tpu.iota {dimensions = array<i32: 1>} : vector<4x8x1xi32>
    %63 = vector.shape_cast %53 : vector<32x32xf32> to vector<4x8x32xf32>
    %c0_i32 = arith.constant 0 : i32
    %64 = vector.broadcast %c0_i32 : i32 to vector<4x8x1xi32>
    %65 = arith.cmpi sgt, %62, %64 : vector<4x8x1xi32>
    %cst_75 = arith.constant 0.000000e+00 : f32
    %66 = vector.shape_cast %65 : vector<4x8x1xi1> to vector<4x8x1xi1>
    %67 = vector.broadcast %66 : vector<4x8x1xi1> to vector<4x8x32xi1>
    %68 = vector.broadcast %cst_75 : f32 to vector<4x8x32xf32>
    %69 = arith.select %67, %59, %68 : vector<4x8x32xi1>, vector<4x8x32xf32>
    %70 = arith.addf %63, %69 : vector<4x8x32xf32>
    %c7_i32_76 = arith.constant 7 : i32
    %71 = vector.broadcast %c7_i32_76 : i32 to vector<4x8x1xi32>
    %72 = arith.cmpi slt, %62, %71 : vector<4x8x1xi32>
    %cst_77 = arith.constant 0.000000e+00 : f32
    %73 = vector.shape_cast %72 : vector<4x8x1xi1> to vector<4x8x1xi1>
    %74 = vector.broadcast %73 : vector<4x8x1xi1> to vector<4x8x32xi1>
    %75 = vector.broadcast %cst_77 : f32 to vector<4x8x32xf32>
    %76 = arith.select %74, %61, %75 : vector<4x8x32xi1>, vector<4x8x32xf32>
    %77 = arith.addf %70, %76 : vector<4x8x32xf32>
    %c0_78 = arith.constant 0 : index
    %c0_79 = arith.constant 0 : index
    %78 = vector.load %arg5[%c0_78, %c0_79] : memref<1x32xf32, #tpu.memory_space<vmem>>, vector<1x32xf32>
    %79 = vector.shape_cast %78 : vector<1x32xf32> to vector<1x1x32xf32>
    %80 = vector.broadcast %79 : vector<1x1x32xf32> to vector<4x8x32xf32>
    %81 = arith.addf %77, %80 : vector<4x8x32xf32>
    %82 = arith.truncf %81 : vector<4x8x32xf32> to vector<4x8x32xbf16>
    %c0_80 = arith.constant 0 : index
    %c0_81 = arith.constant 0 : index
    %c0_82 = arith.constant 0 : index
    %c0_83 = arith.constant 0 : index
    %83 = vector.load %arg6[%c0_80, %c0_81, %c0_82, %c0_83] : memref<1x4x8x32xbf16, #tpu.memory_space<vmem>>, vector<1x4x8x32xbf16>
    %84 = vector.shape_cast %83 : vector<1x4x8x32xbf16> to vector<4x8x32xbf16>
    %85 = vector.shape_cast %82 : vector<4x8x32xbf16> to vector<1x4x8x32xbf16>
    tpu.vector_store %arg6[%c0_80, %c0_81, %c0_82, %c0_83], %85 {strides = array<i32>} : memref<1x4x8x32xbf16, #tpu.memory_space<vmem>>, vector<1x4x8x32xbf16>,
    return
  }
  func.func @transform_0(%arg0: i32, %arg1: i32) -> (i32, i32, i32, i32) {
    %c0_i32 = arith.constant 0 : i32
    %c0_i32_0 = arith.constant 0 : i32
    %c0_i32_1 = arith.constant 0 : i32
    return %arg0, %arg1, %c0_i32, %c0_i32_0 : i32, i32, i32, i32
  }
  func.func @transform_1(%arg0: i32, %arg1: i32) -> (i32, i32, i32, i32, i32) {
    %c0_i32 = arith.constant 0 : i32
    %c0_i32_0 = arith.constant 0 : i32
    %c0_i32_1 = arith.constant 0 : i32
    %c0_i32_2 = arith.constant 0 : i32
    return %arg0, %arg1, %c0_i32, %c0_i32_0, %c0_i32_1 : i32, i32, i32, i32, i32
  }
  func.func @transform_2(%arg0: i32, %arg1: i32) -> (i32, i32, i32, i32) {
    %c0_i32 = arith.constant 0 : i32
    %c0_i32_0 = arith.constant 0 : i32
    %c0_i32_1 = arith.constant 0 : i32
    %c0_i32_2 = arith.constant 0 : i32
    %c0_i32_3 = arith.constant 0 : i32
    return %c0_i32, %c0_i32_0, %c0_i32_1, %c0_i32_2 : i32, i32, i32, i32
  }
  func.func @transform_3(%arg0: i32, %arg1: i32) -> (i32, i32) {
    %c0_i32 = arith.constant 0 : i32
    %c0_i32_0 = arith.constant 0 : i32
    %c0_i32_1 = arith.constant 0 : i32
    return %c0_i32, %c0_i32_0 : i32, i32
  }
  func.func @transform_4(%arg0: i32, %arg1: i32) -> (i32, i32, i32, i32) {
    %c0_i32 = arith.constant 0 : i32
    %c0_i32_0 = arith.constant 0 : i32
    %c0_i32_1 = arith.constant 0 : i32
    return %arg0, %arg1, %c0_i32, %c0_i32_0 : i32, i32, i32, i32
  }
}

module attributes {stable_mosaic.version = 11 : i64} {
  func.func @_convt2x2_kernel(%arg0: i32, %arg1: i32, %arg2: memref<1x4x8x16xbf16, #tpu.memory_space<vmem>>, %arg3: memref<16x64xbf16, #tpu.memory_space<vmem>>, %arg4: memref<1x64xf32, #tpu.memory_space<vmem>>, %arg5: memref<1x4x2x8x32xbf16, #tpu.memory_space<vmem>>) attributes {dimension_semantics = [#tpu.dimension_semantics<parallel>, #tpu.dimension_semantics<parallel>], iteration_bounds = array<i64: 2, 2>, scalar_prefetch = 0 : i64, scratch_operands = 0 : i64, tpu.core_type = #tpu.core_type<tc>, window_params = [{transform_indices = @transform_0, window_bounds = array<i64: 1, 4, 8, 16>}, {pipeline_mode = #tpu.pipeline_mode<synchronous>, transform_indices = @transform_1, window_bounds = array<i64: 16, 64>}, {pipeline_mode = #tpu.pipeline_mode<synchronous>, transform_indices = @transform_2, window_bounds = array<i64: 1, 64>}, {transform_indices = @transform_3, window_bounds = array<i64: 1, 4, 2, 8, 32>}]} {
    %c0 = arith.constant 0 : index
    %c0_0 = arith.constant 0 : index
    %c0_1 = arith.constant 0 : index
    %c0_2 = arith.constant 0 : index
    %0 = vector.load %arg2[%c0, %c0_0, %c0_1, %c0_2] : memref<1x4x8x16xbf16, #tpu.memory_space<vmem>>, vector<1x4x8x16xbf16>
    %1 = vector.shape_cast %0 : vector<1x4x8x16xbf16> to vector<4x8x16xbf16>
    %2 = vector.shape_cast %1 : vector<4x8x16xbf16> to vector<32x16xbf16>
    %c0_3 = arith.constant 0 : index
    %c0_4 = arith.constant 0 : index
    %3 = vector.load %arg3[%c0_3, %c0_4] : memref<16x64xbf16, #tpu.memory_space<vmem>>, vector<16x64xbf16>
    %cst = arith.constant dense<0.000000e+00> : vector<32x64xf32>
    %4 = tpu.matmul %2, %3, %cst {dimension_numbers = #tpu.dot_dimension_numbers<[1], [0], [0], [1], [0, 0, 1, 1], [], []>} : vector<32x16xbf16>, vector<16x64xbf16>, vector<32x64xf32> -> vector<32x64xf32>
    %c0_5 = arith.constant 0 : index
    %c0_6 = arith.constant 0 : index
    %5 = vector.load %arg4[%c0_5, %c0_6] : memref<1x64xf32, #tpu.memory_space<vmem>>, vector<1x64xf32>
    %6 = vector.broadcast %5 : vector<1x64xf32> to vector<32x64xf32>
    %7 = arith.addf %4, %6 : vector<32x64xf32>
    %8 = vector.shape_cast %7 : vector<32x64xf32> to vector<4x8x64xf32>
    %9 = arith.truncf %8 : vector<4x8x64xf32> to vector<4x8x64xbf16>
    %10 = vector.extract_strided_slice %9 {offsets = [0, 0, 0], sizes = [4, 8, 32], strides = [1, 1, 1]} : vector<4x8x64xbf16> to vector<4x8x32xbf16>
    %c0_7 = arith.constant 0 : index
    %c0_8 = arith.constant 0 : index
    %c0_9 = arith.constant 0 : index
    %c0_10 = arith.constant 0 : index
    %c0_11 = arith.constant 0 : index
    %11 = vector.load %arg5[%c0_7, %c0_8, %c0_9, %c0_10, %c0_11] : memref<1x4x2x8x32xbf16, #tpu.memory_space<vmem>>, vector<1x4x1x8x32xbf16>
    %12 = vector.shape_cast %11 : vector<1x4x1x8x32xbf16> to vector<4x8x32xbf16>
    %13 = vector.shape_cast %10 : vector<4x8x32xbf16> to vector<1x4x1x8x32xbf16>
    tpu.vector_store %arg5[%c0_7, %c0_8, %c0_9, %c0_10, %c0_11], %13 {strides = array<i32>} : memref<1x4x2x8x32xbf16, #tpu.memory_space<vmem>>, vector<1x4x1x8x32xbf16>,
    %14 = vector.extract_strided_slice %9 {offsets = [0, 0, 32], sizes = [4, 8, 32], strides = [1, 1, 1]} : vector<4x8x64xbf16> to vector<4x8x32xbf16>
    %c0_12 = arith.constant 0 : index
    %c0_13 = arith.constant 0 : index
    %c1 = arith.constant 1 : index
    %c0_14 = arith.constant 0 : index
    %c0_15 = arith.constant 0 : index
    %15 = vector.load %arg5[%c0_12, %c0_13, %c1, %c0_14, %c0_15] : memref<1x4x2x8x32xbf16, #tpu.memory_space<vmem>>, vector<1x4x1x8x32xbf16>
    %16 = vector.shape_cast %15 : vector<1x4x1x8x32xbf16> to vector<4x8x32xbf16>
    %17 = vector.shape_cast %14 : vector<4x8x32xbf16> to vector<1x4x1x8x32xbf16>
    tpu.vector_store %arg5[%c0_12, %c0_13, %c1, %c0_14, %c0_15], %17 {strides = array<i32>} : memref<1x4x2x8x32xbf16, #tpu.memory_space<vmem>>, vector<1x4x1x8x32xbf16>,
    return
  }
  func.func @transform_0(%arg0: i32, %arg1: i32) -> (i32, i32, i32, i32) {
    %c0_i32 = arith.constant 0 : i32
    %c0_i32_0 = arith.constant 0 : i32
    %c0_i32_1 = arith.constant 0 : i32
    return %arg0, %arg1, %c0_i32, %c0_i32_0 : i32, i32, i32, i32
  }
  func.func @transform_1(%arg0: i32, %arg1: i32) -> (i32, i32) {
    %c0_i32 = arith.constant 0 : i32
    %c0_i32_0 = arith.constant 0 : i32
    %c0_i32_1 = arith.constant 0 : i32
    return %c0_i32, %c0_i32_0 : i32, i32
  }
  func.func @transform_2(%arg0: i32, %arg1: i32) -> (i32, i32) {
    %c0_i32 = arith.constant 0 : i32
    %c0_i32_0 = arith.constant 0 : i32
    %c0_i32_1 = arith.constant 0 : i32
    return %c0_i32, %c0_i32_0 : i32, i32
  }
  func.func @transform_3(%arg0: i32, %arg1: i32) -> (i32, i32, i32, i32, i32) {
    %c0_i32 = arith.constant 0 : i32
    %c0_i32_0 = arith.constant 0 : i32
    %c0_i32_1 = arith.constant 0 : i32
    %c0_i32_2 = arith.constant 0 : i32
    return %arg0, %arg1, %c0_i32, %c0_i32_0, %c0_i32_1 : i32, i32, i32, i32, i32
  }
}

module attributes {stable_mosaic.version = 11 : i64} {
  func.func @_conv3x3_kernel(%arg0: i32, %arg1: i32, %arg2: memref<1x4x8x32xbf16, #tpu.memory_space<vmem>>, %arg3: memref<1x1x2x8x32xbf16, #tpu.memory_space<vmem>>, %arg4: memref<3x3x32x16xbf16, #tpu.memory_space<vmem>>, %arg5: memref<1x16xf32, #tpu.memory_space<vmem>>, %arg6: memref<1x4x8x16xbf16, #tpu.memory_space<vmem>>, %arg7: memref<6x8x32xbf16, #tpu.memory_space<vmem>>) attributes {dimension_semantics = [#tpu.dimension_semantics<parallel>, #tpu.dimension_semantics<parallel>], iteration_bounds = array<i64: 2, 2>, scalar_prefetch = 0 : i64, scratch_operands = 1 : i64, tpu.core_type = #tpu.core_type<tc>, window_params = [{transform_indices = @transform_0, window_bounds = array<i64: 1, 4, 8, 32>}, {transform_indices = @transform_1, window_bounds = array<i64: 1, 1, 2, 8, 32>}, {pipeline_mode = #tpu.pipeline_mode<synchronous>, transform_indices = @transform_2, window_bounds = array<i64: 3, 3, 32, 16>}, {pipeline_mode = #tpu.pipeline_mode<synchronous>, transform_indices = @transform_3, window_bounds = array<i64: 1, 16>}, {transform_indices = @transform_4, window_bounds = array<i64: 1, 4, 8, 16>}]} {
    %c0 = arith.constant 0 : index
    %c0_0 = arith.constant 0 : index
    %c0_1 = arith.constant 0 : index
    %c0_2 = arith.constant 0 : index
    %c0_3 = arith.constant 0 : index
    %0 = vector.load %arg3[%c0, %c0_0, %c0_1, %c0_2, %c0_3] : memref<1x1x2x8x32xbf16, #tpu.memory_space<vmem>>, vector<1x1x1x8x32xbf16>
    %1 = vector.shape_cast %0 : vector<1x1x1x8x32xbf16> to vector<8x32xbf16>
    %c0_4 = arith.constant 0 : index
    %c0_5 = arith.constant 0 : index
    %c0_6 = arith.constant 0 : index
    %2 = vector.load %arg7[%c0_4, %c0_5, %c0_6] : memref<6x8x32xbf16, #tpu.memory_space<vmem>>, vector<1x8x32xbf16>
    %3 = vector.shape_cast %2 : vector<1x8x32xbf16> to vector<8x32xbf16>
    %4 = vector.shape_cast %1 : vector<8x32xbf16> to vector<1x8x32xbf16>
    tpu.vector_store %arg7[%c0_4, %c0_5, %c0_6], %4 {strides = array<i32>} : memref<6x8x32xbf16, #tpu.memory_space<vmem>>, vector<1x8x32xbf16>,
    %c0_7 = arith.constant 0 : index
    %c0_8 = arith.constant 0 : index
    %c0_9 = arith.constant 0 : index
    %c0_10 = arith.constant 0 : index
    %5 = vector.load %arg2[%c0_7, %c0_8, %c0_9, %c0_10] : memref<1x4x8x32xbf16, #tpu.memory_space<vmem>>, vector<1x4x8x32xbf16>
    %6 = vector.shape_cast %5 : vector<1x4x8x32xbf16> to vector<4x8x32xbf16>
    %c1 = arith.constant 1 : index
    %c0_11 = arith.constant 0 : index
    %c0_12 = arith.constant 0 : index
    %7 = vector.load %arg7[%c1, %c0_11, %c0_12] : memref<6x8x32xbf16, #tpu.memory_space<vmem>>, vector<4x8x32xbf16>
    tpu.vector_store %arg7[%c1, %c0_11, %c0_12], %6 {strides = array<i32>} : memref<6x8x32xbf16, #tpu.memory_space<vmem>>, vector<4x8x32xbf16>,
    %c0_13 = arith.constant 0 : index
    %c0_14 = arith.constant 0 : index
    %c1_15 = arith.constant 1 : index
    %c0_16 = arith.constant 0 : index
    %c0_17 = arith.constant 0 : index
    %8 = vector.load %arg3[%c0_13, %c0_14, %c1_15, %c0_16, %c0_17] : memref<1x1x2x8x32xbf16, #tpu.memory_space<vmem>>, vector<1x1x1x8x32xbf16>
    %9 = vector.shape_cast %8 : vector<1x1x1x8x32xbf16> to vector<8x32xbf16>
    %c5 = arith.constant 5 : index
    %c0_18 = arith.constant 0 : index
    %c0_19 = arith.constant 0 : index
    %10 = vector.load %arg7[%c5, %c0_18, %c0_19] : memref<6x8x32xbf16, #tpu.memory_space<vmem>>, vector<1x8x32xbf16>
    %11 = vector.shape_cast %10 : vector<1x8x32xbf16> to vector<8x32xbf16>
    %12 = vector.shape_cast %9 : vector<8x32xbf16> to vector<1x8x32xbf16>
    tpu.vector_store %arg7[%c5, %c0_18, %c0_19], %12 {strides = array<i32>} : memref<6x8x32xbf16, #tpu.memory_space<vmem>>, vector<1x8x32xbf16>,
    %cst = arith.constant 0.000000e+00 : f32
    %13 = vector.broadcast %cst : f32 to vector<32x16xf32>
    %cst_20 = arith.constant 0.000000e+00 : f32
    %14 = vector.broadcast %cst_20 : f32 to vector<32x16xf32>
    %cst_21 = arith.constant 0.000000e+00 : f32
    %15 = vector.broadcast %cst_21 : f32 to vector<32x16xf32>
    %c0_22 = arith.constant 0 : index
    %c0_23 = arith.constant 0 : index
    %c0_24 = arith.constant 0 : index
    %16 = vector.load %arg7[%c0_22, %c0_23, %c0_24] : memref<6x8x32xbf16, #tpu.memory_space<vmem>>, vector<4x8x32xbf16>
    %17 = vector.shape_cast %16 : vector<4x8x32xbf16> to vector<32x32xbf16>
    %c0_25 = arith.constant 0 : index
    %c0_26 = arith.constant 0 : index
    %c0_27 = arith.constant 0 : index
    %c0_28 = arith.constant 0 : index
    %18 = vector.load %arg4[%c0_25, %c0_26, %c0_27, %c0_28] : memref<3x3x32x16xbf16, #tpu.memory_space<vmem>>, vector<1x1x32x16xbf16>
    %19 = vector.shape_cast %18 : vector<1x1x32x16xbf16> to vector<32x16xbf16>
    %cst_29 = arith.constant dense<0.000000e+00> : vector<32x16xf32>
    %20 = tpu.matmul %17, %19, %cst_29 {dimension_numbers = #tpu.dot_dimension_numbers<[1], [0], [0], [1], [0, 0, 1, 1], [], []>} : vector<32x32xbf16>, vector<32x16xbf16>, vector<32x16xf32> -> vector<32x16xf32>
    %21 = arith.addf %13, %20 : vector<32x16xf32>
    %c0_30 = arith.constant 0 : index
    %c1_31 = arith.constant 1 : index
    %c0_32 = arith.constant 0 : index
    %c0_33 = arith.constant 0 : index
    %22 = vector.load %arg4[%c0_30, %c1_31, %c0_32, %c0_33] : memref<3x3x32x16xbf16, #tpu.memory_space<vmem>>, vector<1x1x32x16xbf16>
    %23 = vector.shape_cast %22 : vector<1x1x32x16xbf16> to vector<32x16xbf16>
    %cst_34 = arith.constant dense<0.000000e+00> : vector<32x16xf32>
    %24 = tpu.matmul %17, %23, %cst_34 {dimension_numbers = #tpu.dot_dimension_numbers<[1], [0], [0], [1], [0, 0, 1, 1], [], []>} : vector<32x32xbf16>, vector<32x16xbf16>, vector<32x16xf32> -> vector<32x16xf32>
    %25 = arith.addf %14, %24 : vector<32x16xf32>
    %c0_35 = arith.constant 0 : index
    %c2 = arith.constant 2 : index
    %c0_36 = arith.constant 0 : index
    %c0_37 = arith.constant 0 : index
    %26 = vector.load %arg4[%c0_35, %c2, %c0_36, %c0_37] : memref<3x3x32x16xbf16, #tpu.memory_space<vmem>>, vector<1x1x32x16xbf16>
    %27 = vector.shape_cast %26 : vector<1x1x32x16xbf16> to vector<32x16xbf16>
    %cst_38 = arith.constant dense<0.000000e+00> : vector<32x16xf32>
    %28 = tpu.matmul %17, %27, %cst_38 {dimension_numbers = #tpu.dot_dimension_numbers<[1], [0], [0], [1], [0, 0, 1, 1], [], []>} : vector<32x32xbf16>, vector<32x16xbf16>, vector<32x16xf32> -> vector<32x16xf32>
    %29 = arith.addf %15, %28 : vector<32x16xf32>
    %c1_39 = arith.constant 1 : index
    %c0_40 = arith.constant 0 : index
    %c0_41 = arith.constant 0 : index
    %30 = vector.load %arg7[%c1_39, %c0_40, %c0_41] : memref<6x8x32xbf16, #tpu.memory_space<vmem>>, vector<4x8x32xbf16>
    %31 = vector.shape_cast %30 : vector<4x8x32xbf16> to vector<32x32xbf16>
    %c1_42 = arith.constant 1 : index
    %c0_43 = arith.constant 0 : index
    %c0_44 = arith.constant 0 : index
    %c0_45 = arith.constant 0 : index
    %32 = vector.load %arg4[%c1_42, %c0_43, %c0_44, %c0_45] : memref<3x3x32x16xbf16, #tpu.memory_space<vmem>>, vector<1x1x32x16xbf16>
    %33 = vector.shape_cast %32 : vector<1x1x32x16xbf16> to vector<32x16xbf16>
    %cst_46 = arith.constant dense<0.000000e+00> : vector<32x16xf32>
    %34 = tpu.matmul %31, %33, %cst_46 {dimension_numbers = #tpu.dot_dimension_numbers<[1], [0], [0], [1], [0, 0, 1, 1], [], []>} : vector<32x32xbf16>, vector<32x16xbf16>, vector<32x16xf32> -> vector<32x16xf32>
    %35 = arith.addf %21, %34 : vector<32x16xf32>
    %c1_47 = arith.constant 1 : index
    %c1_48 = arith.constant 1 : index
    %c0_49 = arith.constant 0 : index
    %c0_50 = arith.constant 0 : index
    %36 = vector.load %arg4[%c1_47, %c1_48, %c0_49, %c0_50] : memref<3x3x32x16xbf16, #tpu.memory_space<vmem>>, vector<1x1x32x16xbf16>
    %37 = vector.shape_cast %36 : vector<1x1x32x16xbf16> to vector<32x16xbf16>
    %cst_51 = arith.constant dense<0.000000e+00> : vector<32x16xf32>
    %38 = tpu.matmul %31, %37, %cst_51 {dimension_numbers = #tpu.dot_dimension_numbers<[1], [0], [0], [1], [0, 0, 1, 1], [], []>} : vector<32x32xbf16>, vector<32x16xbf16>, vector<32x16xf32> -> vector<32x16xf32>
    %39 = arith.addf %25, %38 : vector<32x16xf32>
    %c1_52 = arith.constant 1 : index
    %c2_53 = arith.constant 2 : index
    %c0_54 = arith.constant 0 : index
    %c0_55 = arith.constant 0 : index
    %40 = vector.load %arg4[%c1_52, %c2_53, %c0_54, %c0_55] : memref<3x3x32x16xbf16, #tpu.memory_space<vmem>>, vector<1x1x32x16xbf16>
    %41 = vector.shape_cast %40 : vector<1x1x32x16xbf16> to vector<32x16xbf16>
    %cst_56 = arith.constant dense<0.000000e+00> : vector<32x16xf32>
    %42 = tpu.matmul %31, %41, %cst_56 {dimension_numbers = #tpu.dot_dimension_numbers<[1], [0], [0], [1], [0, 0, 1, 1], [], []>} : vector<32x32xbf16>, vector<32x16xbf16>, vector<32x16xf32> -> vector<32x16xf32>
    %43 = arith.addf %29, %42 : vector<32x16xf32>
    %c2_57 = arith.constant 2 : index
    %c0_58 = arith.constant 0 : index
    %c0_59 = arith.constant 0 : index
    %44 = vector.load %arg7[%c2_57, %c0_58, %c0_59] : memref<6x8x32xbf16, #tpu.memory_space<vmem>>, vector<4x8x32xbf16>
    %45 = vector.shape_cast %44 : vector<4x8x32xbf16> to vector<32x32xbf16>
    %c2_60 = arith.constant 2 : index
    %c0_61 = arith.constant 0 : index
    %c0_62 = arith.constant 0 : index
    %c0_63 = arith.constant 0 : index
    %46 = vector.load %arg4[%c2_60, %c0_61, %c0_62, %c0_63] : memref<3x3x32x16xbf16, #tpu.memory_space<vmem>>, vector<1x1x32x16xbf16>
    %47 = vector.shape_cast %46 : vector<1x1x32x16xbf16> to vector<32x16xbf16>
    %cst_64 = arith.constant dense<0.000000e+00> : vector<32x16xf32>
    %48 = tpu.matmul %45, %47, %cst_64 {dimension_numbers = #tpu.dot_dimension_numbers<[1], [0], [0], [1], [0, 0, 1, 1], [], []>} : vector<32x32xbf16>, vector<32x16xbf16>, vector<32x16xf32> -> vector<32x16xf32>
    %49 = arith.addf %35, %48 : vector<32x16xf32>
    %c2_65 = arith.constant 2 : index
    %c1_66 = arith.constant 1 : index
    %c0_67 = arith.constant 0 : index
    %c0_68 = arith.constant 0 : index
    %50 = vector.load %arg4[%c2_65, %c1_66, %c0_67, %c0_68] : memref<3x3x32x16xbf16, #tpu.memory_space<vmem>>, vector<1x1x32x16xbf16>
    %51 = vector.shape_cast %50 : vector<1x1x32x16xbf16> to vector<32x16xbf16>
    %cst_69 = arith.constant dense<0.000000e+00> : vector<32x16xf32>
    %52 = tpu.matmul %45, %51, %cst_69 {dimension_numbers = #tpu.dot_dimension_numbers<[1], [0], [0], [1], [0, 0, 1, 1], [], []>} : vector<32x32xbf16>, vector<32x16xbf16>, vector<32x16xf32> -> vector<32x16xf32>
    %53 = arith.addf %39, %52 : vector<32x16xf32>
    %c2_70 = arith.constant 2 : index
    %c2_71 = arith.constant 2 : index
    %c0_72 = arith.constant 0 : index
    %c0_73 = arith.constant 0 : index
    %54 = vector.load %arg4[%c2_70, %c2_71, %c0_72, %c0_73] : memref<3x3x32x16xbf16, #tpu.memory_space<vmem>>, vector<1x1x32x16xbf16>
    %55 = vector.shape_cast %54 : vector<1x1x32x16xbf16> to vector<32x16xbf16>
    %cst_74 = arith.constant dense<0.000000e+00> : vector<32x16xf32>
    %56 = tpu.matmul %45, %55, %cst_74 {dimension_numbers = #tpu.dot_dimension_numbers<[1], [0], [0], [1], [0, 0, 1, 1], [], []>} : vector<32x32xbf16>, vector<32x16xbf16>, vector<32x16xf32> -> vector<32x16xf32>
    %57 = arith.addf %43, %56 : vector<32x16xf32>
    %58 = vector.shape_cast %49 : vector<32x16xf32> to vector<4x8x16xf32>
    %c1_i32 = arith.constant 1 : i32
    %59 = tpu.dynamic_rotate %58 by %c1_i32 dim 1 : vector<4x8x16xf32>, i32 -> vector<4x8x16xf32>
    %60 = vector.shape_cast %57 : vector<32x16xf32> to vector<4x8x16xf32>
    %c7_i32 = arith.constant 7 : i32
    %61 = tpu.dynamic_rotate %60 by %c7_i32 dim 1 : vector<4x8x16xf32>, i32 -> vector<4x8x16xf32>
    %62 = tpu.iota {dimensions = array<i32: 1>} : vector<4x8x1xi32>
    %63 = vector.shape_cast %53 : vector<32x16xf32> to vector<4x8x16xf32>
    %c0_i32 = arith.constant 0 : i32
    %64 = vector.broadcast %c0_i32 : i32 to vector<4x8x1xi32>
    %65 = arith.cmpi sgt, %62, %64 : vector<4x8x1xi32>
    %cst_75 = arith.constant 0.000000e+00 : f32
    %66 = vector.shape_cast %65 : vector<4x8x1xi1> to vector<4x8x1xi1>
    %67 = vector.broadcast %66 : vector<4x8x1xi1> to vector<4x8x16xi1>
    %68 = vector.broadcast %cst_75 : f32 to vector<4x8x16xf32>
    %69 = arith.select %67, %59, %68 : vector<4x8x16xi1>, vector<4x8x16xf32>
    %70 = arith.addf %63, %69 : vector<4x8x16xf32>
    %c7_i32_76 = arith.constant 7 : i32
    %71 = vector.broadcast %c7_i32_76 : i32 to vector<4x8x1xi32>
    %72 = arith.cmpi slt, %62, %71 : vector<4x8x1xi32>
    %cst_77 = arith.constant 0.000000e+00 : f32
    %73 = vector.shape_cast %72 : vector<4x8x1xi1> to vector<4x8x1xi1>
    %74 = vector.broadcast %73 : vector<4x8x1xi1> to vector<4x8x16xi1>
    %75 = vector.broadcast %cst_77 : f32 to vector<4x8x16xf32>
    %76 = arith.select %74, %61, %75 : vector<4x8x16xi1>, vector<4x8x16xf32>
    %77 = arith.addf %70, %76 : vector<4x8x16xf32>
    %c0_78 = arith.constant 0 : index
    %c0_79 = arith.constant 0 : index
    %78 = vector.load %arg5[%c0_78, %c0_79] : memref<1x16xf32, #tpu.memory_space<vmem>>, vector<1x16xf32>
    %79 = vector.shape_cast %78 : vector<1x16xf32> to vector<1x1x16xf32>
    %80 = vector.broadcast %79 : vector<1x1x16xf32> to vector<4x8x16xf32>
    %81 = arith.addf %77, %80 : vector<4x8x16xf32>
    %82 = arith.truncf %81 : vector<4x8x16xf32> to vector<4x8x16xbf16>
    %c0_80 = arith.constant 0 : index
    %c0_81 = arith.constant 0 : index
    %c0_82 = arith.constant 0 : index
    %c0_83 = arith.constant 0 : index
    %83 = vector.load %arg6[%c0_80, %c0_81, %c0_82, %c0_83] : memref<1x4x8x16xbf16, #tpu.memory_space<vmem>>, vector<1x4x8x16xbf16>
    %84 = vector.shape_cast %83 : vector<1x4x8x16xbf16> to vector<4x8x16xbf16>
    %85 = vector.shape_cast %82 : vector<4x8x16xbf16> to vector<1x4x8x16xbf16>
    tpu.vector_store %arg6[%c0_80, %c0_81, %c0_82, %c0_83], %85 {strides = array<i32>} : memref<1x4x8x16xbf16, #tpu.memory_space<vmem>>, vector<1x4x8x16xbf16>,
    return
  }
  func.func @transform_0(%arg0: i32, %arg1: i32) -> (i32, i32, i32, i32) {
    %c0_i32 = arith.constant 0 : i32
    %c0_i32_0 = arith.constant 0 : i32
    %c0_i32_1 = arith.constant 0 : i32
    return %arg0, %arg1, %c0_i32, %c0_i32_0 : i32, i32, i32, i32
  }
  func.func @transform_1(%arg0: i32, %arg1: i32) -> (i32, i32, i32, i32, i32) {
    %c0_i32 = arith.constant 0 : i32
    %c0_i32_0 = arith.constant 0 : i32
    %c0_i32_1 = arith.constant 0 : i32
    %c0_i32_2 = arith.constant 0 : i32
    return %arg0, %arg1, %c0_i32, %c0_i32_0, %c0_i32_1 : i32, i32, i32, i32, i32
  }
  func.func @transform_2(%arg0: i32, %arg1: i32) -> (i32, i32, i32, i32) {
    %c0_i32 = arith.constant 0 : i32
    %c0_i32_0 = arith.constant 0 : i32
    %c0_i32_1 = arith.constant 0 : i32
    %c0_i32_2 = arith.constant 0 : i32
    %c0_i32_3 = arith.constant 0 : i32
    return %c0_i32, %c0_i32_0, %c0_i32_1, %c0_i32_2 : i32, i32, i32, i32
  }
  func.func @transform_3(%arg0: i32, %arg1: i32) -> (i32, i32) {
    %c0_i32 = arith.constant 0 : i32
    %c0_i32_0 = arith.constant 0 : i32
    %c0_i32_1 = arith.constant 0 : i32
    return %c0_i32, %c0_i32_0 : i32, i32
  }
  func.func @transform_4(%arg0: i32, %arg1: i32) -> (i32, i32, i32, i32) {
    %c0_i32 = arith.constant 0 : i32
    %c0_i32_0 = arith.constant 0 : i32
    %c0_i32_1 = arith.constant 0 : i32
    return %arg0, %arg1, %c0_i32, %c0_i32_0 : i32, i32, i32, i32
  }
}

module attributes {stable_mosaic.version = 11 : i64} {
  func.func @_head_tail_kernel(%arg0: i32, %arg1: i32, %arg2: memref<1x8x16x16xbf16, #tpu.memory_space<vmem>>, %arg3: memref<1x1x2x16x16xbf16, #tpu.memory_space<vmem>>, %arg4: memref<3x3x16x8xbf16, #tpu.memory_space<vmem>>, %arg5: memref<1x8xf32, #tpu.memory_space<vmem>>, %arg6: memref<1x8xf32, #tpu.memory_space<vmem>>, %arg7: memref<1x1xf32, #tpu.memory_space<vmem>>, %arg8: memref<1x8x16xf32, #tpu.memory_space<vmem>>, %arg9: memref<10x16x16xbf16, #tpu.memory_space<vmem>>) attributes {dimension_semantics = [#tpu.dimension_semantics<parallel>, #tpu.dimension_semantics<parallel>], iteration_bounds = array<i64: 2, 2>, scalar_prefetch = 0 : i64, scratch_operands = 1 : i64, tpu.core_type = #tpu.core_type<tc>, window_params = [{transform_indices = @transform_0, window_bounds = array<i64: 1, 8, 16, 16>}, {transform_indices = @transform_1, window_bounds = array<i64: 1, 1, 2, 16, 16>}, {pipeline_mode = #tpu.pipeline_mode<synchronous>, transform_indices = @transform_2, window_bounds = array<i64: 3, 3, 16, 8>}, {pipeline_mode = #tpu.pipeline_mode<synchronous>, transform_indices = @transform_3, window_bounds = array<i64: 1, 8>}, {pipeline_mode = #tpu.pipeline_mode<synchronous>, transform_indices = @transform_4, window_bounds = array<i64: 1, 8>}, {pipeline_mode = #tpu.pipeline_mode<synchronous>, transform_indices = @transform_5, window_bounds = array<i64: 1, 1>}, {transform_indices = @transform_6, window_bounds = array<i64: 1, 8, 16>}]} {
    %c0 = arith.constant 0 : index
    %c0_0 = arith.constant 0 : index
    %c0_1 = arith.constant 0 : index
    %c0_2 = arith.constant 0 : index
    %c0_3 = arith.constant 0 : index
    %0 = vector.load %arg3[%c0, %c0_0, %c0_1, %c0_2, %c0_3] : memref<1x1x2x16x16xbf16, #tpu.memory_space<vmem>>, vector<1x1x1x16x16xbf16>
    %1 = vector.shape_cast %0 : vector<1x1x1x16x16xbf16> to vector<16x16xbf16>
    %c0_4 = arith.constant 0 : index
    %c0_5 = arith.constant 0 : index
    %c0_6 = arith.constant 0 : index
    %2 = vector.load %arg9[%c0_4, %c0_5, %c0_6] : memref<10x16x16xbf16, #tpu.memory_space<vmem>>, vector<1x16x16xbf16>
    %3 = vector.shape_cast %2 : vector<1x16x16xbf16> to vector<16x16xbf16>
    %4 = vector.shape_cast %1 : vector<16x16xbf16> to vector<1x16x16xbf16>
    tpu.vector_store %arg9[%c0_4, %c0_5, %c0_6], %4 {strides = array<i32>} : memref<10x16x16xbf16, #tpu.memory_space<vmem>>, vector<1x16x16xbf16>,
    %c0_7 = arith.constant 0 : index
    %c0_8 = arith.constant 0 : index
    %c0_9 = arith.constant 0 : index
    %c0_10 = arith.constant 0 : index
    %5 = vector.load %arg2[%c0_7, %c0_8, %c0_9, %c0_10] : memref<1x8x16x16xbf16, #tpu.memory_space<vmem>>, vector<1x8x16x16xbf16>
    %6 = vector.shape_cast %5 : vector<1x8x16x16xbf16> to vector<8x16x16xbf16>
    %c1 = arith.constant 1 : index
    %c0_11 = arith.constant 0 : index
    %c0_12 = arith.constant 0 : index
    %7 = vector.load %arg9[%c1, %c0_11, %c0_12] : memref<10x16x16xbf16, #tpu.memory_space<vmem>>, vector<8x16x16xbf16>
    tpu.vector_store %arg9[%c1, %c0_11, %c0_12], %6 {strides = array<i32>} : memref<10x16x16xbf16, #tpu.memory_space<vmem>>, vector<8x16x16xbf16>,
    %c0_13 = arith.constant 0 : index
    %c0_14 = arith.constant 0 : index
    %c1_15 = arith.constant 1 : index
    %c0_16 = arith.constant 0 : index
    %c0_17 = arith.constant 0 : index
    %8 = vector.load %arg3[%c0_13, %c0_14, %c1_15, %c0_16, %c0_17] : memref<1x1x2x16x16xbf16, #tpu.memory_space<vmem>>, vector<1x1x1x16x16xbf16>
    %9 = vector.shape_cast %8 : vector<1x1x1x16x16xbf16> to vector<16x16xbf16>
    %c9 = arith.constant 9 : index
    %c0_18 = arith.constant 0 : index
    %c0_19 = arith.constant 0 : index
    %10 = vector.load %arg9[%c9, %c0_18, %c0_19] : memref<10x16x16xbf16, #tpu.memory_space<vmem>>, vector<1x16x16xbf16>
    %11 = vector.shape_cast %10 : vector<1x16x16xbf16> to vector<16x16xbf16>
    %12 = vector.shape_cast %9 : vector<16x16xbf16> to vector<1x16x16xbf16>
    tpu.vector_store %arg9[%c9, %c0_18, %c0_19], %12 {strides = array<i32>} : memref<10x16x16xbf16, #tpu.memory_space<vmem>>, vector<1x16x16xbf16>,
    %cst = arith.constant 0.000000e+00 : f32
    %13 = vector.broadcast %cst : f32 to vector<128x8xf32>
    %cst_20 = arith.constant 0.000000e+00 : f32
    %14 = vector.broadcast %cst_20 : f32 to vector<128x8xf32>
    %cst_21 = arith.constant 0.000000e+00 : f32
    %15 = vector.broadcast %cst_21 : f32 to vector<128x8xf32>
    %c0_22 = arith.constant 0 : index
    %c0_23 = arith.constant 0 : index
    %c0_24 = arith.constant 0 : index
    %16 = vector.load %arg9[%c0_22, %c0_23, %c0_24] : memref<10x16x16xbf16, #tpu.memory_space<vmem>>, vector<8x16x16xbf16>
    %17 = vector.shape_cast %16 : vector<8x16x16xbf16> to vector<128x16xbf16>
    %c0_25 = arith.constant 0 : index
    %c0_26 = arith.constant 0 : index
    %c0_27 = arith.constant 0 : index
    %c0_28 = arith.constant 0 : index
    %18 = vector.load %arg4[%c0_25, %c0_26, %c0_27, %c0_28] : memref<3x3x16x8xbf16, #tpu.memory_space<vmem>>, vector<1x1x16x8xbf16>
    %19 = vector.shape_cast %18 : vector<1x1x16x8xbf16> to vector<16x8xbf16>
    %cst_29 = arith.constant dense<0.000000e+00> : vector<128x8xf32>
    %20 = tpu.matmul %17, %19, %cst_29 {dimension_numbers = #tpu.dot_dimension_numbers<[1], [0], [0], [1], [0, 0, 1, 1], [], []>} : vector<128x16xbf16>, vector<16x8xbf16>, vector<128x8xf32> -> vector<128x8xf32>
    %21 = arith.addf %13, %20 : vector<128x8xf32>
    %c0_30 = arith.constant 0 : index
    %c1_31 = arith.constant 1 : index
    %c0_32 = arith.constant 0 : index
    %c0_33 = arith.constant 0 : index
    %22 = vector.load %arg4[%c0_30, %c1_31, %c0_32, %c0_33] : memref<3x3x16x8xbf16, #tpu.memory_space<vmem>>, vector<1x1x16x8xbf16>
    %23 = vector.shape_cast %22 : vector<1x1x16x8xbf16> to vector<16x8xbf16>
    %cst_34 = arith.constant dense<0.000000e+00> : vector<128x8xf32>
    %24 = tpu.matmul %17, %23, %cst_34 {dimension_numbers = #tpu.dot_dimension_numbers<[1], [0], [0], [1], [0, 0, 1, 1], [], []>} : vector<128x16xbf16>, vector<16x8xbf16>, vector<128x8xf32> -> vector<128x8xf32>
    %25 = arith.addf %14, %24 : vector<128x8xf32>
    %c0_35 = arith.constant 0 : index
    %c2 = arith.constant 2 : index
    %c0_36 = arith.constant 0 : index
    %c0_37 = arith.constant 0 : index
    %26 = vector.load %arg4[%c0_35, %c2, %c0_36, %c0_37] : memref<3x3x16x8xbf16, #tpu.memory_space<vmem>>, vector<1x1x16x8xbf16>
    %27 = vector.shape_cast %26 : vector<1x1x16x8xbf16> to vector<16x8xbf16>
    %cst_38 = arith.constant dense<0.000000e+00> : vector<128x8xf32>
    %28 = tpu.matmul %17, %27, %cst_38 {dimension_numbers = #tpu.dot_dimension_numbers<[1], [0], [0], [1], [0, 0, 1, 1], [], []>} : vector<128x16xbf16>, vector<16x8xbf16>, vector<128x8xf32> -> vector<128x8xf32>
    %29 = arith.addf %15, %28 : vector<128x8xf32>
    %c1_39 = arith.constant 1 : index
    %c0_40 = arith.constant 0 : index
    %c0_41 = arith.constant 0 : index
    %30 = vector.load %arg9[%c1_39, %c0_40, %c0_41] : memref<10x16x16xbf16, #tpu.memory_space<vmem>>, vector<8x16x16xbf16>
    %31 = vector.shape_cast %30 : vector<8x16x16xbf16> to vector<128x16xbf16>
    %c1_42 = arith.constant 1 : index
    %c0_43 = arith.constant 0 : index
    %c0_44 = arith.constant 0 : index
    %c0_45 = arith.constant 0 : index
    %32 = vector.load %arg4[%c1_42, %c0_43, %c0_44, %c0_45] : memref<3x3x16x8xbf16, #tpu.memory_space<vmem>>, vector<1x1x16x8xbf16>
    %33 = vector.shape_cast %32 : vector<1x1x16x8xbf16> to vector<16x8xbf16>
    %cst_46 = arith.constant dense<0.000000e+00> : vector<128x8xf32>
    %34 = tpu.matmul %31, %33, %cst_46 {dimension_numbers = #tpu.dot_dimension_numbers<[1], [0], [0], [1], [0, 0, 1, 1], [], []>} : vector<128x16xbf16>, vector<16x8xbf16>, vector<128x8xf32> -> vector<128x8xf32>
    %35 = arith.addf %21, %34 : vector<128x8xf32>
    %c1_47 = arith.constant 1 : index
    %c1_48 = arith.constant 1 : index
    %c0_49 = arith.constant 0 : index
    %c0_50 = arith.constant 0 : index
    %36 = vector.load %arg4[%c1_47, %c1_48, %c0_49, %c0_50] : memref<3x3x16x8xbf16, #tpu.memory_space<vmem>>, vector<1x1x16x8xbf16>
    %37 = vector.shape_cast %36 : vector<1x1x16x8xbf16> to vector<16x8xbf16>
    %cst_51 = arith.constant dense<0.000000e+00> : vector<128x8xf32>
    %38 = tpu.matmul %31, %37, %cst_51 {dimension_numbers = #tpu.dot_dimension_numbers<[1], [0], [0], [1], [0, 0, 1, 1], [], []>} : vector<128x16xbf16>, vector<16x8xbf16>, vector<128x8xf32> -> vector<128x8xf32>
    %39 = arith.addf %25, %38 : vector<128x8xf32>
    %c1_52 = arith.constant 1 : index
    %c2_53 = arith.constant 2 : index
    %c0_54 = arith.constant 0 : index
    %c0_55 = arith.constant 0 : index
    %40 = vector.load %arg4[%c1_52, %c2_53, %c0_54, %c0_55] : memref<3x3x16x8xbf16, #tpu.memory_space<vmem>>, vector<1x1x16x8xbf16>
    %41 = vector.shape_cast %40 : vector<1x1x16x8xbf16> to vector<16x8xbf16>
    %cst_56 = arith.constant dense<0.000000e+00> : vector<128x8xf32>
    %42 = tpu.matmul %31, %41, %cst_56 {dimension_numbers = #tpu.dot_dimension_numbers<[1], [0], [0], [1], [0, 0, 1, 1], [], []>} : vector<128x16xbf16>, vector<16x8xbf16>, vector<128x8xf32> -> vector<128x8xf32>
    %43 = arith.addf %29, %42 : vector<128x8xf32>
    %c2_57 = arith.constant 2 : index
    %c0_58 = arith.constant 0 : index
    %c0_59 = arith.constant 0 : index
    %44 = vector.load %arg9[%c2_57, %c0_58, %c0_59] : memref<10x16x16xbf16, #tpu.memory_space<vmem>>, vector<8x16x16xbf16>
    %45 = vector.shape_cast %44 : vector<8x16x16xbf16> to vector<128x16xbf16>
    %c2_60 = arith.constant 2 : index
    %c0_61 = arith.constant 0 : index
    %c0_62 = arith.constant 0 : index
    %c0_63 = arith.constant 0 : index
    %46 = vector.load %arg4[%c2_60, %c0_61, %c0_62, %c0_63] : memref<3x3x16x8xbf16, #tpu.memory_space<vmem>>, vector<1x1x16x8xbf16>
    %47 = vector.shape_cast %46 : vector<1x1x16x8xbf16> to vector<16x8xbf16>
    %cst_64 = arith.constant dense<0.000000e+00> : vector<128x8xf32>
    %48 = tpu.matmul %45, %47, %cst_64 {dimension_numbers = #tpu.dot_dimension_numbers<[1], [0], [0], [1], [0, 0, 1, 1], [], []>} : vector<128x16xbf16>, vector<16x8xbf16>, vector<128x8xf32> -> vector<128x8xf32>
    %49 = arith.addf %35, %48 : vector<128x8xf32>
    %c2_65 = arith.constant 2 : index
    %c1_66 = arith.constant 1 : index
    %c0_67 = arith.constant 0 : index
    %c0_68 = arith.constant 0 : index
    %50 = vector.load %arg4[%c2_65, %c1_66, %c0_67, %c0_68] : memref<3x3x16x8xbf16, #tpu.memory_space<vmem>>, vector<1x1x16x8xbf16>
    %51 = vector.shape_cast %50 : vector<1x1x16x8xbf16> to vector<16x8xbf16>
    %cst_69 = arith.constant dense<0.000000e+00> : vector<128x8xf32>
    %52 = tpu.matmul %45, %51, %cst_69 {dimension_numbers = #tpu.dot_dimension_numbers<[1], [0], [0], [1], [0, 0, 1, 1], [], []>} : vector<128x16xbf16>, vector<16x8xbf16>, vector<128x8xf32> -> vector<128x8xf32>
    %53 = arith.addf %39, %52 : vector<128x8xf32>
    %c2_70 = arith.constant 2 : index
    %c2_71 = arith.constant 2 : index
    %c0_72 = arith.constant 0 : index
    %c0_73 = arith.constant 0 : index
    %54 = vector.load %arg4[%c2_70, %c2_71, %c0_72, %c0_73] : memref<3x3x16x8xbf16, #tpu.memory_space<vmem>>, vector<1x1x16x8xbf16>
    %55 = vector.shape_cast %54 : vector<1x1x16x8xbf16> to vector<16x8xbf16>
    %cst_74 = arith.constant dense<0.000000e+00> : vector<128x8xf32>
    %56 = tpu.matmul %45, %55, %cst_74 {dimension_numbers = #tpu.dot_dimension_numbers<[1], [0], [0], [1], [0, 0, 1, 1], [], []>} : vector<128x16xbf16>, vector<16x8xbf16>, vector<128x8xf32> -> vector<128x8xf32>
    %57 = arith.addf %43, %56 : vector<128x8xf32>
    %58 = vector.shape_cast %49 : vector<128x8xf32> to vector<8x16x8xf32>
    %c1_i32 = arith.constant 1 : i32
    %59 = tpu.dynamic_rotate %58 by %c1_i32 dim 1 : vector<8x16x8xf32>, i32 -> vector<8x16x8xf32>
    %60 = vector.shape_cast %57 : vector<128x8xf32> to vector<8x16x8xf32>
    %c15_i32 = arith.constant 15 : i32
    %61 = tpu.dynamic_rotate %60 by %c15_i32 dim 1 : vector<8x16x8xf32>, i32 -> vector<8x16x8xf32>
    %62 = tpu.iota {dimensions = array<i32: 1>} : vector<8x16x1xi32>
    %63 = vector.shape_cast %53 : vector<128x8xf32> to vector<8x16x8xf32>
    %c0_i32 = arith.constant 0 : i32
    %64 = vector.broadcast %c0_i32 : i32 to vector<8x16x1xi32>
    %65 = arith.cmpi sgt, %62, %64 : vector<8x16x1xi32>
    %cst_75 = arith.constant 0.000000e+00 : f32
    %66 = vector.shape_cast %65 : vector<8x16x1xi1> to vector<8x16x1xi1>
    %67 = vector.broadcast %66 : vector<8x16x1xi1> to vector<8x16x8xi1>
    %68 = vector.broadcast %cst_75 : f32 to vector<8x16x8xf32>
    %69 = arith.select %67, %59, %68 : vector<8x16x8xi1>, vector<8x16x8xf32>
    %70 = arith.addf %63, %69 : vector<8x16x8xf32>
    %c15_i32_76 = arith.constant 15 : i32
    %71 = vector.broadcast %c15_i32_76 : i32 to vector<8x16x1xi32>
    %72 = arith.cmpi slt, %62, %71 : vector<8x16x1xi32>
    %cst_77 = arith.constant 0.000000e+00 : f32
    %73 = vector.shape_cast %72 : vector<8x16x1xi1> to vector<8x16x1xi1>
    %74 = vector.broadcast %73 : vector<8x16x1xi1> to vector<8x16x8xi1>
    %75 = vector.broadcast %cst_77 : f32 to vector<8x16x8xf32>
    %76 = arith.select %74, %61, %75 : vector<8x16x8xi1>, vector<8x16x8xf32>
    %77 = arith.addf %70, %76 : vector<8x16x8xf32>
    %c0_78 = arith.constant 0 : index
    %c0_79 = arith.constant 0 : index
    %78 = vector.load %arg5[%c0_78, %c0_79] : memref<1x8xf32, #tpu.memory_space<vmem>>, vector<1x8xf32>
    %79 = vector.shape_cast %78 : vector<1x8xf32> to vector<1x1x8xf32>
    %80 = vector.broadcast %79 : vector<1x1x8xf32> to vector<8x16x8xf32>
    %81 = arith.addf %77, %80 : vector<8x16x8xf32>
    %cst_80 = arith.constant 0.000000e+00 : f32
    %82 = vector.broadcast %cst_80 : f32 to vector<8x16x8xf32>
    %83 = arith.maximumf %81, %82 : vector<8x16x8xf32>
    %c0_81 = arith.constant 0 : index
    %c0_82 = arith.constant 0 : index
    %84 = vector.load %arg6[%c0_81, %c0_82] : memref<1x8xf32, #tpu.memory_space<vmem>>, vector<1x8xf32>
    %85 = vector.shape_cast %84 : vector<1x8xf32> to vector<1x1x8xf32>
    %86 = vector.broadcast %85 : vector<1x1x8xf32> to vector<8x16x8xf32>
    %87 = arith.mulf %83, %86 : vector<8x16x8xf32>
    %cst_83 = arith.constant dense<0.000000e+00> : vector<8x16xf32>
    %88 = vector.multi_reduction <add>, %87, %cst_83 [2] : vector<8x16x8xf32> to vector<8x16xf32>
    %c0_84 = arith.constant 0 : index
    %c0_85 = arith.constant 0 : index
    %89 = vector.load %arg7[%c0_84, %c0_85] : memref<1x1xf32, #tpu.memory_space<vmem>>, vector<1x1xf32>
    %90 = vector.broadcast %89 : vector<1x1xf32> to vector<8x16xf32>
    %91 = arith.addf %88, %90 : vector<8x16xf32>
    %cst_86 = arith.constant 0.000000e+00 : f32
    %92 = vector.broadcast %cst_86 : f32 to vector<8x16xf32>
    %93 = arith.maximumf %91, %92 : vector<8x16xf32>
    %c0_87 = arith.constant 0 : index
    %c0_88 = arith.constant 0 : index
    %c0_89 = arith.constant 0 : index
    %94 = vector.load %arg8[%c0_87, %c0_88, %c0_89] : memref<1x8x16xf32, #tpu.memory_space<vmem>>, vector<1x8x16xf32>
    %95 = vector.shape_cast %94 : vector<1x8x16xf32> to vector<8x16xf32>
    %96 = vector.shape_cast %93 : vector<8x16xf32> to vector<1x8x16xf32>
    tpu.vector_store %arg8[%c0_87, %c0_88, %c0_89], %96 {strides = array<i32>} : memref<1x8x16xf32, #tpu.memory_space<vmem>>, vector<1x8x16xf32>,
    return
  }
  func.func @transform_0(%arg0: i32, %arg1: i32) -> (i32, i32, i32, i32) {
    %c0_i32 = arith.constant 0 : i32
    %c0_i32_0 = arith.constant 0 : i32
    %c0_i32_1 = arith.constant 0 : i32
    return %arg0, %arg1, %c0_i32, %c0_i32_0 : i32, i32, i32, i32
  }
  func.func @transform_1(%arg0: i32, %arg1: i32) -> (i32, i32, i32, i32, i32) {
    %c0_i32 = arith.constant 0 : i32
    %c0_i32_0 = arith.constant 0 : i32
    %c0_i32_1 = arith.constant 0 : i32
    %c0_i32_2 = arith.constant 0 : i32
    return %arg0, %arg1, %c0_i32, %c0_i32_0, %c0_i32_1 : i32, i32, i32, i32, i32
  }
  func.func @transform_2(%arg0: i32, %arg1: i32) -> (i32, i32, i32, i32) {
    %c0_i32 = arith.constant 0 : i32
    %c0_i32_0 = arith.constant 0 : i32
    %c0_i32_1 = arith.constant 0 : i32
    %c0_i32_2 = arith.constant 0 : i32
    %c0_i32_3 = arith.constant 0 : i32
    return %c0_i32, %c0_i32_0, %c0_i32_1, %c0_i32_2 : i32, i32, i32, i32
  }
  func.func @transform_3(%arg0: i32, %arg1: i32) -> (i32, i32) {
    %c0_i32 = arith.constant 0 : i32
    %c0_i32_0 = arith.constant 0 : i32
    %c0_i32_1 = arith.constant 0 : i32
    return %c0_i32, %c0_i32_0 : i32, i32
  }
  func.func @transform_4(%arg0: i32, %arg1: i32) -> (i32, i32) {
    %c0_i32 = arith.constant 0 : i32
    %c0_i32_0 = arith.constant 0 : i32
    %c0_i32_1 = arith.constant 0 : i32
    return %c0_i32, %c0_i32_0 : i32, i32
  }
  func.func @transform_5(%arg0: i32, %arg1: i32) -> (i32, i32) {
    %c0_i32 = arith.constant 0 : i32
    %c0_i32_0 = arith.constant 0 : i32
    %c0_i32_1 = arith.constant 0 : i32
    return %c0_i32, %c0_i32_0 : i32, i32
  }
  func.func @transform_6(%arg0: i32, %arg1: i32) -> (i32, i32, i32) {
    %c0_i32 = arith.constant 0 : i32
    %c0_i32_0 = arith.constant 0 : i32
    return %arg0, %arg1, %c0_i32 : i32, i32, i32
  }
}

module attributes {stable_mosaic.version = 11 : i64} {
  func.func @_conv1x1_kernel(%arg0: i32, %arg1: i32, %arg2: memref<1x4x8x32xbf16, #tpu.memory_space<vmem>>, %arg3: memref<32x32xbf16, #tpu.memory_space<vmem>>, %arg4: memref<1x32xf32, #tpu.memory_space<vmem>>, %arg5: memref<1x4x8x32xbf16, #tpu.memory_space<vmem>>) attributes {dimension_semantics = [#tpu.dimension_semantics<parallel>, #tpu.dimension_semantics<parallel>], iteration_bounds = array<i64: 2, 2>, scalar_prefetch = 0 : i64, scratch_operands = 0 : i64, tpu.core_type = #tpu.core_type<tc>, window_params = [{transform_indices = @transform_0, window_bounds = array<i64: 1, 4, 8, 32>}, {pipeline_mode = #tpu.pipeline_mode<synchronous>, transform_indices = @transform_1, window_bounds = array<i64: 32, 32>}, {pipeline_mode = #tpu.pipeline_mode<synchronous>, transform_indices = @transform_2, window_bounds = array<i64: 1, 32>}, {transform_indices = @transform_3, window_bounds = array<i64: 1, 4, 8, 32>}]} {
    %c0 = arith.constant 0 : index
    %c0_0 = arith.constant 0 : index
    %c0_1 = arith.constant 0 : index
    %c0_2 = arith.constant 0 : index
    %0 = vector.load %arg2[%c0, %c0_0, %c0_1, %c0_2] : memref<1x4x8x32xbf16, #tpu.memory_space<vmem>>, vector<1x4x8x32xbf16>
    %1 = vector.shape_cast %0 : vector<1x4x8x32xbf16> to vector<4x8x32xbf16>
    %2 = vector.shape_cast %1 : vector<4x8x32xbf16> to vector<32x32xbf16>
    %c0_3 = arith.constant 0 : index
    %c0_4 = arith.constant 0 : index
    %3 = vector.load %arg3[%c0_3, %c0_4] : memref<32x32xbf16, #tpu.memory_space<vmem>>, vector<32x32xbf16>
    %cst = arith.constant dense<0.000000e+00> : vector<32x32xf32>
    %4 = tpu.matmul %2, %3, %cst {dimension_numbers = #tpu.dot_dimension_numbers<[1], [0], [0], [1], [0, 0, 1, 1], [], []>} : vector<32x32xbf16>, vector<32x32xbf16>, vector<32x32xf32> -> vector<32x32xf32>
    %c0_5 = arith.constant 0 : index
    %c0_6 = arith.constant 0 : index
    %5 = vector.load %arg4[%c0_5, %c0_6] : memref<1x32xf32, #tpu.memory_space<vmem>>, vector<1x32xf32>
    %6 = vector.broadcast %5 : vector<1x32xf32> to vector<32x32xf32>
    %7 = arith.addf %4, %6 : vector<32x32xf32>
    %8 = vector.shape_cast %7 : vector<32x32xf32> to vector<4x8x32xf32>
    %9 = arith.truncf %8 : vector<4x8x32xf32> to vector<4x8x32xbf16>
    %c0_7 = arith.constant 0 : index
    %c0_8 = arith.constant 0 : index
    %c0_9 = arith.constant 0 : index
    %c0_10 = arith.constant 0 : index
    %10 = vector.load %arg5[%c0_7, %c0_8, %c0_9, %c0_10] : memref<1x4x8x32xbf16, #tpu.memory_space<vmem>>, vector<1x4x8x32xbf16>
    %11 = vector.shape_cast %10 : vector<1x4x8x32xbf16> to vector<4x8x32xbf16>
    %12 = vector.shape_cast %9 : vector<4x8x32xbf16> to vector<1x4x8x32xbf16>
    tpu.vector_store %arg5[%c0_7, %c0_8, %c0_9, %c0_10], %12 {strides = array<i32>} : memref<1x4x8x32xbf16, #tpu.memory_space<vmem>>, vector<1x4x8x32xbf16>,
    return
  }
  func.func @transform_0(%arg0: i32, %arg1: i32) -> (i32, i32, i32, i32) {
    %c0_i32 = arith.constant 0 : i32
    %c0_i32_0 = arith.constant 0 : i32
    %c0_i32_1 = arith.constant 0 : i32
    return %arg0, %arg1, %c0_i32, %c0_i32_0 : i32, i32, i32, i32
  }
  func.func @transform_1(%arg0: i32, %arg1: i32) -> (i32, i32) {
    %c0_i32 = arith.constant 0 : i32
    %c0_i32_0 = arith.constant 0 : i32
    %c0_i32_1 = arith.constant 0 : i32
    return %c0_i32, %c0_i32_0 : i32, i32
  }
  func.func @transform_2(%arg0: i32, %arg1: i32) -> (i32, i32) {
    %c0_i32 = arith.constant 0 : i32
    %c0_i32_0 = arith.constant 0 : i32
    %c0_i32_1 = arith.constant 0 : i32
    return %c0_i32, %c0_i32_0 : i32, i32
  }
  func.func @transform_3(%arg0: i32, %arg1: i32) -> (i32, i32, i32, i32) {
    %c0_i32 = arith.constant 0 : i32
    %c0_i32_0 = arith.constant 0 : i32
    %c0_i32_1 = arith.constant 0 : i32
    return %arg0, %arg1, %c0_i32, %c0_i32_0 : i32, i32, i32, i32
  }
}

</mosaic_0001>

<llo_original>
// kernel: depth_pro_forward.6
$region0: #{depth_pro_forward.6}
  #allocation0 [shape = 'u32[]', space=smem, size = 0x4, offset = 0x4, fixed_abs, tag = 'smem constant byte address 0x4 - core index']
  #allocation1 [shape = 'u32[144,128]{1,0:T(1,128)}', space=vmem, size = 0x12000, scoped, tag = 'internal scratch']
  %s0 = inlined_call_operand.vmem [shape: bf16[2,8,8,12], index: 0, kind: input, shape index: {}]
  %s1 = inlined_call_operand.vmem [shape: bf16[12,32], index: 1, kind: input, shape index: {}]
  %s2 = inlined_call_operand.vmem [shape: f32[1,32], index: 2, kind: input, shape index: {}]
  %s3 = inlined_call_operand.vmem [shape: bf16[2,8,8,32], index: 3, kind: output, shape index: {}]
  %s4 = sld [smem:[#allocation0]]
  $region45: #{depth_pro_forward.6} parent=0
    _
  %s6 = ssub.s32 1, %s4
  %s7 = scalar_select 0, %s6, %s4
  loop: start=0, step=1, limit=6
  $region2: #{depth_pro_forward.6} parent=0 // loop_pre_header
    _
  $region3: #{depth_pro_forward.6} parent=0 // loop_header
    %s9 = sphi 0, %s13
    %p10 = scmp.ge.s32.totalorder %s9, 6
    %s16 = sphi 0, %s28
    %s17 = sphi 0, %s24
    %s18 = sphi 0, %s16
    %s19 = sphi 0, %s17
    %s20 = sphi 0, %s18
    %s21 = sphi 0, %s19
    %s33 = sphi 0, %s35
    %s36 = sphi 0, %s33
    %s37 = sphi 0, %s36
    %s53 = sphi 0, %s37
    %s57 = sphi 0, %s57
    %s59 = sphi 0, %s57
    %s60 = sphi 0, %s59
    %s74 = sphi 0, %s60
    %s78 = sphi 0, %s78
    %s80 = sphi 0, %s78
    %s81 = sphi 0, %s80
    %s95 = sphi 0, %s81
    %s103 = sphi 0, %s105
    %s106 = sphi 0, %s103
    %s107 = sphi 0, %s106
    %s123 = sphi 0, %s107
  $region4: #{depth_pro_forward.6} parent=0 // loop_header_branch
    %12 = sbr.rel (%p10) target = $region8
  $region5: #{depth_pro_forward.6} parent=0 // loop_body
    %s14 = ssub.s32 %s9, 1
    %s15 = ssub.s32 %s9, 2
    %s22 = sadd.s32 1, %s17
    %p23 = scmp.ge.s32.totalorder %s22, 2
    %s24 = scalar_select %p23, 0, %s22
    %s25 = sadd.s32 1, %s16
    %s26 = scalar_select %p23, %s25, %s16
    %p27 = scmp.ge.s32.totalorder %s26, 2
    %s28 = scalar_select %p27, 0, %s26
    %s29 = ssub.s32 %s16, %s28
    %s30 = ssub.s32 %s17, %s24
    %s31 = sor.u32 %s29, %s30
    %p32 = scmp.eq.s32.totalorder %s31, 0
    %s34 = sadd.s32 %s33, 1
    %s35 = scalar_select %p32, %s33, %s34
    %p38 = pneg %p32
    %p39 = scmp.eq.s32.totalorder %s9, 3
    %p40 = por %p38, %p39
    %p41 = scmp.ne.s32.totalorder %s33, %s36
    %p42 = scmp.eq.s32.totalorder %s9, 0
    %p43 = por %p41, %p42
    %p44 = scmp.ne.s32.totalorder %s33, %s36
    %p45 = scmp.eq.s32.totalorder %s14, 3
    %p46 = por %p44, %p45
    %p47 = scmp.ne.s32.totalorder %s36, %s37
    %p48 = scmp.eq.s32.totalorder %s14, 0
    %p49 = por %p47, %p48
    %p50 = scmp.ne.s32.totalorder %s36, %s37
    %p51 = scmp.eq.s32.totalorder %s15, 3
    %p52 = por %p50, %p51
    %p54 = scmp.ne.s32.totalorder %s37, %s53
    %p55 = scmp.eq.s32.totalorder %s15, 0
    %p56 = por %p54, %p55
    %s58 = sadd.s32 %s57, 1
    %p61 = scmp.eq.s32.totalorder %s9, 3
    %p62 = scmp.ne.s32.totalorder %s57, %s59
    %p63 = scmp.eq.s32.totalorder %s9, 0
    %p64 = por %p62, %p63
    %p65 = scmp.ne.s32.totalorder %s57, %s59
    %p66 = scmp.eq.s32.totalorder %s14, 3
    %p67 = por %p65, %p66
    %p68 = scmp.ne.s32.totalorder %s59, %s60
    %p69 = scmp.eq.s32.totalorder %s14, 0
    %p70 = por %p68, %p69
    %p71 = scmp.ne.s32.totalorder %s59, %s60
    %p72 = scmp.eq.s32.totalorder %s15, 3
    %p73 = por %p71, %p72
    %p75 = scmp.ne.s32.totalorder %s60, %s74
    %p76 = scmp.eq.s32.totalorder %s15, 0
    %p77 = por %p75, %p76
    %s79 = sadd.s32 %s78, 1
    %p82 = scmp.eq.s32.totalorder %s9, 3
    %p83 = scmp.ne.s32.totalorder %s78, %s80
    %p84 = scmp.eq.s32.totalorder %s9, 0
    %p85 = por %p83, %p84
    %p86 = scmp.ne.s32.totalorder %s78, %s80
    %p87 = scmp.eq.s32.totalorder %s14, 3
    %p88 = por %p86, %p87
    %p89 = scmp.ne.s32.totalorder %s80, %s81
    %p90 = scmp.eq.s32.totalorder %s14, 0
    %p91 = por %p89, %p90
    %p92 = scmp.ne.s32.totalorder %s80, %s81
    %p93 = scmp.eq.s32.totalorder %s15, 3
    %p94 = por %p92, %p93
    %p96 = scmp.ne.s32.totalorder %s81, %s95
    %p97 = scmp.eq.s32.totalorder %s15, 0
    %p98 = por %p96, %p97
    %s99 = ssub.s32 %s16, %s28
    %s100 = ssub.s32 %s17, %s24
    %s101 = sor.u32 %s99, %s100
    %p102 = scmp.eq.s32.totalorder %s101, 0
    %s104 = sadd.s32 %s103, 1
    %s105 = scalar_select %p102, %s103, %s104
    %p108 = pneg %p102
    %p109 = scmp.eq.s32.totalorder %s9, 3
    %p110 = por %p108, %p109
    %p111 = scmp.ne.s32.totalorder %s103, %s106
    %p112 = scmp.eq.s32.totalorder %s9, 0
    %p113 = por %p111, %p112
    %p114 = scmp.ne.s32.totalorder %s103, %s106
    %p115 = scmp.eq.s32.totalorder %s14, 3
    %p116 = por %p114, %p115
    %p117 = scmp.ne.s32.totalorder %s106, %s107
    %p118 = scmp.eq.s32.totalorder %s14, 0
    %p119 = por %p117, %p118
    %p120 = scmp.ne.s32.totalorder %s106, %s107
    %p121 = scmp.eq.s32.totalorder %s15, 3
    %p122 = por %p120, %p121
    %p124 = scmp.ne.s32.totalorder %s107, %s123
    %p125 = scmp.eq.s32.totalorder %s15, 0
    %p126 = por %p124, %p125
    %p127 = scmp.le.s32.totalorder 1, %s9
    %p128 = scmp.lt.s32.totalorder %s9, 5
    %p129 = pnand %p127, %p128
    %p130 = pneg %p129
    // Predicated region
    $region9: #{depth_pro_forward.6} parent=5 // pred_check
      _
    $region10: #{depth_pro_forward.6} parent=5 // pred_check_branch
      %132 = sbr.rel (%p129) target = $region12
    $region11: #{depth_pro_forward.6} parent=5 // pred_region
      %s133 = ssub.s32 %s9, 1
      // Predicated region
      $region13: #{depth_pro_forward.6} parent=11 // pred_check
        %p134 = pneg %p70
      $region14: #{depth_pro_forward.6} parent=11 // pred_check_branch
        %136 = sbr.rel (%p134) target = $region16
      $region15: #{depth_pro_forward.6} parent=11 // pred_region
        _
      $region16: #{depth_pro_forward.6} parent=11 // pred_fallthru
        _
      // Predicated region
      $region17: #{depth_pro_forward.6} parent=11 // pred_check
        %p137 = pneg %p91
      $region18: #{depth_pro_forward.6} parent=11 // pred_check_branch
        %139 = sbr.rel (%p137) target = $region20
      $region19: #{depth_pro_forward.6} parent=11 // pred_region
        _
      $region20: #{depth_pro_forward.6} parent=11 // pred_fallthru
        _
    $region12: #{depth_pro_forward.6} parent=5 // pred_fallthru
      _
    %p140 = scmp.lt.s32.totalorder %s9, 4
    // Predicated region
    $region21: #{depth_pro_forward.6} parent=5 // pred_check
      %p141 = pneg %p140
    $region22: #{depth_pro_forward.6} parent=5 // pred_check_branch
      %143 = sbr.rel (%p141) target = $region24
    $region23: #{depth_pro_forward.6} parent=5 // pred_region
      // Predicated region
      $region25: #{depth_pro_forward.6} parent=23 // pred_check
        %p144 = pneg %p43
      $region26: #{depth_pro_forward.6} parent=23 // pred_check_branch
        %146 = sbr.rel (%p144) target = $region28
      $region27: #{depth_pro_forward.6} parent=23 // pred_region
        %s147 = smul.u32 4, %s17
        %p148 = scmp.lt.s32.totalorder %s16, 1
        %s149 = scalar_select %p148, %s16, 1
        %p150 = scmp.lt.s32.totalorder %s147, 7
        %s151 = scalar_select %p150, %s147, 7
        %s152 = smul.addr %s149, 8
        %s153 = sadd.s32 %s151, %s152
        %s154 = smul.addr %s153, 4
        %s155 = scalar_lea.vmem %s0, %s154
        %s156 = smul.u32 4, %s17
      $region28: #{depth_pro_forward.6} parent=23 // pred_fallthru
        _
    $region24: #{depth_pro_forward.6} parent=5 // pred_fallthru
      _
    %p157 = scmp.le.s32.totalorder 1, %s9
    %p158 = scmp.lt.s32.totalorder %s9, 5
    %p159 = pnand %p157, %p158
    %p160 = pneg %p159
    // Predicated region
    $region29: #{depth_pro_forward.6} parent=5 // pred_check
      _
    $region30: #{depth_pro_forward.6} parent=5 // pred_check_branch
      %162 = sbr.rel (%p159) target = $region32
    $region31: #{depth_pro_forward.6} parent=5 // pred_region
      %s163 = ssub.s32 %s9, 1
      %s164 = smul.u32 4, %s19
      %p165 = scmp.lt.s32.totalorder %s18, 1
      %s166 = scalar_select %p165, %s18, 1
      %p167 = scmp.lt.s32.totalorder %s164, 7
      %s168 = scalar_select %p167, %s164, 7
      %s169 = smul.addr %s166, 8
      %s170 = sadd.s32 %s168, %s169
      %s171 = smul.addr %s170, 4
      %s172 = scalar_lea.vmem %s0, %s171
      %p173 = pneg %p49
      %p174 = pneg %p46
      %p175 = pneg %p70
      %p176 = pneg %p67
      %p177 = pneg %p91
      %p178 = pneg %p88
      %p179 = pneg %p119
      %p180 = pneg %p116
      %s181 = smul.u32 4, %s19
      %p182 = scmp.lt.s32.totalorder %s18, 1
      %s183 = scalar_select %p182, %s18, 1
      %p184 = scmp.lt.s32.totalorder %s181, 7
      %s185 = scalar_select %p184, %s181, 7
      %s186 = smul.addr %s183, 8
      %s187 = sadd.s32 %s185, %s186
      %s188 = smul.addr %s187, 4
      %s189 = scalar_lea.vmem %s3, %s188
      %s190 = smul.u32 4, %s19
      %p191 = scmp.lt.s32.totalorder %s18, 1
      %s192 = scalar_select %p191, %s18, 1
      %p193 = scmp.lt.s32.totalorder %s190, 7
      %s194 = scalar_select %p193, %s190, 7
      %s195 = smul.addr %s192, 8
      %s196 = sadd.s32 %s194, %s195
      %s197 = smul.addr %s196, 4
      %s198 = scalar_lea.vmem %s0, %s197
      %s199 = smul.u32 4, %s19
      %s200 = smul.u32 4, %s19
      %p201 = scmp.lt.s32.totalorder %s18, 1
      %s202 = scalar_select %p201, %s18, 1
      %p203 = scmp.lt.s32.totalorder %s200, 7
      %s204 = scalar_select %p203, %s200, 7
      %s205 = smul.addr %s202, 8
      %s206 = sadd.s32 %s204, %s205
      %s207 = smul.addr %s206, 4
      %s208 = scalar_lea.vmem %s3, %s207
      %s209 = smul.u32 4, %s19
      %v211 = vld [vmem:[%s198] sm:$0xf]
      %v212 = vld [vmem:[%s198 + $0x4] sm:$0xf]
      %v213 = vld [vmem:[%s198 + $0x8] sm:$0xf]
      %v214 = vld [vmem:[%s198 + $0xc] sm:$0xf]
      %v215 = vld [vmem:[%s1] sm:$0xf]
      %v216 = vld [vmem:[%s1 + $0x4] sm:$0x3]
      %v217 = vld [vmem:[%s2] sm:$0x1]
      %v219 = vlaneseq
      %v220 = vshrl.u32 %v219, 7
      %v221 = vsub.s32 0, %v220
      %v222 = vrot.slane %v217, %v221
      %v228 = vunpack.c.l.b16 %v211
      %v229 = vunpack.c.l.b16 %v212
      %v230 = vunpack.c.l.b16 %v213
      %v231 = vunpack.c.l.b16 %v214
      %v232 = vpack.c.b16 %v229, %v228
      %v233 = vpack.c.b16 %v231, %v230
      %v236 = vunpack.c.l.b16 %v215
      %v237 = vunpack.c.l.b16 %v216
      %v238 = vpack.c.b16 %v237, %v236
      %vm239 = vcmask 97280
      %v241 = vsel %vm239, %v232, 0
      %v244 = vsel %vm239, %v233, 0
      %vm246 = vcmask 1045504
      %v248 = vsel %vm246, %v238, 0
      %250 = vmatprep.subr.bf16.mxu0 0
      %251 = vmatpush1.bf16.msra.mxu0 0
      %252 = vmatprep.subr.bf16.mxu0 0
      %253 = vmatpush1.bf16.msra.mxu0 0
      %254 = vmatprep.subr.bf16.mxu0 0
      %255 = vmatpush1.bf16.msra.mxu0 0
      %256 = vmatprep.subr.bf16.mxu0 0
      %257 = vmatpush1.bf16.msra.mxu0 0
      %258 = vmatprep.subr.bf16.mxu0 0
      %259 = vmatpush1.bf16.msra.mxu0 0
      %260 = vmatprep.subr.bf16.mxu0 0
      %261 = vmatpush1.bf16.msra.mxu0 0
      %262 = vmatprep.subr.bf16.mxu0 0
      %263 = vmatpush1.bf16.msra.mxu0 0
      %264 = vmatprep.subr.bf16.mxu0 0
      %265 = vmatpush1.bf16.msra.mxu0 %v248
      %266 = vmatprep.subr.bf16.mxu0 0
      %267 = vmatpush2.bf16.msra.mxu0 0
      %268 = vmatprep.subr.bf16.mxu0 0
      %269 = vmatpush2.bf16.msra.mxu0 0
      %270 = vmatprep.subr.bf16.mxu0 0
      %271 = vmatpush2.bf16.msra.mxu0 0
      %272 = vmatprep.subr.bf16.mxu0 0
      %273 = vmatpush2.bf16.msra.mxu0 0
      %274 = vmatprep.subr.bf16.mxu0 0
      %275 = vmatpush2.bf16.msra.mxu0 0
      %276 = vmatprep.subr.bf16.mxu0 0
      %277 = vmatpush2.bf16.msra.mxu0 0
      %278 = vmatprep.subr.bf16.mxu0 0
      %279 = vmatpush2.bf16.msra.mxu0 0
      %280 = vmatprep.subr.bf16.mxu0 0
      %281 = vmatpush2.bf16.msra.mxu0 0
      %282 = vmatprep.mubr.bf16.mxu0 0
      %283 = vmatmul.mubr.bf16.gmra.mxu0 %v241
      %v284 = vpop.f32.mrf.mxu0
      %v285 = vadd.f32 %v222, %v284
      %v286 = vpop.f32.mrf.mxu0
      %v287 = vpop.f32.mrf.mxu0
      %v288 = vadd.f32 %v222, %v287
      %v289 = vpop.f32.mrf.mxu0
      %290 = vmatprep.mubr.bf16.mxu0 0
      %291 = vmatmul.mubr.bf16.gmra.mxu0 %v244
      %v292 = vpop.f32.mrf.mxu0
      %v293 = vadd.f32 %v222, %v292
      %v294 = vpop.f32.mrf.mxu0
      %v295 = vpop.f32.mrf.mxu0
      %v296 = vadd.f32 %v222, %v295
      %v297 = vpop.f32.mrf.mxu0
      %298 = vdwg.mxu0
      %v299 = vmax.f32 %v285, 0.0
      %v300 = vmax.f32 %v288, 0.0
      %v301 = vmax.f32 %v293, 0.0
      %v302 = vmax.f32 %v296, 0.0
      %v303 = vpack.c.bf16 %v299, %v299
      %v304 = vpack.c.bf16 %v300, %v300
      %v305 = vpack.c.bf16 %v301, %v301
      %v306 = vpack.c.bf16 %v302, %v302
      %vm307 = vcmask 257024
      %308 = vst.msk [vmem:[%s208] sm:$0xf] %vm307, %v303
      %309 = vst.msk [vmem:[%s208 + $0x4] sm:$0xf] %vm307, %v304
      %310 = vst.msk [vmem:[%s208 + $0x8] sm:$0xf] %vm307, %v305
      %311 = vst.msk [vmem:[%s208 + $0xc] sm:$0xf] %vm307, %v306
      %s312 = smul.u32 4, %s19
      %p313 = scmp.lt.s32.totalorder %s18, 1
      %s314 = scalar_select %p313, %s18, 1
      %p315 = scmp.lt.s32.totalorder %s312, 7
      %s316 = scalar_select %p315, %s312, 7
      %s317 = smul.addr %s314, 8
      %s318 = sadd.s32 %s316, %s317
      %s319 = smul.addr %s318, 4
      %s320 = scalar_lea.vmem %s3, %s319
      // Predicated region
      $region33: #{depth_pro_forward.6} parent=31 // pred_check
        %p321 = pneg %p116
      $region34: #{depth_pro_forward.6} parent=31 // pred_check_branch
        %323 = sbr.rel (%p321) target = $region36
      $region35: #{depth_pro_forward.6} parent=31 // pred_region
        %s324 = smul.u32 4, %s19
      $region36: #{depth_pro_forward.6} parent=31 // pred_fallthru
        _
    $region32: #{depth_pro_forward.6} parent=5 // pred_fallthru
      _
    %p325 = scmp.le.s32.totalorder 2, %s9
    // Predicated region
    $region37: #{depth_pro_forward.6} parent=5 // pred_check
      %p326 = pneg %p325
    $region38: #{depth_pro_forward.6} parent=5 // pred_check_branch
      %328 = sbr.rel (%p326) target = $region40
    $region39: #{depth_pro_forward.6} parent=5 // pred_region
      %s329 = ssub.s32 %s9, 2
      // Predicated region
      $region41: #{depth_pro_forward.6} parent=39 // pred_check
        %p330 = pneg %p122
      $region42: #{depth_pro_forward.6} parent=39 // pred_check_branch
        %332 = sbr.rel (%p330) target = $region44
      $region43: #{depth_pro_forward.6} parent=39 // pred_region
        %s333 = smul.u32 4, %s21
        %p334 = scmp.lt.s32.totalorder %s20, 1
        %s335 = scalar_select %p334, %s20, 1
        %p336 = scmp.lt.s32.totalorder %s333, 7
        %s337 = scalar_select %p336, %s333, 7
        %s338 = smul.addr %s335, 8
        %s339 = sadd.s32 %s337, %s338
        %s340 = smul.addr %s339, 4
        %s341 = scalar_lea.vmem %s3, %s340
      $region44: #{depth_pro_forward.6} parent=39 // pred_fallthru
        _
    $region40: #{depth_pro_forward.6} parent=5 // pred_fallthru
      _
  $region6: #{depth_pro_forward.6} parent=0 // loop_footer
    %s13 = sadd.s32 1, %s9
  $region7: #{depth_pro_forward.6} parent=0 // loop_footer_branch
    %8 = sbr.rel target = $region3
  $region8: #{depth_pro_forward.6} parent=0 // loop_exit
    _

// kernel: tile.8
$region0: #{tile.8}
  #allocation0 [shape = 's32[1]{0}', space=sflag, size = 0x4, scoped, tag = 'scoped memory for tile.8']
  %s0 = inlined_call_operand.vmem [shape: f32[16], index: 0, kind: input, shape index: {}]
  %s1 = inlined_call_operand.vmem [shape: f32[4,16], index: 1, kind: output, shape index: {}]
  // Predicated region
  $region2: #{tile.8} parent=0 // pred_check
    _
  $region3: #{tile.8} parent=0 // pred_check_branch
    %3 = sbr.rel (0) target = $region5
  $region4: #{tile.8} parent=0 // pred_region
    _
  $region5: #{tile.8} parent=0 // pred_fallthru
    _
  %v4 = vld [vmem:[%s0] ss:$0 sm:$0xff]
  %5 = vst [vmem:[%s1] sm:$0xf] %v4

// kernel: tile.9
$region0: #{tile.9}
  %s0 = inlined_call_operand.vmem [shape: f32[4,16], index: 0, kind: input, shape index: {}]
  %s1 = inlined_call_operand.vmem [shape: f32[1,64], index: 1, kind: output, shape index: {}]
  $region1: #{tile.9} parent=0
    #allocation0 [shape = 'u8[4096]{0}', space=vmem, size = 0x1000, scoped, tag = 'scoped mem for output reshape']
    #allocation1 [shape = 'u8[4096]{0}', space=vmem, size = 0x1000, scoped, tag = 'scoped mem for input reshape']
    %s3 = sshll.u32 1, 4
    %s4 = ssub.s32 %s3, 1
    %v5 = vld [vmem:[%s0] sm:%s4]
    %6 = vst [vmem:[#allocation1] sm:%s4] %v5
    %v7 = vld [vmem:[#allocation1] sm:$0x1]
    %vm8 = vcmask 130048
    %9 = vst.msk [vmem:[#allocation0] sm:$0x1] %vm8, %v7
    %s10 = scalar_lea.vmem [#allocation1], 3
    %v11 = vld [vmem:[%s10] sm:$0x1]
    %12 = vrot.lane.b32.xlu0 %v11, 48
    %v13 = vpop.permute.xlu0 %12
    %vm14 = vcmask 523648
    %15 = vst.msk [vmem:[#allocation0] sm:$0x1] %vm14, %v13
    %s16 = scalar_lea.vmem [#allocation1], 2
    %v17 = vld [vmem:[%s16] sm:$0x1]
    %18 = vrot.lane.b32.xlu0 %v17, 32
    %v19 = vpop.permute.xlu0 %18
    %vm20 = vcmask 392448
    %21 = vst.msk [vmem:[#allocation0] sm:$0x1] %vm20, %v19
    %s22 = scalar_lea.vmem [#allocation1], 1
    %v23 = vld [vmem:[%s22] sm:$0x1]
    %24 = vrot.lane.b32.xlu0 %v23, 16
    %v25 = vpop.permute.xlu0 %24
    %vm26 = vcmask 261248
    %27 = vst.msk [vmem:[#allocation0] sm:$0x1] %vm26, %v25
    %s29 = sshll.u32 1, 1
    %s30 = ssub.s32 %s29, 1
    %v32 = vld [vmem:[#allocation0] sm:%s30]
    %s33 = sshll.u32 1, 1
    %s34 = ssub.s32 %s33, 1
    %35 = vst [vmem:[%s1] sm:%s34] %v32

// kernel: depth_pro_forward.10
$region0: #{depth_pro_forward.10}
  #allocation0 [shape = 'u32[]', space=smem, size = 0x4, offset = 0x4, fixed_abs, tag = 'smem constant byte address 0x4 - core index']
  #allocation1 [shape = 'u32[144,128]{1,0:T(1,128)}', space=vmem, size = 0x12000, scoped, tag = 'internal scratch']
  %s0 = inlined_call_operand.vmem [shape: bf16[2,8,8,16], index: 0, kind: input, shape index: {}]
  %s1 = inlined_call_operand.vmem [shape: bf16[16,64], index: 1, kind: input, shape index: {}]
  %s2 = inlined_call_operand.vmem [shape: f32[1,64], index: 2, kind: input, shape index: {}]
  %s3 = inlined_call_operand.vmem [shape: bf16[2,8,2,8,32], index: 3, kind: output, shape index: {}]
  %s4 = sld [smem:[#allocation0]]
  $region45: #{depth_pro_forward.10} parent=0
    _
  %s6 = ssub.s32 1, %s4
  %s7 = scalar_select 0, %s6, %s4
  loop: start=0, step=1, limit=6
  $region2: #{depth_pro_forward.10} parent=0 // loop_pre_header
    _
  $region3: #{depth_pro_forward.10} parent=0 // loop_header
    %s9 = sphi 0, %s13
    %p10 = scmp.ge.s32.totalorder %s9, 6
    %s16 = sphi 0, %s28
    %s17 = sphi 0, %s24
    %s18 = sphi 0, %s16
    %s19 = sphi 0, %s17
    %s20 = sphi 0, %s18
    %s21 = sphi 0, %s19
    %s33 = sphi 0, %s35
    %s36 = sphi 0, %s33
    %s37 = sphi 0, %s36
    %s53 = sphi 0, %s37
    %s57 = sphi 0, %s57
    %s59 = sphi 0, %s57
    %s60 = sphi 0, %s59
    %s74 = sphi 0, %s60
    %s78 = sphi 0, %s78
    %s80 = sphi 0, %s78
    %s81 = sphi 0, %s80
    %s95 = sphi 0, %s81
    %s103 = sphi 0, %s105
    %s106 = sphi 0, %s103
    %s107 = sphi 0, %s106
    %s123 = sphi 0, %s107
  $region4: #{depth_pro_forward.10} parent=0 // loop_header_branch
    %12 = sbr.rel (%p10) target = $region8
  $region5: #{depth_pro_forward.10} parent=0 // loop_body
    %s14 = ssub.s32 %s9, 1
    %s15 = ssub.s32 %s9, 2
    %s22 = sadd.s32 1, %s17
    %p23 = scmp.ge.s32.totalorder %s22, 2
    %s24 = scalar_select %p23, 0, %s22
    %s25 = sadd.s32 1, %s16
    %s26 = scalar_select %p23, %s25, %s16
    %p27 = scmp.ge.s32.totalorder %s26, 2
    %s28 = scalar_select %p27, 0, %s26
    %s29 = ssub.s32 %s16, %s28
    %s30 = ssub.s32 %s17, %s24
    %s31 = sor.u32 %s29, %s30
    %p32 = scmp.eq.s32.totalorder %s31, 0
    %s34 = sadd.s32 %s33, 1
    %s35 = scalar_select %p32, %s33, %s34
    %p38 = pneg %p32
    %p39 = scmp.eq.s32.totalorder %s9, 3
    %p40 = por %p38, %p39
    %p41 = scmp.ne.s32.totalorder %s33, %s36
    %p42 = scmp.eq.s32.totalorder %s9, 0
    %p43 = por %p41, %p42
    %p44 = scmp.ne.s32.totalorder %s33, %s36
    %p45 = scmp.eq.s32.totalorder %s14, 3
    %p46 = por %p44, %p45
    %p47 = scmp.ne.s32.totalorder %s36, %s37
    %p48 = scmp.eq.s32.totalorder %s14, 0
    %p49 = por %p47, %p48
    %p50 = scmp.ne.s32.totalorder %s36, %s37
    %p51 = scmp.eq.s32.totalorder %s15, 3
    %p52 = por %p50, %p51
    %p54 = scmp.ne.s32.totalorder %s37, %s53
    %p55 = scmp.eq.s32.totalorder %s15, 0
    %p56 = por %p54, %p55
    %s58 = sadd.s32 %s57, 1
    %p61 = scmp.eq.s32.totalorder %s9, 3
    %p62 = scmp.ne.s32.totalorder %s57, %s59
    %p63 = scmp.eq.s32.totalorder %s9, 0
    %p64 = por %p62, %p63
    %p65 = scmp.ne.s32.totalorder %s57, %s59
    %p66 = scmp.eq.s32.totalorder %s14, 3
    %p67 = por %p65, %p66
    %p68 = scmp.ne.s32.totalorder %s59, %s60
    %p69 = scmp.eq.s32.totalorder %s14, 0
    %p70 = por %p68, %p69
    %p71 = scmp.ne.s32.totalorder %s59, %s60
    %p72 = scmp.eq.s32.totalorder %s15, 3
    %p73 = por %p71, %p72
    %p75 = scmp.ne.s32.totalorder %s60, %s74
    %p76 = scmp.eq.s32.totalorder %s15, 0
    %p77 = por %p75, %p76
    %s79 = sadd.s32 %s78, 1
    %p82 = scmp.eq.s32.totalorder %s9, 3
    %p83 = scmp.ne.s32.totalorder %s78, %s80
    %p84 = scmp.eq.s32.totalorder %s9, 0
    %p85 = por %p83, %p84
    %p86 = scmp.ne.s32.totalorder %s78, %s80
    %p87 = scmp.eq.s32.totalorder %s14, 3
    %p88 = por %p86, %p87
    %p89 = scmp.ne.s32.totalorder %s80, %s81
    %p90 = scmp.eq.s32.totalorder %s14, 0
    %p91 = por %p89, %p90
    %p92 = scmp.ne.s32.totalorder %s80, %s81
    %p93 = scmp.eq.s32.totalorder %s15, 3
    %p94 = por %p92, %p93
    %p96 = scmp.ne.s32.totalorder %s81, %s95
    %p97 = scmp.eq.s32.totalorder %s15, 0
    %p98 = por %p96, %p97
    %s99 = ssub.s32 %s16, %s28
    %s100 = ssub.s32 %s17, %s24
    %s101 = sor.u32 %s99, %s100
    %p102 = scmp.eq.s32.totalorder %s101, 0
    %s104 = sadd.s32 %s103, 1
    %s105 = scalar_select %p102, %s103, %s104
    %p108 = pneg %p102
    %p109 = scmp.eq.s32.totalorder %s9, 3
    %p110 = por %p108, %p109
    %p111 = scmp.ne.s32.totalorder %s103, %s106
    %p112 = scmp.eq.s32.totalorder %s9, 0
    %p113 = por %p111, %p112
    %p114 = scmp.ne.s32.totalorder %s103, %s106
    %p115 = scmp.eq.s32.totalorder %s14, 3
    %p116 = por %p114, %p115
    %p117 = scmp.ne.s32.totalorder %s106, %s107
    %p118 = scmp.eq.s32.totalorder %s14, 0
    %p119 = por %p117, %p118
    %p120 = scmp.ne.s32.totalorder %s106, %s107
    %p121 = scmp.eq.s32.totalorder %s15, 3
    %p122 = por %p120, %p121
    %p124 = scmp.ne.s32.totalorder %s107, %s123
    %p125 = scmp.eq.s32.totalorder %s15, 0
    %p126 = por %p124, %p125
    %p127 = scmp.le.s32.totalorder 1, %s9
    %p128 = scmp.lt.s32.totalorder %s9, 5
    %p129 = pnand %p127, %p128
    %p130 = pneg %p129
    // Predicated region
    $region9: #{depth_pro_forward.10} parent=5 // pred_check
      _
    $region10: #{depth_pro_forward.10} parent=5 // pred_check_branch
      %132 = sbr.rel (%p129) target = $region12
    $region11: #{depth_pro_forward.10} parent=5 // pred_region
      %s133 = ssub.s32 %s9, 1
      // Predicated region
      $region13: #{depth_pro_forward.10} parent=11 // pred_check
        %p134 = pneg %p70
      $region14: #{depth_pro_forward.10} parent=11 // pred_check_branch
        %136 = sbr.rel (%p134) target = $region16
      $region15: #{depth_pro_forward.10} parent=11 // pred_region
        _
      $region16: #{depth_pro_forward.10} parent=11 // pred_fallthru
        _
      // Predicated region
      $region17: #{depth_pro_forward.10} parent=11 // pred_check
        %p137 = pneg %p91
      $region18: #{depth_pro_forward.10} parent=11 // pred_check_branch
        %139 = sbr.rel (%p137) target = $region20
      $region19: #{depth_pro_forward.10} parent=11 // pred_region
        _
      $region20: #{depth_pro_forward.10} parent=11 // pred_fallthru
        _
    $region12: #{depth_pro_forward.10} parent=5 // pred_fallthru
      _
    %p140 = scmp.lt.s32.totalorder %s9, 4
    // Predicated region
    $region21: #{depth_pro_forward.10} parent=5 // pred_check
      %p141 = pneg %p140
    $region22: #{depth_pro_forward.10} parent=5 // pred_check_branch
      %143 = sbr.rel (%p141) target = $region24
    $region23: #{depth_pro_forward.10} parent=5 // pred_region
      // Predicated region
      $region25: #{depth_pro_forward.10} parent=23 // pred_check
        %p144 = pneg %p43
      $region26: #{depth_pro_forward.10} parent=23 // pred_check_branch
        %146 = sbr.rel (%p144) target = $region28
      $region27: #{depth_pro_forward.10} parent=23 // pred_region
        %s147 = smul.u32 4, %s17
        %p148 = scmp.lt.s32.totalorder %s16, 1
        %s149 = scalar_select %p148, %s16, 1
        %p150 = scmp.lt.s32.totalorder %s147, 7
        %s151 = scalar_select %p150, %s147, 7
        %s152 = smul.addr %s149, 8
        %s153 = sadd.s32 %s151, %s152
        %s154 = smul.addr %s153, 4
        %s155 = scalar_lea.vmem %s0, %s154
        %s156 = smul.u32 4, %s17
      $region28: #{depth_pro_forward.10} parent=23 // pred_fallthru
        _
    $region24: #{depth_pro_forward.10} parent=5 // pred_fallthru
      _
    %p157 = scmp.le.s32.totalorder 1, %s9
    %p158 = scmp.lt.s32.totalorder %s9, 5
    %p159 = pnand %p157, %p158
    %p160 = pneg %p159
    // Predicated region
    $region29: #{depth_pro_forward.10} parent=5 // pred_check
      _
    $region30: #{depth_pro_forward.10} parent=5 // pred_check_branch
      %162 = sbr.rel (%p159) target = $region32
    $region31: #{depth_pro_forward.10} parent=5 // pred_region
      %s163 = ssub.s32 %s9, 1
      %s164 = smul.u32 4, %s19
      %p165 = scmp.lt.s32.totalorder %s18, 1
      %s166 = scalar_select %p165, %s18, 1
      %p167 = scmp.lt.s32.totalorder %s164, 7
      %s168 = scalar_select %p167, %s164, 7
      %s169 = smul.addr %s166, 8
      %s170 = sadd.s32 %s168, %s169
      %s171 = smul.addr %s170, 4
      %s172 = scalar_lea.vmem %s0, %s171
      %p173 = pneg %p49
      %p174 = pneg %p46
      %p175 = pneg %p70
      %p176 = pneg %p67
      %p177 = pneg %p91
      %p178 = pneg %p88
      %p179 = pneg %p119
      %p180 = pneg %p116
      %s181 = smul.u32 4, %s19
      %p182 = scmp.lt.s32.totalorder %s18, 1
      %s183 = scalar_select %p182, %s18, 1
      %p184 = scmp.lt.s32.totalorder %s181, 7
      %s185 = scalar_select %p184, %s181, 7
      %s186 = smul.addr %s185, 2
      %s187 = smul.addr %s183, 16
      %s188 = sadd.s32 %s186, %s187
      %s189 = smul.addr %s188, 4
      %s190 = scalar_lea.vmem %s3, %s189
      %s191 = smul.u32 4, %s19
      %p192 = scmp.lt.s32.totalorder %s18, 1
      %s193 = scalar_select %p192, %s18, 1
      %p194 = scmp.lt.s32.totalorder %s191, 7
      %s195 = scalar_select %p194, %s191, 7
      %s196 = smul.addr %s193, 8
      %s197 = sadd.s32 %s195, %s196
      %s198 = smul.addr %s197, 4
      %s199 = scalar_lea.vmem %s0, %s198
      %s200 = smul.u32 4, %s19
      %s201 = smul.u32 4, %s19
      %p202 = scmp.lt.s32.totalorder %s18, 1
      %s203 = scalar_select %p202, %s18, 1
      %p204 = scmp.lt.s32.totalorder %s201, 7
      %s205 = scalar_select %p204, %s201, 7
      %s206 = smul.addr %s205, 2
      %s207 = smul.addr %s203, 16
      %s208 = sadd.s32 %s206, %s207
      %s209 = smul.addr %s208, 4
      %s210 = scalar_lea.vmem %s3, %s209
      %s211 = smul.u32 4, %s19
      %v213 = vld [vmem:[%s199] sm:$0xf]
      %v214 = vld [vmem:[%s199 + $0x4] sm:$0xf]
      %v215 = vld [vmem:[%s199 + $0x8] sm:$0xf]
      %v216 = vld [vmem:[%s199 + $0xc] sm:$0xf]
      %v217 = vld [vmem:[%s1] sm:$0xf]
      %v218 = vld [vmem:[%s1 + $0x4] sm:$0xf]
      %v219 = vld [vmem:[%s2] sm:$0x1]
      %v221 = vlaneseq
      %v222 = vshrl.u32 %v221, 7
      %v223 = vsub.s32 0, %v222
      %v224 = vrot.slane %v219, %v223
      %v230 = vunpack.c.l.b16 %v213
      %v231 = vunpack.c.l.b16 %v214
      %v232 = vunpack.c.l.b16 %v215
      %v233 = vunpack.c.l.b16 %v216
      %v234 = vpack.c.b16 %v231, %v230
      %v235 = vpack.c.b16 %v233, %v232
      %v238 = vunpack.c.l.b16 %v217
      %v239 = vunpack.c.l.b16 %v218
      %v240 = vpack.c.b16 %v239, %v238
      %vm242 = vcmask 130048
      %v244 = vsel %vm242, %v234, 0
      %v247 = vsel %vm242, %v235, 0
      %249 = vmatprep.subr.bf16.mxu0 0
      %250 = vmatpush1.bf16.msra.mxu0 0
      %251 = vmatprep.subr.bf16.mxu0 0
      %252 = vmatpush1.bf16.msra.mxu0 0
      %253 = vmatprep.subr.bf16.mxu0 0
      %254 = vmatpush1.bf16.msra.mxu0 0
      %255 = vmatprep.subr.bf16.mxu0 0
      %256 = vmatpush1.bf16.msra.mxu0 0
      %257 = vmatprep.subr.bf16.mxu0 0
      %258 = vmatpush1.bf16.msra.mxu0 0
      %259 = vmatprep.subr.bf16.mxu0 0
      %260 = vmatpush1.bf16.msra.mxu0 0
      %261 = vmatprep.subr.bf16.mxu0 0
      %262 = vmatpush1.bf16.msra.mxu0 0
      %263 = vmatprep.subr.bf16.mxu0 0
      %264 = vmatpush1.bf16.msra.mxu0 %v240
      %265 = vmatprep.subr.bf16.mxu0 0
      %266 = vmatpush2.bf16.msra.mxu0 0
      %267 = vmatprep.subr.bf16.mxu0 0
      %268 = vmatpush2.bf16.msra.mxu0 0
      %269 = vmatprep.subr.bf16.mxu0 0
      %270 = vmatpush2.bf16.msra.mxu0 0
      %271 = vmatprep.subr.bf16.mxu0 0
      %272 = vmatpush2.bf16.msra.mxu0 0
      %273 = vmatprep.subr.bf16.mxu0 0
      %274 = vmatpush2.bf16.msra.mxu0 0
      %275 = vmatprep.subr.bf16.mxu0 0
      %276 = vmatpush2.bf16.msra.mxu0 0
      %277 = vmatprep.subr.bf16.mxu0 0
      %278 = vmatpush2.bf16.msra.mxu0 0
      %279 = vmatprep.subr.bf16.mxu0 0
      %280 = vmatpush2.bf16.msra.mxu0 0
      %281 = vmatprep.mubr.bf16.mxu0 0
      %282 = vmatmul.mubr.bf16.gmra.mxu0 %v244
      %v283 = vpop.f32.mrf.mxu0
      %v284 = vadd.f32 %v224, %v283
      %v285 = vpop.f32.mrf.mxu0
      %v286 = vpop.f32.mrf.mxu0
      %v287 = vadd.f32 %v224, %v286
      %v288 = vpop.f32.mrf.mxu0
      %289 = vmatprep.mubr.bf16.mxu0 0
      %290 = vmatmul.mubr.bf16.gmra.mxu0 %v247
      %v291 = vpop.f32.mrf.mxu0
      %v292 = vadd.f32 %v224, %v291
      %v293 = vpop.f32.mrf.mxu0
      %v294 = vpop.f32.mrf.mxu0
      %v295 = vadd.f32 %v224, %v294
      %v296 = vpop.f32.mrf.mxu0
      %297 = vdwg.mxu0
      %v298 = vpack.c.bf16 %v284, %v284
      %v299 = vpack.c.bf16 %v287, %v287
      %v300 = vpack.c.bf16 %v292, %v292
      %v301 = vpack.c.bf16 %v295, %v295
      %vm302 = vcmask 257024
      %303 = vst.msk [vmem:[%s210] sm:$0xf] %vm302, %v298
      %304 = vst.msk [vmem:[%s210 + $0x8] sm:$0xf] %vm302, %v299
      %305 = vst.msk [vmem:[%s210 + $0x10] sm:$0xf] %vm302, %v300
      %306 = vst.msk [vmem:[%s210 + $0x18] sm:$0xf] %vm302, %v301
      %v311 = vunpack.c.l.b16 %v298
      %v312 = vunpack.c.l.b16 %v299
      %v313 = vunpack.c.l.b16 %v300
      %v314 = vunpack.c.l.b16 %v301
      %v315 = vpack.c.b16 %v311, %v311
      %v316 = vpack.c.b16 %v312, %v312
      %v317 = vpack.c.b16 %v313, %v313
      %v318 = vpack.c.b16 %v314, %v314
      %319 = vrot.lane.b32.xlu0 %v315, 96
      %v320 = vpop.permute.xlu0 %319
      %321 = vrot.lane.b32.xlu0 %v316, 96
      %v322 = vpop.permute.xlu0 %321
      %323 = vrot.lane.b32.xlu0 %v317, 96
      %v324 = vpop.permute.xlu0 %323
      %325 = vrot.lane.b32.xlu0 %v318, 96
      %v326 = vpop.permute.xlu0 %325
      %s331 = scalar_lea.vmem %s210, 4
      %332 = vst.msk [vmem:[%s331] sm:$0xf] %vm302, %v320
      %333 = vst.msk [vmem:[%s331 + $0x8] sm:$0xf] %vm302, %v322
      %334 = vst.msk [vmem:[%s331 + $0x10] sm:$0xf] %vm302, %v324
      %335 = vst.msk [vmem:[%s331 + $0x18] sm:$0xf] %vm302, %v326
      %s336 = smul.u32 4, %s19
      %p337 = scmp.lt.s32.totalorder %s18, 1
      %s338 = scalar_select %p337, %s18, 1
      %p339 = scmp.lt.s32.totalorder %s336, 7
      %s340 = scalar_select %p339, %s336, 7
      %s341 = smul.addr %s340, 2
      %s342 = smul.addr %s338, 16
      %s343 = sadd.s32 %s341, %s342
      %s344 = smul.addr %s343, 4
      %s345 = scalar_lea.vmem %s3, %s344
      // Predicated region
      $region33: #{depth_pro_forward.10} parent=31 // pred_check
        %p346 = pneg %p116
      $region34: #{depth_pro_forward.10} parent=31 // pred_check_branch
        %348 = sbr.rel (%p346) target = $region36
      $region35: #{depth_pro_forward.10} parent=31 // pred_region
        %s349 = smul.u32 4, %s19
      $region36: #{depth_pro_forward.10} parent=31 // pred_fallthru
        _
    $region32: #{depth_pro_forward.10} parent=5 // pred_fallthru
      _
    %p350 = scmp.le.s32.totalorder 2, %s9
    // Predicated region
    $region37: #{depth_pro_forward.10} parent=5 // pred_check
      %p351 = pneg %p350
    $region38: #{depth_pro_forward.10} parent=5 // pred_check_branch
      %353 = sbr.rel (%p351) target = $region40
    $region39: #{depth_pro_forward.10} parent=5 // pred_region
      %s354 = ssub.s32 %s9, 2
      // Predicated region
      $region41: #{depth_pro_forward.10} parent=39 // pred_check
        %p355 = pneg %p122
      $region42: #{depth_pro_forward.10} parent=39 // pred_check_branch
        %357 = sbr.rel (%p355) target = $region44
      $region43: #{depth_pro_forward.10} parent=39 // pred_region
        %s358 = smul.u32 4, %s21
        %p359 = scmp.lt.s32.totalorder %s20, 1
        %s360 = scalar_select %p359, %s20, 1
        %p361 = scmp.lt.s32.totalorder %s358, 7
        %s362 = scalar_select %p361, %s358, 7
        %s363 = smul.addr %s362, 2
        %s364 = smul.addr %s360, 16
        %s365 = sadd.s32 %s363, %s364
        %s366 = smul.addr %s365, 4
        %s367 = scalar_lea.vmem %s3, %s366
      $region44: #{depth_pro_forward.10} parent=39 // pred_fallthru
        _
    $region40: #{depth_pro_forward.10} parent=5 // pred_fallthru
      _
  $region6: #{depth_pro_forward.10} parent=0 // loop_footer
    %s13 = sadd.s32 1, %s9
  $region7: #{depth_pro_forward.10} parent=0 // loop_footer_branch
    %8 = sbr.rel target = $region3
  $region8: #{depth_pro_forward.10} parent=0 // loop_exit
    _

// kernel: depth_pro_forward.7
$region0: #{depth_pro_forward.7}
  #allocation0 [shape = 'u32[]', space=smem, size = 0x4, offset = 0x4, fixed_abs, tag = 'smem constant byte address 0x4 - core index']
  #allocation1 [shape = 'u32[144,128]{1,0:T(1,128)}', space=vmem, size = 0x12000, scoped, tag = 'internal scratch']
  #allocation2 [shape = 'bf16[6,8,32]{2,1,0:T(8,128)(2,1)}', space=vmem, size = 0x3000, scoped, tag = 'scratch operand']
  %s0 = inlined_call_operand.vmem [shape: bf16[2,8,8,32], index: 0, kind: input, shape index: {}]
  %s1 = inlined_call_operand.vmem [shape: bf16[2,2,2,8,32], index: 1, kind: input, shape index: {}]
  %s2 = inlined_call_operand.vmem [shape: bf16[3,3,32,32], index: 2, kind: input, shape index: {}]
  %s3 = inlined_call_operand.vmem [shape: f32[1,32], index: 3, kind: input, shape index: {}]
  %s4 = inlined_call_operand.vmem [shape: bf16[2,8,8,32], index: 4, kind: output, shape index: {}]
  %s5 = sld [smem:[#allocation0]]
  $region49: #{depth_pro_forward.7} parent=0
    _
  %s7 = ssub.s32 1, %s5
  %s8 = scalar_select 0, %s7, %s5
  loop: start=0, step=1, limit=6
  $region2: #{depth_pro_forward.7} parent=0 // loop_pre_header
    _
  $region3: #{depth_pro_forward.7} parent=0 // loop_header
    %s10 = sphi 0, %s14
    %p11 = scmp.ge.s32.totalorder %s10, 6
    %s17 = sphi 0, %s29
    %s18 = sphi 0, %s25
    %s19 = sphi 0, %s17
    %s20 = sphi 0, %s18
    %s21 = sphi 0, %s19
    %s22 = sphi 0, %s20
    %s34 = sphi 0, %s36
    %s37 = sphi 0, %s34
    %s38 = sphi 0, %s37
    %s54 = sphi 0, %s38
    %s62 = sphi 0, %s64
    %s65 = sphi 0, %s62
    %s66 = sphi 0, %s65
    %s82 = sphi 0, %s66
    %s86 = sphi 0, %s86
    %s88 = sphi 0, %s86
    %s89 = sphi 0, %s88
    %s103 = sphi 0, %s89
    %s107 = sphi 0, %s107
    %s109 = sphi 0, %s107
    %s110 = sphi 0, %s109
    %s124 = sphi 0, %s110
    %s132 = sphi 0, %s134
    %s135 = sphi 0, %s132
    %s136 = sphi 0, %s135
    %s152 = sphi 0, %s136
  $region4: #{depth_pro_forward.7} parent=0 // loop_header_branch
    %13 = sbr.rel (%p11) target = $region8
  $region5: #{depth_pro_forward.7} parent=0 // loop_body
    %s15 = ssub.s32 %s10, 1
    %s16 = ssub.s32 %s10, 2
    %s23 = sadd.s32 1, %s18
    %p24 = scmp.ge.s32.totalorder %s23, 2
    %s25 = scalar_select %p24, 0, %s23
    %s26 = sadd.s32 1, %s17
    %s27 = scalar_select %p24, %s26, %s17
    %p28 = scmp.ge.s32.totalorder %s27, 2
    %s29 = scalar_select %p28, 0, %s27
    %s30 = ssub.s32 %s17, %s29
    %s31 = ssub.s32 %s18, %s25
    %s32 = sor.u32 %s30, %s31
    %p33 = scmp.eq.s32.totalorder %s32, 0
    %s35 = sadd.s32 %s34, 1
    %s36 = scalar_select %p33, %s34, %s35
    %p39 = pneg %p33
    %p40 = scmp.eq.s32.totalorder %s10, 3
    %p41 = por %p39, %p40
    %p42 = scmp.ne.s32.totalorder %s34, %s37
    %p43 = scmp.eq.s32.totalorder %s10, 0
    %p44 = por %p42, %p43
    %p45 = scmp.ne.s32.totalorder %s34, %s37
    %p46 = scmp.eq.s32.totalorder %s15, 3
    %p47 = por %p45, %p46
    %p48 = scmp.ne.s32.totalorder %s37, %s38
    %p49 = scmp.eq.s32.totalorder %s15, 0
    %p50 = por %p48, %p49
    %p51 = scmp.ne.s32.totalorder %s37, %s38
    %p52 = scmp.eq.s32.totalorder %s16, 3
    %p53 = por %p51, %p52
    %p55 = scmp.ne.s32.totalorder %s38, %s54
    %p56 = scmp.eq.s32.totalorder %s16, 0
    %p57 = por %p55, %p56
    %s58 = ssub.s32 %s17, %s29
    %s59 = ssub.s32 %s18, %s25
    %s60 = sor.u32 %s58, %s59
    %p61 = scmp.eq.s32.totalorder %s60, 0
    %s63 = sadd.s32 %s62, 1
    %s64 = scalar_select %p61, %s62, %s63
    %p67 = pneg %p61
    %p68 = scmp.eq.s32.totalorder %s10, 3
    %p69 = por %p67, %p68
    %p70 = scmp.ne.s32.totalorder %s62, %s65
    %p71 = scmp.eq.s32.totalorder %s10, 0
    %p72 = por %p70, %p71
    %p73 = scmp.ne.s32.totalorder %s62, %s65
    %p74 = scmp.eq.s32.totalorder %s15, 3
    %p75 = por %p73, %p74
    %p76 = scmp.ne.s32.totalorder %s65, %s66
    %p77 = scmp.eq.s32.totalorder %s15, 0
    %p78 = por %p76, %p77
    %p79 = scmp.ne.s32.totalorder %s65, %s66
    %p80 = scmp.eq.s32.totalorder %s16, 3
    %p81 = por %p79, %p80
    %p83 = scmp.ne.s32.totalorder %s66, %s82
    %p84 = scmp.eq.s32.totalorder %s16, 0
    %p85 = por %p83, %p84
    %s87 = sadd.s32 %s86, 1
    %p90 = scmp.eq.s32.totalorder %s10, 3
    %p91 = scmp.ne.s32.totalorder %s86, %s88
    %p92 = scmp.eq.s32.totalorder %s10, 0
    %p93 = por %p91, %p92
    %p94 = scmp.ne.s32.totalorder %s86, %s88
    %p95 = scmp.eq.s32.totalorder %s15, 3
    %p96 = por %p94, %p95
    %p97 = scmp.ne.s32.totalorder %s88, %s89
    %p98 = scmp.eq.s32.totalorder %s15, 0
    %p99 = por %p97, %p98
    %p100 = scmp.ne.s32.totalorder %s88, %s89
    %p101 = scmp.eq.s32.totalorder %s16, 3
    %p102 = por %p100, %p101
    %p104 = scmp.ne.s32.totalorder %s89, %s103
    %p105 = scmp.eq.s32.totalorder %s16, 0
    %p106 = por %p104, %p105
    %s108 = sadd.s32 %s107, 1
    %p111 = scmp.eq.s32.totalorder %s10, 3
    %p112 = scmp.ne.s32.totalorder %s107, %s109
    %p113 = scmp.eq.s32.totalorder %s10, 0
    %p114 = por %p112, %p113
    %p115 = scmp.ne.s32.totalorder %s107, %s109
    %p116 = scmp.eq.s32.totalorder %s15, 3
    %p117 = por %p115, %p116
    %p118 = scmp.ne.s32.totalorder %s109, %s110
    %p119 = scmp.eq.s32.totalorder %s15, 0
    %p120 = por %p118, %p119
    %p121 = scmp.ne.s32.totalorder %s109, %s110
    %p122 = scmp.eq.s32.totalorder %s16, 3
    %p123 = por %p121, %p122
    %p125 = scmp.ne.s32.totalorder %s110, %s124
    %p126 = scmp.eq.s32.totalorder %s16, 0
    %p127 = por %p125, %p126
    %s128 = ssub.s32 %s17, %s29
    %s129 = ssub.s32 %s18, %s25
    %s130 = sor.u32 %s128, %s129
    %p131 = scmp.eq.s32.totalorder %s130, 0
    %s133 = sadd.s32 %s132, 1
    %s134 = scalar_select %p131, %s132, %s133
    %p137 = pneg %p131
    %p138 = scmp.eq.s32.totalorder %s10, 3
    %p139 = por %p137, %p138
    %p140 = scmp.ne.s32.totalorder %s132, %s135
    %p141 = scmp.eq.s32.totalorder %s10, 0
    %p142 = por %p140, %p141
    %p143 = scmp.ne.s32.totalorder %s132, %s135
    %p144 = scmp.eq.s32.totalorder %s15, 3
    %p145 = por %p143, %p144
    %p146 = scmp.ne.s32.totalorder %s135, %s136
    %p147 = scmp.eq.s32.totalorder %s15, 0
    %p148 = por %p146, %p147
    %p149 = scmp.ne.s32.totalorder %s135, %s136
    %p150 = scmp.eq.s32.totalorder %s16, 3
    %p151 = por %p149, %p150
    %p153 = scmp.ne.s32.totalorder %s136, %s152
    %p154 = scmp.eq.s32.totalorder %s16, 0
    %p155 = por %p153, %p154
    %p156 = scmp.le.s32.totalorder 1, %s10
    %p157 = scmp.lt.s32.totalorder %s10, 5
    %p158 = pnand %p156, %p157
    %p159 = pneg %p158
    // Predicated region
    $region9: #{depth_pro_forward.7} parent=5 // pred_check
      _
    $region10: #{depth_pro_forward.7} parent=5 // pred_check_branch
      %161 = sbr.rel (%p158) target = $region12
    $region11: #{depth_pro_forward.7} parent=5 // pred_region
      %s162 = ssub.s32 %s10, 1
      // Predicated region
      $region13: #{depth_pro_forward.7} parent=11 // pred_check
        %p163 = pneg %p99
      $region14: #{depth_pro_forward.7} parent=11 // pred_check_branch
        %165 = sbr.rel (%p163) target = $region16
      $region15: #{depth_pro_forward.7} parent=11 // pred_region
        _
      $region16: #{depth_pro_forward.7} parent=11 // pred_fallthru
        _
      // Predicated region
      $region17: #{depth_pro_forward.7} parent=11 // pred_check
        %p166 = pneg %p120
      $region18: #{depth_pro_forward.7} parent=11 // pred_check_branch
        %168 = sbr.rel (%p166) target = $region20
      $region19: #{depth_pro_forward.7} parent=11 // pred_region
        _
      $region20: #{depth_pro_forward.7} parent=11 // pred_fallthru
        _
    $region12: #{depth_pro_forward.7} parent=5 // pred_fallthru
      _
    %p169 = scmp.lt.s32.totalorder %s10, 4
    // Predicated region
    $region21: #{depth_pro_forward.7} parent=5 // pred_check
      %p170 = pneg %p169
    $region22: #{depth_pro_forward.7} parent=5 // pred_check_branch
      %172 = sbr.rel (%p170) target = $region24
    $region23: #{depth_pro_forward.7} parent=5 // pred_region
      // Predicated region
      $region25: #{depth_pro_forward.7} parent=23 // pred_check
        %p173 = pneg %p44
      $region26: #{depth_pro_forward.7} parent=23 // pred_check_branch
        %175 = sbr.rel (%p173) target = $region28
      $region27: #{depth_pro_forward.7} parent=23 // pred_region
        %s176 = smul.u32 4, %s18
        %p177 = scmp.lt.s32.totalorder %s17, 1
        %s178 = scalar_select %p177, %s17, 1
        %p179 = scmp.lt.s32.totalorder %s176, 7
        %s180 = scalar_select %p179, %s176, 7
        %s181 = smul.addr %s178, 8
        %s182 = sadd.s32 %s180, %s181
        %s183 = smul.addr %s182, 4
        %s184 = scalar_lea.vmem %s0, %s183
        %s185 = smul.u32 4, %s18
      $region28: #{depth_pro_forward.7} parent=23 // pred_fallthru
        _
      // Predicated region
      $region29: #{depth_pro_forward.7} parent=23 // pred_check
        %p186 = pneg %p72
      $region30: #{depth_pro_forward.7} parent=23 // pred_check_branch
        %188 = sbr.rel (%p186) target = $region32
      $region31: #{depth_pro_forward.7} parent=23 // pred_region
        %p189 = scmp.lt.s32.totalorder %s17, 1
        %s190 = scalar_select %p189, %s17, 1
        %p191 = scmp.lt.s32.totalorder %s18, 1
        %s192 = scalar_select %p191, %s18, 1
        %s193 = smul.addr %s192, 2
        %s194 = smul.addr %s190, 4
        %s195 = sadd.s32 %s193, %s194
        %s196 = smul.addr %s195, 4
        %s197 = scalar_lea.vmem %s1, %s196
      $region32: #{depth_pro_forward.7} parent=23 // pred_fallthru
        _
    $region24: #{depth_pro_forward.7} parent=5 // pred_fallthru
      _
    %p198 = scmp.le.s32.totalorder 1, %s10
    %p199 = scmp.lt.s32.totalorder %s10, 5
    %p200 = pnand %p198, %p199
    %p201 = pneg %p200
    // Predicated region
    $region33: #{depth_pro_forward.7} parent=5 // pred_check
      _
    $region34: #{depth_pro_forward.7} parent=5 // pred_check_branch
      %203 = sbr.rel (%p200) target = $region36
    $region35: #{depth_pro_forward.7} parent=5 // pred_region
      %s204 = ssub.s32 %s10, 1
      %s205 = smul.u32 4, %s20
      %p206 = scmp.lt.s32.totalorder %s19, 1
      %s207 = scalar_select %p206, %s19, 1
      %p208 = scmp.lt.s32.totalorder %s205, 7
      %s209 = scalar_select %p208, %s205, 7
      %s210 = smul.addr %s207, 8
      %s211 = sadd.s32 %s209, %s210
      %s212 = smul.addr %s211, 4
      %s213 = scalar_lea.vmem %s0, %s212
      %p214 = pneg %p50
      %p215 = pneg %p47
      %p216 = scmp.lt.s32.totalorder %s19, 1
      %s217 = scalar_select %p216, %s19, 1
      %p218 = scmp.lt.s32.totalorder %s20, 1
      %s219 = scalar_select %p218, %s20, 1
      %s220 = smul.addr %s219, 2
      %s221 = smul.addr %s217, 4
      %s222 = sadd.s32 %s220, %s221
      %s223 = smul.addr %s222, 4
      %s224 = scalar_lea.vmem %s1, %s223
      %p225 = pneg %p78
      %p226 = pneg %p75
      %p227 = pneg %p99
      %p228 = pneg %p96
      %p229 = pneg %p120
      %p230 = pneg %p117
      %p231 = pneg %p148
      %p232 = pneg %p145
      %s233 = smul.u32 4, %s20
      %p234 = scmp.lt.s32.totalorder %s19, 1
      %s235 = scalar_select %p234, %s19, 1
      %p236 = scmp.lt.s32.totalorder %s233, 7
      %s237 = scalar_select %p236, %s233, 7
      %s238 = smul.addr %s235, 8
      %s239 = sadd.s32 %s237, %s238
      %s240 = smul.addr %s239, 4
      %s241 = scalar_lea.vmem %s4, %s240
      %s242 = smul.u32 4, %s20
      %p243 = scmp.lt.s32.totalorder %s19, 1
      %s244 = scalar_select %p243, %s19, 1
      %p245 = scmp.lt.s32.totalorder %s242, 7
      %s246 = scalar_select %p245, %s242, 7
      %s247 = smul.addr %s244, 8
      %s248 = sadd.s32 %s246, %s247
      %s249 = smul.addr %s248, 4
      %s250 = scalar_lea.vmem %s0, %s249
      %s251 = smul.u32 4, %s20
      %p252 = scmp.lt.s32.totalorder %s19, 1
      %s253 = scalar_select %p252, %s19, 1
      %p254 = scmp.lt.s32.totalorder %s20, 1
      %s255 = scalar_select %p254, %s20, 1
      %s256 = smul.addr %s255, 2
      %s257 = smul.addr %s253, 4
      %s258 = sadd.s32 %s256, %s257
      %s259 = smul.addr %s258, 4
      %s260 = scalar_lea.vmem %s1, %s259
      %s261 = smul.u32 4, %s20
      %p262 = scmp.lt.s32.totalorder %s19, 1
      %s263 = scalar_select %p262, %s19, 1
      %p264 = scmp.lt.s32.totalorder %s261, 7
      %s265 = scalar_select %p264, %s261, 7
      %s266 = smul.addr %s263, 8
      %s267 = sadd.s32 %s265, %s266
      %s268 = smul.addr %s267, 4
      %s269 = scalar_lea.vmem %s4, %s268
      %s270 = smul.u32 4, %s20
      %v272 = vld [vmem:[%s260] sm:$0xf]
      %vm273 = vcmask 257024
      %274 = vst.msk [vmem:[#allocation2] sm:$0xf] %vm273, %v272
      %v275 = vld [vmem:[%s250] sm:$0xf]
      %v276 = vld [vmem:[%s250 + $0x4] sm:$0xf]
      %v277 = vld [vmem:[%s250 + $0x8] sm:$0xf]
      %v278 = vld [vmem:[%s250 + $0xc] sm:$0xf]
      %s279 = scalar_lea.vmem [#allocation2], 4
      %280 = vst.msk [vmem:[%s279] sm:$0xf] %vm273, %v275
      %281 = vst.msk [vmem:[%s279 + $0x4] sm:$0xf] %vm273, %v276
      %282 = vst.msk [vmem:[%s279 + $0x8] sm:$0xf] %vm273, %v277
      %283 = vst.msk [vmem:[%s279 + $0xc] sm:$0xf] %vm273, %v278
      %s284 = scalar_lea.vmem %s260, 4
      %v285 = vld [vmem:[%s284] sm:$0xf]
      %s286 = scalar_lea.vmem [#allocation2], 20
      %287 = vst.msk [vmem:[%s286] sm:$0xf] %vm273, %v285
      %v288 = vld [vmem:[#allocation2] sm:$0xf]
      %v289 = vld [vmem:[#allocation2 + $0x4] sm:$0xf]
      %v290 = vld [vmem:[#allocation2 + $0x8] sm:$0xf]
      %v291 = vld [vmem:[#allocation2 + $0xc] sm:$0xf]
      %v292 = vld [vmem:[%s2] sm:$0xf]
      %v293 = vld [vmem:[%s2 + $0x4] sm:$0xf]
      %v294 = vld [vmem:[%s2 + $0x8] sm:$0xf]
      %v295 = vld [vmem:[%s2 + $0xc] sm:$0xf]
      %s296 = scalar_lea.vmem %s2, 16
      %v297 = vld [vmem:[%s296] sm:$0xf]
      %v298 = vld [vmem:[%s296 + $0x4] sm:$0xf]
      %v299 = vld [vmem:[%s296 + $0x8] sm:$0xf]
      %v300 = vld [vmem:[%s296 + $0xc] sm:$0xf]
      %s301 = scalar_lea.vmem %s2, 32
      %v302 = vld [vmem:[%s301] sm:$0xf]
      %v303 = vld [vmem:[%s301 + $0x4] sm:$0xf]
      %v304 = vld [vmem:[%s301 + $0x8] sm:$0xf]
      %v305 = vld [vmem:[%s301 + $0xc] sm:$0xf]
      %v306 = vld [vmem:[%s279] sm:$0xf]
      %v307 = vld [vmem:[%s279 + $0x4] sm:$0xf]
      %v308 = vld [vmem:[%s279 + $0x8] sm:$0xf]
      %v309 = vld [vmem:[%s279 + $0xc] sm:$0xf]
      %s310 = scalar_lea.vmem %s2, 48
      %v311 = vld [vmem:[%s310] sm:$0xf]
      %v312 = vld [vmem:[%s310 + $0x4] sm:$0xf]
      %v313 = vld [vmem:[%s310 + $0x8] sm:$0xf]
      %v314 = vld [vmem:[%s310 + $0xc] sm:$0xf]
      %v319 = vunpack.c.l.b16 %v306
      %v320 = vunpack.c.l.b16 %v307
      %v321 = vunpack.c.l.b16 %v308
      %v322 = vunpack.c.l.b16 %v309
      %v323 = vpack.c.b16 %v320, %v319
      %v324 = vpack.c.b16 %v322, %v321
      %v329 = vunpack.c.l.b16 %v311
      %v330 = vunpack.c.l.b16 %v312
      %v331 = vunpack.c.l.b16 %v313
      %v332 = vunpack.c.l.b16 %v314
      %v333 = vpack.c.b16 %v330, %v329
      %v334 = vpack.c.b16 %v332, %v331
      %vm337 = vcmask 261120
      %v339 = vsel %vm337, %v323, 0
      %v342 = vsel %vm337, %v324, 0
      %344 = vmatprep.subr.bf16.mxu0 0
      %345 = vmatpush1.bf16.msra.mxu0 0
      %346 = vmatprep.subr.bf16.mxu0 0
      %347 = vmatpush1.bf16.msra.mxu0 0
      %348 = vmatprep.subr.bf16.mxu0 0
      %349 = vmatpush1.bf16.msra.mxu0 0
      %350 = vmatprep.subr.bf16.mxu0 0
      %351 = vmatpush1.bf16.msra.mxu0 0
      %352 = vmatprep.subr.bf16.mxu0 0
      %353 = vmatpush1.bf16.msra.mxu0 0
      %354 = vmatprep.subr.bf16.mxu0 0
      %355 = vmatpush1.bf16.msra.mxu0 0
      %356 = vmatprep.subr.bf16.mxu0 0
      %357 = vmatpush1.bf16.msra.mxu0 %v334
      %358 = vmatprep.subr.bf16.mxu0 0
      %359 = vmatpush1.bf16.msra.mxu0 %v333
      %360 = vmatprep.subr.bf16.mxu0 0
      %361 = vmatpush2.bf16.msra.mxu0 0
      %362 = vmatprep.subr.bf16.mxu0 0
      %363 = vmatpush2.bf16.msra.mxu0 0
      %364 = vmatprep.subr.bf16.mxu0 0
      %365 = vmatpush2.bf16.msra.mxu0 0
      %366 = vmatprep.subr.bf16.mxu0 0
      %367 = vmatpush2.bf16.msra.mxu0 0
      %368 = vmatprep.subr.bf16.mxu0 0
      %369 = vmatpush2.bf16.msra.mxu0 0
      %370 = vmatprep.subr.bf16.mxu0 0
      %371 = vmatpush2.bf16.msra.mxu0 0
      %372 = vmatprep.subr.bf16.mxu0 0
      %373 = vmatpush2.bf16.msra.mxu0 0
      %374 = vmatprep.subr.bf16.mxu0 0
      %375 = vmatpush2.bf16.msra.mxu0 0
      %376 = vmatprep.mubr.bf16.mxu0 0
      %377 = vmatmul.mubr.bf16.gmra.mxu0 %v339
      %v378 = vpop.f32.mrf.mxu0
      %v379 = vadd.f32 0.0, %v378
      %v380 = vpop.f32.mrf.mxu0
      %v381 = vpop.f32.mrf.mxu0
      %v382 = vadd.f32 0.0, %v381
      %v383 = vpop.f32.mrf.mxu0
      %384 = vmatprep.mubr.bf16.mxu0 0
      %385 = vmatmul.mubr.bf16.gmra.mxu0 %v342
      %v386 = vpop.f32.mrf.mxu0
      %v387 = vadd.f32 0.0, %v386
      %v388 = vpop.f32.mrf.mxu0
      %v389 = vpop.f32.mrf.mxu0
      %v390 = vadd.f32 0.0, %v389
      %v391 = vpop.f32.mrf.mxu0
      %392 = vdwg.mxu0
      %v397 = vunpack.c.l.b16 %v288
      %v398 = vunpack.c.l.b16 %v289
      %v399 = vunpack.c.l.b16 %v290
      %v400 = vunpack.c.l.b16 %v291
      %v401 = vpack.c.b16 %v398, %v397
      %v402 = vpack.c.b16 %v400, %v399
      %v407 = vunpack.c.l.b16 %v292
      %v408 = vunpack.c.l.b16 %v293
      %v409 = vunpack.c.l.b16 %v294
      %v410 = vunpack.c.l.b16 %v295
      %v411 = vpack.c.b16 %v408, %v407
      %v412 = vpack.c.b16 %v410, %v409
      %v416 = vsel %vm337, %v401, 0
      %v419 = vsel %vm337, %v402, 0
      %421 = vmatprep.subr.bf16.mxu0 0
      %422 = vmatpush1.bf16.msra.mxu0 0
      %423 = vmatprep.subr.bf16.mxu0 0
      %424 = vmatpush1.bf16.msra.mxu0 0
      %425 = vmatprep.subr.bf16.mxu0 0
      %426 = vmatpush1.bf16.msra.mxu0 0
      %427 = vmatprep.subr.bf16.mxu0 0
      %428 = vmatpush1.bf16.msra.mxu0 0
      %429 = vmatprep.subr.bf16.mxu0 0
      %430 = vmatpush1.bf16.msra.mxu0 0
      %431 = vmatprep.subr.bf16.mxu0 0
      %432 = vmatpush1.bf16.msra.mxu0 0
      %433 = vmatprep.subr.bf16.mxu0 0
      %434 = vmatpush1.bf16.msra.mxu0 %v412
      %435 = vmatprep.subr.bf16.mxu0 0
      %436 = vmatpush1.bf16.msra.mxu0 %v411
      %437 = vmatprep.subr.bf16.mxu0 0
      %438 = vmatpush2.bf16.msra.mxu0 0
      %439 = vmatprep.subr.bf16.mxu0 0
      %440 = vmatpush2.bf16.msra.mxu0 0
      %441 = vmatprep.subr.bf16.mxu0 0
      %442 = vmatpush2.bf16.msra.mxu0 0
      %443 = vmatprep.subr.bf16.mxu0 0
      %444 = vmatpush2.bf16.msra.mxu0 0
      %445 = vmatprep.subr.bf16.mxu0 0
      %446 = vmatpush2.bf16.msra.mxu0 0
      %447 = vmatprep.subr.bf16.mxu0 0
      %448 = vmatpush2.bf16.msra.mxu0 0
      %449 = vmatprep.subr.bf16.mxu0 0
      %450 = vmatpush2.bf16.msra.mxu0 0
      %451 = vmatprep.subr.bf16.mxu0 0
      %452 = vmatpush2.bf16.msra.mxu0 0
      %453 = vmatprep.mubr.bf16.mxu0 0
      %454 = vmatmul.mubr.bf16.gmra.mxu0 %v416
      %v455 = vpop.f32.mrf.mxu0
      %v456 = vadd.f32 %v379, %v455
      %v457 = vpop.f32.mrf.mxu0
      %v458 = vpop.f32.mrf.mxu0
      %v459 = vadd.f32 %v382, %v458
      %v460 = vpop.f32.mrf.mxu0
      %461 = vmatprep.mubr.bf16.mxu0 0
      %462 = vmatmul.mubr.bf16.gmra.mxu0 %v419
      %v463 = vpop.f32.mrf.mxu0
      %v464 = vadd.f32 %v387, %v463
      %v465 = vpop.f32.mrf.mxu0
      %v466 = vpop.f32.mrf.mxu0
      %v467 = vadd.f32 %v390, %v466
      %v468 = vpop.f32.mrf.mxu0
      %469 = vdwg.mxu0
      %s470 = scalar_lea.vmem %s2, 64
      %v471 = vld [vmem:[%s470] sm:$0xf]
      %v472 = vld [vmem:[%s470 + $0x4] sm:$0xf]
      %v473 = vld [vmem:[%s470 + $0x8] sm:$0xf]
      %v474 = vld [vmem:[%s470 + $0xc] sm:$0xf]
      %v479 = vunpack.c.l.b16 %v471
      %v480 = vunpack.c.l.b16 %v472
      %v481 = vunpack.c.l.b16 %v473
      %v482 = vunpack.c.l.b16 %v474
      %v483 = vpack.c.b16 %v480, %v479
      %v484 = vpack.c.b16 %v482, %v481
      %487 = vmatprep.subr.bf16.mxu0 0
      %488 = vmatpush1.bf16.msra.mxu0 0
      %489 = vmatprep.subr.bf16.mxu0 0
      %490 = vmatpush1.bf16.msra.mxu0 0
      %491 = vmatprep.subr.bf16.mxu0 0
      %492 = vmatpush1.bf16.msra.mxu0 0
      %493 = vmatprep.subr.bf16.mxu0 0
      %494 = vmatpush1.bf16.msra.mxu0 0
      %495 = vmatprep.subr.bf16.mxu0 0
      %496 = vmatpush1.bf16.msra.mxu0 0
      %497 = vmatprep.subr.bf16.mxu0 0
      %498 = vmatpush1.bf16.msra.mxu0 0
      %499 = vmatprep.subr.bf16.mxu0 0
      %500 = vmatpush1.bf16.msra.mxu0 %v484
      %501 = vmatprep.subr.bf16.mxu0 0
      %502 = vmatpush1.bf16.msra.mxu0 %v483
      %503 = vmatprep.subr.bf16.mxu0 0
      %504 = vmatpush2.bf16.msra.mxu0 0
      %505 = vmatprep.subr.bf16.mxu0 0
      %506 = vmatpush2.bf16.msra.mxu0 0
      %507 = vmatprep.subr.bf16.mxu0 0
      %508 = vmatpush2.bf16.msra.mxu0 0
      %509 = vmatprep.subr.bf16.mxu0 0
      %510 = vmatpush2.bf16.msra.mxu0 0
      %511 = vmatprep.subr.bf16.mxu0 0
      %512 = vmatpush2.bf16.msra.mxu0 0
      %513 = vmatprep.subr.bf16.mxu0 0
      %514 = vmatpush2.bf16.msra.mxu0 0
      %515 = vmatprep.subr.bf16.mxu0 0
      %516 = vmatpush2.bf16.msra.mxu0 0
      %517 = vmatprep.subr.bf16.mxu0 0
      %518 = vmatpush2.bf16.msra.mxu0 0
      %519 = vmatprep.mubr.bf16.mxu0 0
      %520 = vmatmul.mubr.bf16.gmra.mxu0 %v339
      %v521 = vpop.f32.mrf.mxu0
      %v522 = vadd.f32 0.0, %v521
      %v523 = vpop.f32.mrf.mxu0
      %v524 = vpop.f32.mrf.mxu0
      %v525 = vadd.f32 0.0, %v524
      %v526 = vpop.f32.mrf.mxu0
      %527 = vmatprep.mubr.bf16.mxu0 0
      %528 = vmatmul.mubr.bf16.gmra.mxu0 %v342
      %v529 = vpop.f32.mrf.mxu0
      %v530 = vadd.f32 0.0, %v529
      %v531 = vpop.f32.mrf.mxu0
      %v532 = vpop.f32.mrf.mxu0
      %v533 = vadd.f32 0.0, %v532
      %v534 = vpop.f32.mrf.mxu0
      %535 = vdwg.mxu0
      %v540 = vunpack.c.l.b16 %v297
      %v541 = vunpack.c.l.b16 %v298
      %v542 = vunpack.c.l.b16 %v299
      %v543 = vunpack.c.l.b16 %v300
      %v544 = vpack.c.b16 %v541, %v540
      %v545 = vpack.c.b16 %v543, %v542
      %548 = vmatprep.subr.bf16.mxu0 0
      %549 = vmatpush1.bf16.msra.mxu0 0
      %550 = vmatprep.subr.bf16.mxu0 0
      %551 = vmatpush1.bf16.msra.mxu0 0
      %552 = vmatprep.subr.bf16.mxu0 0
      %553 = vmatpush1.bf16.msra.mxu0 0
      %554 = vmatprep.subr.bf16.mxu0 0
      %555 = vmatpush1.bf16.msra.mxu0 0
      %556 = vmatprep.subr.bf16.mxu0 0
      %557 = vmatpush1.bf16.msra.mxu0 0
      %558 = vmatprep.subr.bf16.mxu0 0
      %559 = vmatpush1.bf16.msra.mxu0 0
      %560 = vmatprep.subr.bf16.mxu0 0
      %561 = vmatpush1.bf16.msra.mxu0 %v545
      %562 = vmatprep.subr.bf16.mxu0 0
      %563 = vmatpush1.bf16.msra.mxu0 %v544
      %564 = vmatprep.subr.bf16.mxu0 0
      %565 = vmatpush2.bf16.msra.mxu0 0
      %566 = vmatprep.subr.bf16.mxu0 0
      %567 = vmatpush2.bf16.msra.mxu0 0
      %568 = vmatprep.subr.bf16.mxu0 0
      %569 = vmatpush2.bf16.msra.mxu0 0
      %570 = vmatprep.subr.bf16.mxu0 0
      %571 = vmatpush2.bf16.msra.mxu0 0
      %572 = vmatprep.subr.bf16.mxu0 0
      %573 = vmatpush2.bf16.msra.mxu0 0
      %574 = vmatprep.subr.bf16.mxu0 0
      %575 = vmatpush2.bf16.msra.mxu0 0
      %576 = vmatprep.subr.bf16.mxu0 0
      %577 = vmatpush2.bf16.msra.mxu0 0
      %578 = vmatprep.subr.bf16.mxu0 0
      %579 = vmatpush2.bf16.msra.mxu0 0
      %580 = vmatprep.mubr.bf16.mxu0 0
      %581 = vmatmul.mubr.bf16.gmra.mxu0 %v416
      %v582 = vpop.f32.mrf.mxu0
      %v583 = vadd.f32 %v522, %v582
      %v584 = vpop.f32.mrf.mxu0
      %v585 = vpop.f32.mrf.mxu0
      %v586 = vadd.f32 %v525, %v585
      %v587 = vpop.f32.mrf.mxu0
      %588 = vmatprep.mubr.bf16.mxu0 0
      %589 = vmatmul.mubr.bf16.gmra.mxu0 %v419
      %v590 = vpop.f32.mrf.mxu0
      %v591 = vadd.f32 %v530, %v590
      %v592 = vpop.f32.mrf.mxu0
      %v593 = vpop.f32.mrf.mxu0
      %v594 = vadd.f32 %v533, %v593
      %v595 = vpop.f32.mrf.mxu0
      %596 = vdwg.mxu0
      %s597 = scalar_lea.vmem %s2, 80
      %v598 = vld [vmem:[%s597] sm:$0xf]
      %v599 = vld [vmem:[%s597 + $0x4] sm:$0xf]
      %v600 = vld [vmem:[%s597 + $0x8] sm:$0xf]
      %v601 = vld [vmem:[%s597 + $0xc] sm:$0xf]
      %v606 = vunpack.c.l.b16 %v598
      %v607 = vunpack.c.l.b16 %v599
      %v608 = vunpack.c.l.b16 %v600
      %v609 = vunpack.c.l.b16 %v601
      %v610 = vpack.c.b16 %v607, %v606
      %v611 = vpack.c.b16 %v609, %v608
      %614 = vmatprep.subr.bf16.mxu0 0
      %615 = vmatpush1.bf16.msra.mxu0 0
      %616 = vmatprep.subr.bf16.mxu0 0
      %617 = vmatpush1.bf16.msra.mxu0 0
      %618 = vmatprep.subr.bf16.mxu0 0
      %619 = vmatpush1.bf16.msra.mxu0 0
      %620 = vmatprep.subr.bf16.mxu0 0
      %621 = vmatpush1.bf16.msra.mxu0 0
      %622 = vmatprep.subr.bf16.mxu0 0
      %623 = vmatpush1.bf16.msra.mxu0 0
      %624 = vmatprep.subr.bf16.mxu0 0
      %625 = vmatpush1.bf16.msra.mxu0 0
      %626 = vmatprep.subr.bf16.mxu0 0
      %627 = vmatpush1.bf16.msra.mxu0 %v611
      %628 = vmatprep.subr.bf16.mxu0 0
      %629 = vmatpush1.bf16.msra.mxu0 %v610
      %630 = vmatprep.subr.bf16.mxu0 0
      %631 = vmatpush2.bf16.msra.mxu0 0
      %632 = vmatprep.subr.bf16.mxu0 0
      %633 = vmatpush2.bf16.msra.mxu0 0
      %634 = vmatprep.subr.bf16.mxu0 0
      %635 = vmatpush2.bf16.msra.mxu0 0
      %636 = vmatprep.subr.bf16.mxu0 0
      %637 = vmatpush2.bf16.msra.mxu0 0
      %638 = vmatprep.subr.bf16.mxu0 0
      %639 = vmatpush2.bf16.msra.mxu0 0
      %640 = vmatprep.subr.bf16.mxu0 0
      %641 = vmatpush2.bf16.msra.mxu0 0
      %642 = vmatprep.subr.bf16.mxu0 0
      %643 = vmatpush2.bf16.msra.mxu0 0
      %644 = vmatprep.subr.bf16.mxu0 0
      %645 = vmatpush2.bf16.msra.mxu0 0
      %646 = vmatprep.mubr.bf16.mxu0 0
      %647 = vmatmul.mubr.bf16.gmra.mxu0 %v339
      %v648 = vpop.f32.mrf.mxu0
      %v649 = vadd.f32 0.0, %v648
      %v650 = vpop.f32.mrf.mxu0
      %v651 = vpop.f32.mrf.mxu0
      %v652 = vadd.f32 0.0, %v651
      %v653 = vpop.f32.mrf.mxu0
      %654 = vmatprep.mubr.bf16.mxu0 0
      %655 = vmatmul.mubr.bf16.gmra.mxu0 %v342
      %v656 = vpop.f32.mrf.mxu0
      %v657 = vadd.f32 0.0, %v656
      %v658 = vpop.f32.mrf.mxu0
      %v659 = vpop.f32.mrf.mxu0
      %v660 = vadd.f32 0.0, %v659
      %v661 = vpop.f32.mrf.mxu0
      %662 = vdwg.mxu0
      %v667 = vunpack.c.l.b16 %v302
      %v668 = vunpack.c.l.b16 %v303
      %v669 = vunpack.c.l.b16 %v304
      %v670 = vunpack.c.l.b16 %v305
      %v671 = vpack.c.b16 %v668, %v667
      %v672 = vpack.c.b16 %v670, %v669
      %675 = vmatprep.subr.bf16.mxu0 0
      %676 = vmatpush1.bf16.msra.mxu0 0
      %677 = vmatprep.subr.bf16.mxu0 0
      %678 = vmatpush1.bf16.msra.mxu0 0
      %679 = vmatprep.subr.bf16.mxu0 0
      %680 = vmatpush1.bf16.msra.mxu0 0
      %681 = vmatprep.subr.bf16.mxu0 0
      %682 = vmatpush1.bf16.msra.mxu0 0
      %683 = vmatprep.subr.bf16.mxu0 0
      %684 = vmatpush1.bf16.msra.mxu0 0
      %685 = vmatprep.subr.bf16.mxu0 0
      %686 = vmatpush1.bf16.msra.mxu0 0
      %687 = vmatprep.subr.bf16.mxu0 0
      %688 = vmatpush1.bf16.msra.mxu0 %v672
      %689 = vmatprep.subr.bf16.mxu0 0
      %690 = vmatpush1.bf16.msra.mxu0 %v671
      %691 = vmatprep.subr.bf16.mxu0 0
      %692 = vmatpush2.bf16.msra.mxu0 0
      %693 = vmatprep.subr.bf16.mxu0 0
      %694 = vmatpush2.bf16.msra.mxu0 0
      %695 = vmatprep.subr.bf16.mxu0 0
      %696 = vmatpush2.bf16.msra.mxu0 0
      %697 = vmatprep.subr.bf16.mxu0 0
      %698 = vmatpush2.bf16.msra.mxu0 0
      %699 = vmatprep.subr.bf16.mxu0 0
      %700 = vmatpush2.bf16.msra.mxu0 0
      %701 = vmatprep.subr.bf16.mxu0 0
      %702 = vmatpush2.bf16.msra.mxu0 0
      %703 = vmatprep.subr.bf16.mxu0 0
      %704 = vmatpush2.bf16.msra.mxu0 0
      %705 = vmatprep.subr.bf16.mxu0 0
      %706 = vmatpush2.bf16.msra.mxu0 0
      %707 = vmatprep.mubr.bf16.mxu0 0
      %708 = vmatmul.mubr.bf16.gmra.mxu0 %v416
      %v709 = vpop.f32.mrf.mxu0
      %v710 = vadd.f32 %v649, %v709
      %v711 = vpop.f32.mrf.mxu0
      %v712 = vpop.f32.mrf.mxu0
      %v713 = vadd.f32 %v652, %v712
      %v714 = vpop.f32.mrf.mxu0
      %715 = vmatprep.mubr.bf16.mxu0 0
      %716 = vmatmul.mubr.bf16.gmra.mxu0 %v419
      %v717 = vpop.f32.mrf.mxu0
      %v718 = vadd.f32 %v657, %v717
      %v719 = vpop.f32.mrf.mxu0
      %v720 = vpop.f32.mrf.mxu0
      %v721 = vadd.f32 %v660, %v720
      %v722 = vpop.f32.mrf.mxu0
      %723 = vdwg.mxu0
      %s724 = scalar_lea.vmem [#allocation2], 8
      %v725 = vld [vmem:[%s724] sm:$0xf]
      %v726 = vld [vmem:[%s724 + $0x4] sm:$0xf]
      %v727 = vld [vmem:[%s724 + $0x8] sm:$0xf]
      %v728 = vld [vmem:[%s724 + $0xc] sm:$0xf]
      %s729 = scalar_lea.vmem %s2, 96
      %v730 = vld [vmem:[%s729] sm:$0xf]
      %v731 = vld [vmem:[%s729 + $0x4] sm:$0xf]
      %v732 = vld [vmem:[%s729 + $0x8] sm:$0xf]
      %v733 = vld [vmem:[%s729 + $0xc] sm:$0xf]
      %v738 = vunpack.c.l.b16 %v725
      %v739 = vunpack.c.l.b16 %v726
      %v740 = vunpack.c.l.b16 %v727
      %v741 = vunpack.c.l.b16 %v728
      %v742 = vpack.c.b16 %v739, %v738
      %v743 = vpack.c.b16 %v741, %v740
      %v748 = vunpack.c.l.b16 %v730
      %v749 = vunpack.c.l.b16 %v731
      %v750 = vunpack.c.l.b16 %v732
      %v751 = vunpack.c.l.b16 %v733
      %v752 = vpack.c.b16 %v749, %v748
      %v753 = vpack.c.b16 %v751, %v750
      %v757 = vsel %vm337, %v742, 0
      %v760 = vsel %vm337, %v743, 0
      %762 = vmatprep.subr.bf16.mxu0 0
      %763 = vmatpush1.bf16.msra.mxu0 0
      %764 = vmatprep.subr.bf16.mxu0 0
      %765 = vmatpush1.bf16.msra.mxu0 0
      %766 = vmatprep.subr.bf16.mxu0 0
      %767 = vmatpush1.bf16.msra.mxu0 0
      %768 = vmatprep.subr.bf16.mxu0 0
      %769 = vmatpush1.bf16.msra.mxu0 0
      %770 = vmatprep.subr.bf16.mxu0 0
      %771 = vmatpush1.bf16.msra.mxu0 0
      %772 = vmatprep.subr.bf16.mxu0 0
      %773 = vmatpush1.bf16.msra.mxu0 0
      %774 = vmatprep.subr.bf16.mxu0 0
      %775 = vmatpush1.bf16.msra.mxu0 %v753
      %776 = vmatprep.subr.bf16.mxu0 0
      %777 = vmatpush1.bf16.msra.mxu0 %v752
      %778 = vmatprep.subr.bf16.mxu0 0
      %779 = vmatpush2.bf16.msra.mxu0 0
      %780 = vmatprep.subr.bf16.mxu0 0
      %781 = vmatpush2.bf16.msra.mxu0 0
      %782 = vmatprep.subr.bf16.mxu0 0
      %783 = vmatpush2.bf16.msra.mxu0 0
      %784 = vmatprep.subr.bf16.mxu0 0
      %785 = vmatpush2.bf16.msra.mxu0 0
      %786 = vmatprep.subr.bf16.mxu0 0
      %787 = vmatpush2.bf16.msra.mxu0 0
      %788 = vmatprep.subr.bf16.mxu0 0
      %789 = vmatpush2.bf16.msra.mxu0 0
      %790 = vmatprep.subr.bf16.mxu0 0
      %791 = vmatpush2.bf16.msra.mxu0 0
      %792 = vmatprep.subr.bf16.mxu0 0
      %793 = vmatpush2.bf16.msra.mxu0 0
      %794 = vmatprep.mubr.bf16.mxu0 0
      %795 = vmatmul.mubr.bf16.gmra.mxu0 %v757
      %v796 = vpop.f32.mrf.mxu0
      %v797 = vadd.f32 0.0, %v796
      %v798 = vpop.f32.mrf.mxu0
      %v799 = vpop.f32.mrf.mxu0
      %v800 = vadd.f32 0.0, %v799
      %v801 = vpop.f32.mrf.mxu0
      %802 = vmatprep.mubr.bf16.mxu0 0
      %803 = vmatmul.mubr.bf16.gmra.mxu0 %v760
      %v804 = vpop.f32.mrf.mxu0
      %v805 = vadd.f32 0.0, %v804
      %v806 = vpop.f32.mrf.mxu0
      %v807 = vpop.f32.mrf.mxu0
      %v808 = vadd.f32 0.0, %v807
      %v809 = vpop.f32.mrf.mxu0
      %810 = vdwg.mxu0
      %v811 = vadd.f32 %v456, %v797
      %v812 = vadd.f32 %v459, %v800
      %v813 = vadd.f32 %v464, %v805
      %v814 = vadd.f32 %v467, %v808
      %s815 = scalar_lea.vmem %s2, 112
      %v816 = vld [vmem:[%s815] sm:$0xf]
      %v817 = vld [vmem:[%s815 + $0x4] sm:$0xf]
      %v818 = vld [vmem:[%s815 + $0x8] sm:$0xf]
      %v819 = vld [vmem:[%s815 + $0xc] sm:$0xf]
      %v824 = vunpack.c.l.b16 %v816
      %v825 = vunpack.c.l.b16 %v817
      %v826 = vunpack.c.l.b16 %v818
      %v827 = vunpack.c.l.b16 %v819
      %v828 = vpack.c.b16 %v825, %v824
      %v829 = vpack.c.b16 %v827, %v826
      %832 = vmatprep.subr.bf16.mxu0 0
      %833 = vmatpush1.bf16.msra.mxu0 0
      %834 = vmatprep.subr.bf16.mxu0 0
      %835 = vmatpush1.bf16.msra.mxu0 0
      %836 = vmatprep.subr.bf16.mxu0 0
      %837 = vmatpush1.bf16.msra.mxu0 0
      %838 = vmatprep.subr.bf16.mxu0 0
      %839 = vmatpush1.bf16.msra.mxu0 0
      %840 = vmatprep.subr.bf16.mxu0 0
      %841 = vmatpush1.bf16.msra.mxu0 0
      %842 = vmatprep.subr.bf16.mxu0 0
      %843 = vmatpush1.bf16.msra.mxu0 0
      %844 = vmatprep.subr.bf16.mxu0 0
      %845 = vmatpush1.bf16.msra.mxu0 %v829
      %846 = vmatprep.subr.bf16.mxu0 0
      %847 = vmatpush1.bf16.msra.mxu0 %v828
      %848 = vmatprep.subr.bf16.mxu0 0
      %849 = vmatpush2.bf16.msra.mxu0 0
      %850 = vmatprep.subr.bf16.mxu0 0
      %851 = vmatpush2.bf16.msra.mxu0 0
      %852 = vmatprep.subr.bf16.mxu0 0
      %853 = vmatpush2.bf16.msra.mxu0 0
      %854 = vmatprep.subr.bf16.mxu0 0
      %855 = vmatpush2.bf16.msra.mxu0 0
      %856 = vmatprep.subr.bf16.mxu0 0
      %857 = vmatpush2.bf16.msra.mxu0 0
      %858 = vmatprep.subr.bf16.mxu0 0
      %859 = vmatpush2.bf16.msra.mxu0 0
      %860 = vmatprep.subr.bf16.mxu0 0
      %861 = vmatpush2.bf16.msra.mxu0 0
      %862 = vmatprep.subr.bf16.mxu0 0
      %863 = vmatpush2.bf16.msra.mxu0 0
      %864 = vmatprep.mubr.bf16.mxu0 0
      %865 = vmatmul.mubr.bf16.gmra.mxu0 %v757
      %v866 = vpop.f32.mrf.mxu0
      %v867 = vadd.f32 0.0, %v866
      %v868 = vpop.f32.mrf.mxu0
      %v869 = vpop.f32.mrf.mxu0
      %v870 = vadd.f32 0.0, %v869
      %v871 = vpop.f32.mrf.mxu0
      %872 = vmatprep.mubr.bf16.mxu0 0
      %873 = vmatmul.mubr.bf16.gmra.mxu0 %v760
      %v874 = vpop.f32.mrf.mxu0
      %v875 = vadd.f32 0.0, %v874
      %v876 = vpop.f32.mrf.mxu0
      %v877 = vpop.f32.mrf.mxu0
      %v878 = vadd.f32 0.0, %v877
      %v879 = vpop.f32.mrf.mxu0
      %880 = vdwg.mxu0
      %v881 = vadd.f32 %v583, %v867
      %v882 = vadd.f32 %v586, %v870
      %v883 = vadd.f32 %v591, %v875
      %v884 = vadd.f32 %v594, %v878
      %s885 = scalar_lea.vmem %s2, 128
      %v886 = vld [vmem:[%s885] sm:$0xf]
      %v887 = vld [vmem:[%s885 + $0x4] sm:$0xf]
      %v888 = vld [vmem:[%s885 + $0x8] sm:$0xf]
      %v889 = vld [vmem:[%s885 + $0xc] sm:$0xf]
      %v894 = vunpack.c.l.b16 %v886
      %v895 = vunpack.c.l.b16 %v887
      %v896 = vunpack.c.l.b16 %v888
      %v897 = vunpack.c.l.b16 %v889
      %v898 = vpack.c.b16 %v895, %v894
      %v899 = vpack.c.b16 %v897, %v896
      %902 = vmatprep.subr.bf16.mxu0 0
      %903 = vmatpush1.bf16.msra.mxu0 0
      %904 = vmatprep.subr.bf16.mxu0 0
      %905 = vmatpush1.bf16.msra.mxu0 0
      %906 = vmatprep.subr.bf16.mxu0 0
      %907 = vmatpush1.bf16.msra.mxu0 0
      %908 = vmatprep.subr.bf16.mxu0 0
      %909 = vmatpush1.bf16.msra.mxu0 0
      %910 = vmatprep.subr.bf16.mxu0 0
      %911 = vmatpush1.bf16.msra.mxu0 0
      %912 = vmatprep.subr.bf16.mxu0 0
      %913 = vmatpush1.bf16.msra.mxu0 0
      %914 = vmatprep.subr.bf16.mxu0 0
      %915 = vmatpush1.bf16.msra.mxu0 %v899
      %916 = vmatprep.subr.bf16.mxu0 0
      %917 = vmatpush1.bf16.msra.mxu0 %v898
      %918 = vmatprep.subr.bf16.mxu0 0
      %919 = vmatpush2.bf16.msra.mxu0 0
      %920 = vmatprep.subr.bf16.mxu0 0
      %921 = vmatpush2.bf16.msra.mxu0 0
      %922 = vmatprep.subr.bf16.mxu0 0
      %923 = vmatpush2.bf16.msra.mxu0 0
      %924 = vmatprep.subr.bf16.mxu0 0
      %925 = vmatpush2.bf16.msra.mxu0 0
      %926 = vmatprep.subr.bf16.mxu0 0
      %927 = vmatpush2.bf16.msra.mxu0 0
      %928 = vmatprep.subr.bf16.mxu0 0
      %929 = vmatpush2.bf16.msra.mxu0 0
      %930 = vmatprep.subr.bf16.mxu0 0
      %931 = vmatpush2.bf16.msra.mxu0 0
      %932 = vmatprep.subr.bf16.mxu0 0
      %933 = vmatpush2.bf16.msra.mxu0 0
      %934 = vmatprep.mubr.bf16.mxu0 0
      %935 = vmatmul.mubr.bf16.gmra.mxu0 %v757
      %v936 = vpop.f32.mrf.mxu0
      %v937 = vadd.f32 0.0, %v936
      %v938 = vpop.f32.mrf.mxu0
      %v939 = vpop.f32.mrf.mxu0
      %v940 = vadd.f32 0.0, %v939
      %v941 = vpop.f32.mrf.mxu0
      %942 = vmatprep.mubr.bf16.mxu0 0
      %943 = vmatmul.mubr.bf16.gmra.mxu0 %v760
      %v944 = vpop.f32.mrf.mxu0
      %v945 = vadd.f32 0.0, %v944
      %v946 = vpop.f32.mrf.mxu0
      %v947 = vpop.f32.mrf.mxu0
      %v948 = vadd.f32 0.0, %v947
      %v949 = vpop.f32.mrf.mxu0
      %950 = vdwg.mxu0
      %v951 = vadd.f32 %v710, %v937
      %v952 = vadd.f32 %v713, %v940
      %v953 = vadd.f32 %v718, %v945
      %v954 = vadd.f32 %v721, %v948
      %v955 = vrot.slane %v811, 7
      %v956 = vrot.slane %v812, 7
      %v957 = vrot.slane %v813, 7
      %v958 = vrot.slane %v814, 7
      %v959 = vrot.slane %v951, 1
      %v960 = vrot.slane %v952, 1
      %v961 = vrot.slane %v953, 1
      %v962 = vrot.slane %v954, 1
      %v963 = vlaneseq
      %v964 = vshrl.u32 %v963, 7
      %vm965 = vcmp.gt.s32.totalorder %v964, 0
      %v966 = vsel %vm965, 1, 0
      %vm967 = vcmp.eq.s32.totalorder %v966, 1
      %v968 = vsel %vm967, %v955, 0.0
      %v969 = vsel %vm967, %v956, 0.0
      %v970 = vsel %vm967, %v957, 0.0
      %v971 = vsel %vm967, %v958, 0.0
      %v972 = vadd.f32 %v881, %v968
      %v973 = vadd.f32 %v882, %v969
      %v974 = vadd.f32 %v883, %v970
      %v975 = vadd.f32 %v884, %v971
      %vm976 = vcmp.lt.s32.totalorder %v964, 7
      %v977 = vsel %vm976, 1, 0
      %vm978 = vcmp.eq.s32.totalorder %v977, 1
      %v979 = vsel %vm978, %v959, 0.0
      %v980 = vsel %vm978, %v960, 0.0
      %v981 = vsel %vm978, %v961, 0.0
      %v982 = vsel %vm978, %v962, 0.0
      %v983 = vadd.f32 %v972, %v979
      %v984 = vadd.f32 %v973, %v980
      %v985 = vadd.f32 %v974, %v981
      %v986 = vadd.f32 %v975, %v982
      %v987 = vld [vmem:[%s3] sm:$0x1]
      %v989 = vlaneseq
      %v990 = vshrl.u32 %v989, 7
      %v991 = vsub.s32 0, %v990
      %v992 = vrot.slane %v987, %v991
      %v994 = vadd.f32 %v983, %v992
      %v995 = vadd.f32 %v984, %v992
      %v996 = vadd.f32 %v985, %v992
      %v997 = vadd.f32 %v986, %v992
      %v998 = vpack.c.bf16 %v994, %v994
      %v999 = vpack.c.bf16 %v995, %v995
      %v1000 = vpack.c.bf16 %v996, %v996
      %v1001 = vpack.c.bf16 %v997, %v997
      %1002 = vst.msk [vmem:[%s269] sm:$0xf] %vm273, %v998
      %1003 = vst.msk [vmem:[%s269 + $0x4] sm:$0xf] %vm273, %v999
      %1004 = vst.msk [vmem:[%s269 + $0x8] sm:$0xf] %vm273, %v1000
      %1005 = vst.msk [vmem:[%s269 + $0xc] sm:$0xf] %vm273, %v1001
      %s1006 = smul.u32 4, %s20
      %p1007 = scmp.lt.s32.totalorder %s19, 1
      %s1008 = scalar_select %p1007, %s19, 1
      %p1009 = scmp.lt.s32.totalorder %s1006, 7
      %s1010 = scalar_select %p1009, %s1006, 7
      %s1011 = smul.addr %s1008, 8
      %s1012 = sadd.s32 %s1010, %s1011
      %s1013 = smul.addr %s1012, 4
      %s1014 = scalar_lea.vmem %s4, %s1013
      // Predicated region
      $region37: #{depth_pro_forward.7} parent=35 // pred_check
        %p1015 = pneg %p145
      $region38: #{depth_pro_forward.7} parent=35 // pred_check_branch
        %1017 = sbr.rel (%p1015) target = $region40
      $region39: #{depth_pro_forward.7} parent=35 // pred_region
        %s1018 = smul.u32 4, %s20
      $region40: #{depth_pro_forward.7} parent=35 // pred_fallthru
        _
    $region36: #{depth_pro_forward.7} parent=5 // pred_fallthru
      _
    %p1019 = scmp.le.s32.totalorder 2, %s10
    // Predicated region
    $region41: #{depth_pro_forward.7} parent=5 // pred_check
      %p1020 = pneg %p1019
    $region42: #{depth_pro_forward.7} parent=5 // pred_check_branch
      %1022 = sbr.rel (%p1020) target = $region44
    $region43: #{depth_pro_forward.7} parent=5 // pred_region
      %s1023 = ssub.s32 %s10, 2
      // Predicated region
      $region45: #{depth_pro_forward.7} parent=43 // pred_check
        %p1024 = pneg %p151
      $region46: #{depth_pro_forward.7} parent=43 // pred_check_branch
        %1026 = sbr.rel (%p1024) target = $region48
      $region47: #{depth_pro_forward.7} parent=43 // pred_region
        %s1027 = smul.u32 4, %s22
        %p1028 = scmp.lt.s32.totalorder %s21, 1
        %s1029 = scalar_select %p1028, %s21, 1
        %p1030 = scmp.lt.s32.totalorder %s1027, 7
        %s1031 = scalar_select %p1030, %s1027, 7
        %s1032 = smul.addr %s1029, 8
        %s1033 = sadd.s32 %s1031, %s1032
        %s1034 = smul.addr %s1033, 4
        %s1035 = scalar_lea.vmem %s4, %s1034
      $region48: #{depth_pro_forward.7} parent=43 // pred_fallthru
        _
    $region44: #{depth_pro_forward.7} parent=5 // pred_fallthru
      _
  $region6: #{depth_pro_forward.7} parent=0 // loop_footer
    %s14 = sadd.s32 1, %s10
  $region7: #{depth_pro_forward.7} parent=0 // loop_footer_branch
    %9 = sbr.rel target = $region3
  $region8: #{depth_pro_forward.7} parent=0 // loop_exit
    _

// kernel: depth_pro_forward.9
$region0: #{depth_pro_forward.9}
  #allocation0 [shape = 'u32[]', space=smem, size = 0x4, offset = 0x4, fixed_abs, tag = 'smem constant byte address 0x4 - core index']
  #allocation1 [shape = 'u32[144,128]{1,0:T(1,128)}', space=vmem, size = 0x12000, scoped, tag = 'internal scratch']
  #allocation2 [shape = 'bf16[6,8,32]{2,1,0:T(8,128)(2,1)}', space=vmem, size = 0x3000, scoped, tag = 'scratch operand']
  %s0 = inlined_call_operand.vmem [shape: bf16[2,8,8,32], index: 0, kind: input, shape index: {}]
  %s1 = inlined_call_operand.vmem [shape: bf16[2,2,2,8,32], index: 1, kind: input, shape index: {}]
  %s2 = inlined_call_operand.vmem [shape: bf16[3,3,32,16], index: 2, kind: input, shape index: {}]
  %s3 = inlined_call_operand.vmem [shape: f32[1,16], index: 3, kind: input, shape index: {}]
  %s4 = inlined_call_operand.vmem [shape: bf16[2,8,8,16], index: 4, kind: output, shape index: {}]
  %s5 = sld [smem:[#allocation0]]
  $region49: #{depth_pro_forward.9} parent=0
    _
  %s7 = ssub.s32 1, %s5
  %s8 = scalar_select 0, %s7, %s5
  loop: start=0, step=1, limit=6
  $region2: #{depth_pro_forward.9} parent=0 // loop_pre_header
    _
  $region3: #{depth_pro_forward.9} parent=0 // loop_header
    %s10 = sphi 0, %s14
    %p11 = scmp.ge.s32.totalorder %s10, 6
    %s17 = sphi 0, %s29
    %s18 = sphi 0, %s25
    %s19 = sphi 0, %s17
    %s20 = sphi 0, %s18
    %s21 = sphi 0, %s19
    %s22 = sphi 0, %s20
    %s34 = sphi 0, %s36
    %s37 = sphi 0, %s34
    %s38 = sphi 0, %s37
    %s54 = sphi 0, %s38
    %s62 = sphi 0, %s64
    %s65 = sphi 0, %s62
    %s66 = sphi 0, %s65
    %s82 = sphi 0, %s66
    %s86 = sphi 0, %s86
    %s88 = sphi 0, %s86
    %s89 = sphi 0, %s88
    %s103 = sphi 0, %s89
    %s107 = sphi 0, %s107
    %s109 = sphi 0, %s107
    %s110 = sphi 0, %s109
    %s124 = sphi 0, %s110
    %s132 = sphi 0, %s134
    %s135 = sphi 0, %s132
    %s136 = sphi 0, %s135
    %s152 = sphi 0, %s136
  $region4: #{depth_pro_forward.9} parent=0 // loop_header_branch
    %13 = sbr.rel (%p11) target = $region8
  $region5: #{depth_pro_forward.9} parent=0 // loop_body
    %s15 = ssub.s32 %s10, 1
    %s16 = ssub.s32 %s10, 2
    %s23 = sadd.s32 1, %s18
    %p24 = scmp.ge.s32.totalorder %s23, 2
    %s25 = scalar_select %p24, 0, %s23
    %s26 = sadd.s32 1, %s17
    %s27 = scalar_select %p24, %s26, %s17
    %p28 = scmp.ge.s32.totalorder %s27, 2
    %s29 = scalar_select %p28, 0, %s27
    %s30 = ssub.s32 %s17, %s29
    %s31 = ssub.s32 %s18, %s25
    %s32 = sor.u32 %s30, %s31
    %p33 = scmp.eq.s32.totalorder %s32, 0
    %s35 = sadd.s32 %s34, 1
    %s36 = scalar_select %p33, %s34, %s35
    %p39 = pneg %p33
    %p40 = scmp.eq.s32.totalorder %s10, 3
    %p41 = por %p39, %p40
    %p42 = scmp.ne.s32.totalorder %s34, %s37
    %p43 = scmp.eq.s32.totalorder %s10, 0
    %p44 = por %p42, %p43
    %p45 = scmp.ne.s32.totalorder %s34, %s37
    %p46 = scmp.eq.s32.totalorder %s15, 3
    %p47 = por %p45, %p46
    %p48 = scmp.ne.s32.totalorder %s37, %s38
    %p49 = scmp.eq.s32.totalorder %s15, 0
    %p50 = por %p48, %p49
    %p51 = scmp.ne.s32.totalorder %s37, %s38
    %p52 = scmp.eq.s32.totalorder %s16, 3
    %p53 = por %p51, %p52
    %p55 = scmp.ne.s32.totalorder %s38, %s54
    %p56 = scmp.eq.s32.totalorder %s16, 0
    %p57 = por %p55, %p56
    %s58 = ssub.s32 %s17, %s29
    %s59 = ssub.s32 %s18, %s25
    %s60 = sor.u32 %s58, %s59
    %p61 = scmp.eq.s32.totalorder %s60, 0
    %s63 = sadd.s32 %s62, 1
    %s64 = scalar_select %p61, %s62, %s63
    %p67 = pneg %p61
    %p68 = scmp.eq.s32.totalorder %s10, 3
    %p69 = por %p67, %p68
    %p70 = scmp.ne.s32.totalorder %s62, %s65
    %p71 = scmp.eq.s32.totalorder %s10, 0
    %p72 = por %p70, %p71
    %p73 = scmp.ne.s32.totalorder %s62, %s65
    %p74 = scmp.eq.s32.totalorder %s15, 3
    %p75 = por %p73, %p74
    %p76 = scmp.ne.s32.totalorder %s65, %s66
    %p77 = scmp.eq.s32.totalorder %s15, 0
    %p78 = por %p76, %p77
    %p79 = scmp.ne.s32.totalorder %s65, %s66
    %p80 = scmp.eq.s32.totalorder %s16, 3
    %p81 = por %p79, %p80
    %p83 = scmp.ne.s32.totalorder %s66, %s82
    %p84 = scmp.eq.s32.totalorder %s16, 0
    %p85 = por %p83, %p84
    %s87 = sadd.s32 %s86, 1
    %p90 = scmp.eq.s32.totalorder %s10, 3
    %p91 = scmp.ne.s32.totalorder %s86, %s88
    %p92 = scmp.eq.s32.totalorder %s10, 0
    %p93 = por %p91, %p92
    %p94 = scmp.ne.s32.totalorder %s86, %s88
    %p95 = scmp.eq.s32.totalorder %s15, 3
    %p96 = por %p94, %p95
    %p97 = scmp.ne.s32.totalorder %s88, %s89
    %p98 = scmp.eq.s32.totalorder %s15, 0
    %p99 = por %p97, %p98
    %p100 = scmp.ne.s32.totalorder %s88, %s89
    %p101 = scmp.eq.s32.totalorder %s16, 3
    %p102 = por %p100, %p101
    %p104 = scmp.ne.s32.totalorder %s89, %s103
    %p105 = scmp.eq.s32.totalorder %s16, 0
    %p106 = por %p104, %p105
    %s108 = sadd.s32 %s107, 1
    %p111 = scmp.eq.s32.totalorder %s10, 3
    %p112 = scmp.ne.s32.totalorder %s107, %s109
    %p113 = scmp.eq.s32.totalorder %s10, 0
    %p114 = por %p112, %p113
    %p115 = scmp.ne.s32.totalorder %s107, %s109
    %p116 = scmp.eq.s32.totalorder %s15, 3
    %p117 = por %p115, %p116
    %p118 = scmp.ne.s32.totalorder %s109, %s110
    %p119 = scmp.eq.s32.totalorder %s15, 0
    %p120 = por %p118, %p119
    %p121 = scmp.ne.s32.totalorder %s109, %s110
    %p122 = scmp.eq.s32.totalorder %s16, 3
    %p123 = por %p121, %p122
    %p125 = scmp.ne.s32.totalorder %s110, %s124
    %p126 = scmp.eq.s32.totalorder %s16, 0
    %p127 = por %p125, %p126
    %s128 = ssub.s32 %s17, %s29
    %s129 = ssub.s32 %s18, %s25
    %s130 = sor.u32 %s128, %s129
    %p131 = scmp.eq.s32.totalorder %s130, 0
    %s133 = sadd.s32 %s132, 1
    %s134 = scalar_select %p131, %s132, %s133
    %p137 = pneg %p131
    %p138 = scmp.eq.s32.totalorder %s10, 3
    %p139 = por %p137, %p138
    %p140 = scmp.ne.s32.totalorder %s132, %s135
    %p141 = scmp.eq.s32.totalorder %s10, 0
    %p142 = por %p140, %p141
    %p143 = scmp.ne.s32.totalorder %s132, %s135
    %p144 = scmp.eq.s32.totalorder %s15, 3
    %p145 = por %p143, %p144
    %p146 = scmp.ne.s32.totalorder %s135, %s136
    %p147 = scmp.eq.s32.totalorder %s15, 0
    %p148 = por %p146, %p147
    %p149 = scmp.ne.s32.totalorder %s135, %s136
    %p150 = scmp.eq.s32.totalorder %s16, 3
    %p151 = por %p149, %p150
    %p153 = scmp.ne.s32.totalorder %s136, %s152
    %p154 = scmp.eq.s32.totalorder %s16, 0
    %p155 = por %p153, %p154
    %p156 = scmp.le.s32.totalorder 1, %s10
    %p157 = scmp.lt.s32.totalorder %s10, 5
    %p158 = pnand %p156, %p157
    %p159 = pneg %p158
    // Predicated region
    $region9: #{depth_pro_forward.9} parent=5 // pred_check
      _
    $region10: #{depth_pro_forward.9} parent=5 // pred_check_branch
      %161 = sbr.rel (%p158) target = $region12
    $region11: #{depth_pro_forward.9} parent=5 // pred_region
      %s162 = ssub.s32 %s10, 1
      // Predicated region
      $region13: #{depth_pro_forward.9} parent=11 // pred_check
        %p163 = pneg %p99
      $region14: #{depth_pro_forward.9} parent=11 // pred_check_branch
        %165 = sbr.rel (%p163) target = $region16
      $region15: #{depth_pro_forward.9} parent=11 // pred_region
        _
      $region16: #{depth_pro_forward.9} parent=11 // pred_fallthru
        _
      // Predicated region
      $region17: #{depth_pro_forward.9} parent=11 // pred_check
        %p166 = pneg %p120
      $region18: #{depth_pro_forward.9} parent=11 // pred_check_branch
        %168 = sbr.rel (%p166) target = $region20
      $region19: #{depth_pro_forward.9} parent=11 // pred_region
        _
      $region20: #{depth_pro_forward.9} parent=11 // pred_fallthru
        _
    $region12: #{depth_pro_forward.9} parent=5 // pred_fallthru
      _
    %p169 = scmp.lt.s32.totalorder %s10, 4
    // Predicated region
    $region21: #{depth_pro_forward.9} parent=5 // pred_check
      %p170 = pneg %p169
    $region22: #{depth_pro_forward.9} parent=5 // pred_check_branch
      %172 = sbr.rel (%p170) target = $region24
    $region23: #{depth_pro_forward.9} parent=5 // pred_region
      // Predicated region
      $region25: #{depth_pro_forward.9} parent=23 // pred_check
        %p173 = pneg %p44
      $region26: #{depth_pro_forward.9} parent=23 // pred_check_branch
        %175 = sbr.rel (%p173) target = $region28
      $region27: #{depth_pro_forward.9} parent=23 // pred_region
        %s176 = smul.u32 4, %s18
        %p177 = scmp.lt.s32.totalorder %s17, 1
        %s178 = scalar_select %p177, %s17, 1
        %p179 = scmp.lt.s32.totalorder %s176, 7
        %s180 = scalar_select %p179, %s176, 7
        %s181 = smul.addr %s178, 8
        %s182 = sadd.s32 %s180, %s181
        %s183 = smul.addr %s182, 4
        %s184 = scalar_lea.vmem %s0, %s183
        %s185 = smul.u32 4, %s18
      $region28: #{depth_pro_forward.9} parent=23 // pred_fallthru
        _
      // Predicated region
      $region29: #{depth_pro_forward.9} parent=23 // pred_check
        %p186 = pneg %p72
      $region30: #{depth_pro_forward.9} parent=23 // pred_check_branch
        %188 = sbr.rel (%p186) target = $region32
      $region31: #{depth_pro_forward.9} parent=23 // pred_region
        %p189 = scmp.lt.s32.totalorder %s17, 1
        %s190 = scalar_select %p189, %s17, 1
        %p191 = scmp.lt.s32.totalorder %s18, 1
        %s192 = scalar_select %p191, %s18, 1
        %s193 = smul.addr %s192, 2
        %s194 = smul.addr %s190, 4
        %s195 = sadd.s32 %s193, %s194
        %s196 = smul.addr %s195, 4
        %s197 = scalar_lea.vmem %s1, %s196
      $region32: #{depth_pro_forward.9} parent=23 // pred_fallthru
        _
    $region24: #{depth_pro_forward.9} parent=5 // pred_fallthru
      _
    %p198 = scmp.le.s32.totalorder 1, %s10
    %p199 = scmp.lt.s32.totalorder %s10, 5
    %p200 = pnand %p198, %p199
    %p201 = pneg %p200
    // Predicated region
    $region33: #{depth_pro_forward.9} parent=5 // pred_check
      _
    $region34: #{depth_pro_forward.9} parent=5 // pred_check_branch
      %203 = sbr.rel (%p200) target = $region36
    $region35: #{depth_pro_forward.9} parent=5 // pred_region
      %s204 = ssub.s32 %s10, 1
      %s205 = smul.u32 4, %s20
      %p206 = scmp.lt.s32.totalorder %s19, 1
      %s207 = scalar_select %p206, %s19, 1
      %p208 = scmp.lt.s32.totalorder %s205, 7
      %s209 = scalar_select %p208, %s205, 7
      %s210 = smul.addr %s207, 8
      %s211 = sadd.s32 %s209, %s210
      %s212 = smul.addr %s211, 4
      %s213 = scalar_lea.vmem %s0, %s212
      %p214 = pneg %p50
      %p215 = pneg %p47
      %p216 = scmp.lt.s32.totalorder %s19, 1
      %s217 = scalar_select %p216, %s19, 1
      %p218 = scmp.lt.s32.totalorder %s20, 1
      %s219 = scalar_select %p218, %s20, 1
      %s220 = smul.addr %s219, 2
      %s221 = smul.addr %s217, 4
      %s222 = sadd.s32 %s220, %s221
      %s223 = smul.addr %s222, 4
      %s224 = scalar_lea.vmem %s1, %s223
      %p225 = pneg %p78
      %p226 = pneg %p75
      %p227 = pneg %p99
      %p228 = pneg %p96
      %p229 = pneg %p120
      %p230 = pneg %p117
      %p231 = pneg %p148
      %p232 = pneg %p145
      %s233 = smul.u32 4, %s20
      %p234 = scmp.lt.s32.totalorder %s19, 1
      %s235 = scalar_select %p234, %s19, 1
      %p236 = scmp.lt.s32.totalorder %s233, 7
      %s237 = scalar_select %p236, %s233, 7
      %s238 = smul.addr %s235, 8
      %s239 = sadd.s32 %s237, %s238
      %s240 = smul.addr %s239, 4
      %s241 = scalar_lea.vmem %s4, %s240
      %s242 = smul.u32 4, %s20
      %p243 = scmp.lt.s32.totalorder %s19, 1
      %s244 = scalar_select %p243, %s19, 1
      %p245 = scmp.lt.s32.totalorder %s242, 7
      %s246 = scalar_select %p245, %s242, 7
      %s247 = smul.addr %s244, 8
      %s248 = sadd.s32 %s246, %s247
      %s249 = smul.addr %s248, 4
      %s250 = scalar_lea.vmem %s0, %s249
      %s251 = smul.u32 4, %s20
      %p252 = scmp.lt.s32.totalorder %s19, 1
      %s253 = scalar_select %p252, %s19, 1
      %p254 = scmp.lt.s32.totalorder %s20, 1
      %s255 = scalar_select %p254, %s20, 1
      %s256 = smul.addr %s255, 2
      %s257 = smul.addr %s253, 4
      %s258 = sadd.s32 %s256, %s257
      %s259 = smul.addr %s258, 4
      %s260 = scalar_lea.vmem %s1, %s259
      %s261 = smul.u32 4, %s20
      %p262 = scmp.lt.s32.totalorder %s19, 1
      %s263 = scalar_select %p262, %s19, 1
      %p264 = scmp.lt.s32.totalorder %s261, 7
      %s265 = scalar_select %p264, %s261, 7
      %s266 = smul.addr %s263, 8
      %s267 = sadd.s32 %s265, %s266
      %s268 = smul.addr %s267, 4
      %s269 = scalar_lea.vmem %s4, %s268
      %s270 = smul.u32 4, %s20
      %v272 = vld [vmem:[%s260] sm:$0xf]
      %vm273 = vcmask 257024
      %274 = vst.msk [vmem:[#allocation2] sm:$0xf] %vm273, %v272
      %v275 = vld [vmem:[%s250] sm:$0xf]
      %v276 = vld [vmem:[%s250 + $0x4] sm:$0xf]
      %v277 = vld [vmem:[%s250 + $0x8] sm:$0xf]
      %v278 = vld [vmem:[%s250 + $0xc] sm:$0xf]
      %s279 = scalar_lea.vmem [#allocation2], 4
      %280 = vst.msk [vmem:[%s279] sm:$0xf] %vm273, %v275
      %281 = vst.msk [vmem:[%s279 + $0x4] sm:$0xf] %vm273, %v276
      %282 = vst.msk [vmem:[%s279 + $0x8] sm:$0xf] %vm273, %v277
      %283 = vst.msk [vmem:[%s279 + $0xc] sm:$0xf] %vm273, %v278
      %s284 = scalar_lea.vmem %s260, 4
      %v285 = vld [vmem:[%s284] sm:$0xf]
      %s286 = scalar_lea.vmem [#allocation2], 20
      %287 = vst.msk [vmem:[%s286] sm:$0xf] %vm273, %v285
      %v288 = vld [vmem:[#allocation2] sm:$0xf]
      %v289 = vld [vmem:[#allocation2 + $0x4] sm:$0xf]
      %v290 = vld [vmem:[#allocation2 + $0x8] sm:$0xf]
      %v291 = vld [vmem:[#allocation2 + $0xc] sm:$0xf]
      %v292 = vld [vmem:[%s2] sm:$0xf]
      %v293 = vld [vmem:[%s2 + $0x4] sm:$0xf]
      %v294 = vld [vmem:[%s2 + $0x8] sm:$0xf]
      %v295 = vld [vmem:[%s2 + $0xc] sm:$0xf]
      %s296 = scalar_lea.vmem %s2, 16
      %v297 = vld [vmem:[%s296] sm:$0xf]
      %v298 = vld [vmem:[%s296 + $0x4] sm:$0xf]
      %v299 = vld [vmem:[%s296 + $0x8] sm:$0xf]
      %v300 = vld [vmem:[%s296 + $0xc] sm:$0xf]
      %s301 = scalar_lea.vmem %s2, 32
      %v302 = vld [vmem:[%s301] sm:$0xf]
      %v303 = vld [vmem:[%s301 + $0x4] sm:$0xf]
      %v304 = vld [vmem:[%s301 + $0x8] sm:$0xf]
      %v305 = vld [vmem:[%s301 + $0xc] sm:$0xf]
      %v306 = vld [vmem:[%s279] sm:$0xf]
      %v307 = vld [vmem:[%s279 + $0x4] sm:$0xf]
      %v308 = vld [vmem:[%s279 + $0x8] sm:$0xf]
      %v309 = vld [vmem:[%s279 + $0xc] sm:$0xf]
      %s310 = scalar_lea.vmem %s2, 48
      %v311 = vld [vmem:[%s310] sm:$0xf]
      %v312 = vld [vmem:[%s310 + $0x4] sm:$0xf]
      %v313 = vld [vmem:[%s310 + $0x8] sm:$0xf]
      %v314 = vld [vmem:[%s310 + $0xc] sm:$0xf]
      %v319 = vunpack.c.l.b16 %v306
      %v320 = vunpack.c.l.b16 %v307
      %v321 = vunpack.c.l.b16 %v308
      %v322 = vunpack.c.l.b16 %v309
      %v323 = vpack.c.b16 %v320, %v319
      %v324 = vpack.c.b16 %v322, %v321
      %v329 = vunpack.c.l.b16 %v311
      %v330 = vunpack.c.l.b16 %v312
      %v331 = vunpack.c.l.b16 %v313
      %v332 = vunpack.c.l.b16 %v314
      %v333 = vpack.c.b16 %v330, %v329
      %v334 = vpack.c.b16 %v332, %v331
      %vm337 = vcmask 261120
      %v339 = vsel %vm337, %v323, 0
      %v342 = vsel %vm337, %v324, 0
      %344 = vmatprep.subr.bf16.mxu0 0
      %345 = vmatpush1.bf16.msra.mxu0 0
      %346 = vmatprep.subr.bf16.mxu0 0
      %347 = vmatpush1.bf16.msra.mxu0 0
      %348 = vmatprep.subr.bf16.mxu0 0
      %349 = vmatpush1.bf16.msra.mxu0 0
      %350 = vmatprep.subr.bf16.mxu0 0
      %351 = vmatpush1.bf16.msra.mxu0 0
      %352 = vmatprep.subr.bf16.mxu0 0
      %353 = vmatpush1.bf16.msra.mxu0 0
      %354 = vmatprep.subr.bf16.mxu0 0
      %355 = vmatpush1.bf16.msra.mxu0 0
      %356 = vmatprep.subr.bf16.mxu0 0
      %357 = vmatpush1.bf16.msra.mxu0 %v334
      %358 = vmatprep.subr.bf16.mxu0 0
      %359 = vmatpush1.bf16.msra.mxu0 %v333
      %360 = vmatprep.subr.bf16.mxu0 0
      %361 = vmatpush2.bf16.msra.mxu0 0
      %362 = vmatprep.subr.bf16.mxu0 0
      %363 = vmatpush2.bf16.msra.mxu0 0
      %364 = vmatprep.subr.bf16.mxu0 0
      %365 = vmatpush2.bf16.msra.mxu0 0
      %366 = vmatprep.subr.bf16.mxu0 0
      %367 = vmatpush2.bf16.msra.mxu0 0
      %368 = vmatprep.subr.bf16.mxu0 0
      %369 = vmatpush2.bf16.msra.mxu0 0
      %370 = vmatprep.subr.bf16.mxu0 0
      %371 = vmatpush2.bf16.msra.mxu0 0
      %372 = vmatprep.subr.bf16.mxu0 0
      %373 = vmatpush2.bf16.msra.mxu0 0
      %374 = vmatprep.subr.bf16.mxu0 0
      %375 = vmatpush2.bf16.msra.mxu0 0
      %376 = vmatprep.mubr.bf16.mxu0 0
      %377 = vmatmul.mubr.bf16.gmra.mxu0 %v339
      %v378 = vpop.f32.mrf.mxu0
      %v379 = vadd.f32 0.0, %v378
      %v380 = vpop.f32.mrf.mxu0
      %v381 = vpop.f32.mrf.mxu0
      %v382 = vadd.f32 0.0, %v381
      %v383 = vpop.f32.mrf.mxu0
      %384 = vmatprep.mubr.bf16.mxu0 0
      %385 = vmatmul.mubr.bf16.gmra.mxu0 %v342
      %v386 = vpop.f32.mrf.mxu0
      %v387 = vadd.f32 0.0, %v386
      %v388 = vpop.f32.mrf.mxu0
      %v389 = vpop.f32.mrf.mxu0
      %v390 = vadd.f32 0.0, %v389
      %v391 = vpop.f32.mrf.mxu0
      %392 = vdwg.mxu0
      %v397 = vunpack.c.l.b16 %v288
      %v398 = vunpack.c.l.b16 %v289
      %v399 = vunpack.c.l.b16 %v290
      %v400 = vunpack.c.l.b16 %v291
      %v401 = vpack.c.b16 %v398, %v397
      %v402 = vpack.c.b16 %v400, %v399
      %v407 = vunpack.c.l.b16 %v292
      %v408 = vunpack.c.l.b16 %v293
      %v409 = vunpack.c.l.b16 %v294
      %v410 = vunpack.c.l.b16 %v295
      %v411 = vpack.c.b16 %v408, %v407
      %v412 = vpack.c.b16 %v410, %v409
      %v416 = vsel %vm337, %v401, 0
      %v419 = vsel %vm337, %v402, 0
      %421 = vmatprep.subr.bf16.mxu0 0
      %422 = vmatpush1.bf16.msra.mxu0 0
      %423 = vmatprep.subr.bf16.mxu0 0
      %424 = vmatpush1.bf16.msra.mxu0 0
      %425 = vmatprep.subr.bf16.mxu0 0
      %426 = vmatpush1.bf16.msra.mxu0 0
      %427 = vmatprep.subr.bf16.mxu0 0
      %428 = vmatpush1.bf16.msra.mxu0 0
      %429 = vmatprep.subr.bf16.mxu0 0
      %430 = vmatpush1.bf16.msra.mxu0 0
      %431 = vmatprep.subr.bf16.mxu0 0
      %432 = vmatpush1.bf16.msra.mxu0 0
      %433 = vmatprep.subr.bf16.mxu0 0
      %434 = vmatpush1.bf16.msra.mxu0 %v412
      %435 = vmatprep.subr.bf16.mxu0 0
      %436 = vmatpush1.bf16.msra.mxu0 %v411
      %437 = vmatprep.subr.bf16.mxu0 0
      %438 = vmatpush2.bf16.msra.mxu0 0
      %439 = vmatprep.subr.bf16.mxu0 0
      %440 = vmatpush2.bf16.msra.mxu0 0
      %441 = vmatprep.subr.bf16.mxu0 0
      %442 = vmatpush2.bf16.msra.mxu0 0
      %443 = vmatprep.subr.bf16.mxu0 0
      %444 = vmatpush2.bf16.msra.mxu0 0
      %445 = vmatprep.subr.bf16.mxu0 0
      %446 = vmatpush2.bf16.msra.mxu0 0
      %447 = vmatprep.subr.bf16.mxu0 0
      %448 = vmatpush2.bf16.msra.mxu0 0
      %449 = vmatprep.subr.bf16.mxu0 0
      %450 = vmatpush2.bf16.msra.mxu0 0
      %451 = vmatprep.subr.bf16.mxu0 0
      %452 = vmatpush2.bf16.msra.mxu0 0
      %453 = vmatprep.mubr.bf16.mxu0 0
      %454 = vmatmul.mubr.bf16.gmra.mxu0 %v416
      %v455 = vpop.f32.mrf.mxu0
      %v456 = vadd.f32 %v379, %v455
      %v457 = vpop.f32.mrf.mxu0
      %v458 = vpop.f32.mrf.mxu0
      %v459 = vadd.f32 %v382, %v458
      %v460 = vpop.f32.mrf.mxu0
      %461 = vmatprep.mubr.bf16.mxu0 0
      %462 = vmatmul.mubr.bf16.gmra.mxu0 %v419
      %v463 = vpop.f32.mrf.mxu0
      %v464 = vadd.f32 %v387, %v463
      %v465 = vpop.f32.mrf.mxu0
      %v466 = vpop.f32.mrf.mxu0
      %v467 = vadd.f32 %v390, %v466
      %v468 = vpop.f32.mrf.mxu0
      %469 = vdwg.mxu0
      %s470 = scalar_lea.vmem %s2, 64
      %v471 = vld [vmem:[%s470] sm:$0xf]
      %v472 = vld [vmem:[%s470 + $0x4] sm:$0xf]
      %v473 = vld [vmem:[%s470 + $0x8] sm:$0xf]
      %v474 = vld [vmem:[%s470 + $0xc] sm:$0xf]
      %v479 = vunpack.c.l.b16 %v471
      %v480 = vunpack.c.l.b16 %v472
      %v481 = vunpack.c.l.b16 %v473
      %v482 = vunpack.c.l.b16 %v474
      %v483 = vpack.c.b16 %v480, %v479
      %v484 = vpack.c.b16 %v482, %v481
      %487 = vmatprep.subr.bf16.mxu0 0
      %488 = vmatpush1.bf16.msra.mxu0 0
      %489 = vmatprep.subr.bf16.mxu0 0
      %490 = vmatpush1.bf16.msra.mxu0 0
      %491 = vmatprep.subr.bf16.mxu0 0
      %492 = vmatpush1.bf16.msra.mxu0 0
      %493 = vmatprep.subr.bf16.mxu0 0
      %494 = vmatpush1.bf16.msra.mxu0 0
      %495 = vmatprep.subr.bf16.mxu0 0
      %496 = vmatpush1.bf16.msra.mxu0 0
      %497 = vmatprep.subr.bf16.mxu0 0
      %498 = vmatpush1.bf16.msra.mxu0 0
      %499 = vmatprep.subr.bf16.mxu0 0
      %500 = vmatpush1.bf16.msra.mxu0 %v484
      %501 = vmatprep.subr.bf16.mxu0 0
      %502 = vmatpush1.bf16.msra.mxu0 %v483
      %503 = vmatprep.subr.bf16.mxu0 0
      %504 = vmatpush2.bf16.msra.mxu0 0
      %505 = vmatprep.subr.bf16.mxu0 0
      %506 = vmatpush2.bf16.msra.mxu0 0
      %507 = vmatprep.subr.bf16.mxu0 0
      %508 = vmatpush2.bf16.msra.mxu0 0
      %509 = vmatprep.subr.bf16.mxu0 0
      %510 = vmatpush2.bf16.msra.mxu0 0
      %511 = vmatprep.subr.bf16.mxu0 0
      %512 = vmatpush2.bf16.msra.mxu0 0
      %513 = vmatprep.subr.bf16.mxu0 0
      %514 = vmatpush2.bf16.msra.mxu0 0
      %515 = vmatprep.subr.bf16.mxu0 0
      %516 = vmatpush2.bf16.msra.mxu0 0
      %517 = vmatprep.subr.bf16.mxu0 0
      %518 = vmatpush2.bf16.msra.mxu0 0
      %519 = vmatprep.mubr.bf16.mxu0 0
      %520 = vmatmul.mubr.bf16.gmra.mxu0 %v339
      %v521 = vpop.f32.mrf.mxu0
      %v522 = vadd.f32 0.0, %v521
      %v523 = vpop.f32.mrf.mxu0
      %v524 = vpop.f32.mrf.mxu0
      %v525 = vadd.f32 0.0, %v524
      %v526 = vpop.f32.mrf.mxu0
      %527 = vmatprep.mubr.bf16.mxu0 0
      %528 = vmatmul.mubr.bf16.gmra.mxu0 %v342
      %v529 = vpop.f32.mrf.mxu0
      %v530 = vadd.f32 0.0, %v529
      %v531 = vpop.f32.mrf.mxu0
      %v532 = vpop.f32.mrf.mxu0
      %v533 = vadd.f32 0.0, %v532
      %v534 = vpop.f32.mrf.mxu0
      %535 = vdwg.mxu0
      %v540 = vunpack.c.l.b16 %v297
      %v541 = vunpack.c.l.b16 %v298
      %v542 = vunpack.c.l.b16 %v299
      %v543 = vunpack.c.l.b16 %v300
      %v544 = vpack.c.b16 %v541, %v540
      %v545 = vpack.c.b16 %v543, %v542
      %548 = vmatprep.subr.bf16.mxu0 0
      %549 = vmatpush1.bf16.msra.mxu0 0
      %550 = vmatprep.subr.bf16.mxu0 0
      %551 = vmatpush1.bf16.msra.mxu0 0
      %552 = vmatprep.subr.bf16.mxu0 0
      %553 = vmatpush1.bf16.msra.mxu0 0
      %554 = vmatprep.subr.bf16.mxu0 0
      %555 = vmatpush1.bf16.msra.mxu0 0
      %556 = vmatprep.subr.bf16.mxu0 0
      %557 = vmatpush1.bf16.msra.mxu0 0
      %558 = vmatprep.subr.bf16.mxu0 0
      %559 = vmatpush1.bf16.msra.mxu0 0
      %560 = vmatprep.subr.bf16.mxu0 0
      %561 = vmatpush1.bf16.msra.mxu0 %v545
      %562 = vmatprep.subr.bf16.mxu0 0
      %563 = vmatpush1.bf16.msra.mxu0 %v544
      %564 = vmatprep.subr.bf16.mxu0 0
      %565 = vmatpush2.bf16.msra.mxu0 0
      %566 = vmatprep.subr.bf16.mxu0 0
      %567 = vmatpush2.bf16.msra.mxu0 0
      %568 = vmatprep.subr.bf16.mxu0 0
      %569 = vmatpush2.bf16.msra.mxu0 0
      %570 = vmatprep.subr.bf16.mxu0 0
      %571 = vmatpush2.bf16.msra.mxu0 0
      %572 = vmatprep.subr.bf16.mxu0 0
      %573 = vmatpush2.bf16.msra.mxu0 0
      %574 = vmatprep.subr.bf16.mxu0 0
      %575 = vmatpush2.bf16.msra.mxu0 0
      %576 = vmatprep.subr.bf16.mxu0 0
      %577 = vmatpush2.bf16.msra.mxu0 0
      %578 = vmatprep.subr.bf16.mxu0 0
      %579 = vmatpush2.bf16.msra.mxu0 0
      %580 = vmatprep.mubr.bf16.mxu0 0
      %581 = vmatmul.mubr.bf16.gmra.mxu0 %v416
      %v582 = vpop.f32.mrf.mxu0
      %v583 = vadd.f32 %v522, %v582
      %v584 = vpop.f32.mrf.mxu0
      %v585 = vpop.f32.mrf.mxu0
      %v586 = vadd.f32 %v525, %v585
      %v587 = vpop.f32.mrf.mxu0
      %588 = vmatprep.mubr.bf16.mxu0 0
      %589 = vmatmul.mubr.bf16.gmra.mxu0 %v419
      %v590 = vpop.f32.mrf.mxu0
      %v591 = vadd.f32 %v530, %v590
      %v592 = vpop.f32.mrf.mxu0
      %v593 = vpop.f32.mrf.mxu0
      %v594 = vadd.f32 %v533, %v593
      %v595 = vpop.f32.mrf.mxu0
      %596 = vdwg.mxu0
      %s597 = scalar_lea.vmem %s2, 80
      %v598 = vld [vmem:[%s597] sm:$0xf]
      %v599 = vld [vmem:[%s597 + $0x4] sm:$0xf]
      %v600 = vld [vmem:[%s597 + $0x8] sm:$0xf]
      %v601 = vld [vmem:[%s597 + $0xc] sm:$0xf]
      %v606 = vunpack.c.l.b16 %v598
      %v607 = vunpack.c.l.b16 %v599
      %v608 = vunpack.c.l.b16 %v600
      %v609 = vunpack.c.l.b16 %v601
      %v610 = vpack.c.b16 %v607, %v606
      %v611 = vpack.c.b16 %v609, %v608
      %614 = vmatprep.subr.bf16.mxu0 0
      %615 = vmatpush1.bf16.msra.mxu0 0
      %616 = vmatprep.subr.bf16.mxu0 0
      %617 = vmatpush1.bf16.msra.mxu0 0
      %618 = vmatprep.subr.bf16.mxu0 0
      %619 = vmatpush1.bf16.msra.mxu0 0
      %620 = vmatprep.subr.bf16.mxu0 0
      %621 = vmatpush1.bf16.msra.mxu0 0
      %622 = vmatprep.subr.bf16.mxu0 0
      %623 = vmatpush1.bf16.msra.mxu0 0
      %624 = vmatprep.subr.bf16.mxu0 0
      %625 = vmatpush1.bf16.msra.mxu0 0
      %626 = vmatprep.subr.bf16.mxu0 0
      %627 = vmatpush1.bf16.msra.mxu0 %v611
      %628 = vmatprep.subr.bf16.mxu0 0
      %629 = vmatpush1.bf16.msra.mxu0 %v610
      %630 = vmatprep.subr.bf16.mxu0 0
      %631 = vmatpush2.bf16.msra.mxu0 0
      %632 = vmatprep.subr.bf16.mxu0 0
      %633 = vmatpush2.bf16.msra.mxu0 0
      %634 = vmatprep.subr.bf16.mxu0 0
      %635 = vmatpush2.bf16.msra.mxu0 0
      %636 = vmatprep.subr.bf16.mxu0 0
      %637 = vmatpush2.bf16.msra.mxu0 0
      %638 = vmatprep.subr.bf16.mxu0 0
      %639 = vmatpush2.bf16.msra.mxu0 0
      %640 = vmatprep.subr.bf16.mxu0 0
      %641 = vmatpush2.bf16.msra.mxu0 0
      %642 = vmatprep.subr.bf16.mxu0 0
      %643 = vmatpush2.bf16.msra.mxu0 0
      %644 = vmatprep.subr.bf16.mxu0 0
      %645 = vmatpush2.bf16.msra.mxu0 0
      %646 = vmatprep.mubr.bf16.mxu0 0
      %647 = vmatmul.mubr.bf16.gmra.mxu0 %v339
      %v648 = vpop.f32.mrf.mxu0
      %v649 = vadd.f32 0.0, %v648
      %v650 = vpop.f32.mrf.mxu0
      %v651 = vpop.f32.mrf.mxu0
      %v652 = vadd.f32 0.0, %v651
      %v653 = vpop.f32.mrf.mxu0
      %654 = vmatprep.mubr.bf16.mxu0 0
      %655 = vmatmul.mubr.bf16.gmra.mxu0 %v342
      %v656 = vpop.f32.mrf.mxu0
      %v657 = vadd.f32 0.0, %v656
      %v658 = vpop.f32.mrf.mxu0
      %v659 = vpop.f32.mrf.mxu0
      %v660 = vadd.f32 0.0, %v659
      %v661 = vpop.f32.mrf.mxu0
      %662 = vdwg.mxu0
      %v667 = vunpack.c.l.b16 %v302
      %v668 = vunpack.c.l.b16 %v303
      %v669 = vunpack.c.l.b16 %v304
      %v670 = vunpack.c.l.b16 %v305
      %v671 = vpack.c.b16 %v668, %v667
      %v672 = vpack.c.b16 %v670, %v669
      %675 = vmatprep.subr.bf16.mxu0 0
      %676 = vmatpush1.bf16.msra.mxu0 0
      %677 = vmatprep.subr.bf16.mxu0 0
      %678 = vmatpush1.bf16.msra.mxu0 0
      %679 = vmatprep.subr.bf16.mxu0 0
      %680 = vmatpush1.bf16.msra.mxu0 0
      %681 = vmatprep.subr.bf16.mxu0 0
      %682 = vmatpush1.bf16.msra.mxu0 0
      %683 = vmatprep.subr.bf16.mxu0 0
      %684 = vmatpush1.bf16.msra.mxu0 0
      %685 = vmatprep.subr.bf16.mxu0 0
      %686 = vmatpush1.bf16.msra.mxu0 0
      %687 = vmatprep.subr.bf16.mxu0 0
      %688 = vmatpush1.bf16.msra.mxu0 %v672
      %689 = vmatprep.subr.bf16.mxu0 0
      %690 = vmatpush1.bf16.msra.mxu0 %v671
      %691 = vmatprep.subr.bf16.mxu0 0
      %692 = vmatpush2.bf16.msra.mxu0 0
      %693 = vmatprep.subr.bf16.mxu0 0
      %694 = vmatpush2.bf16.msra.mxu0 0
      %695 = vmatprep.subr.bf16.mxu0 0
      %696 = vmatpush2.bf16.msra.mxu0 0
      %697 = vmatprep.subr.bf16.mxu0 0
      %698 = vmatpush2.bf16.msra.mxu0 0
      %699 = vmatprep.subr.bf16.mxu0 0
      %700 = vmatpush2.bf16.msra.mxu0 0
      %701 = vmatprep.subr.bf16.mxu0 0
      %702 = vmatpush2.bf16.msra.mxu0 0
      %703 = vmatprep.subr.bf16.mxu0 0
      %704 = vmatpush2.bf16.msra.mxu0 0
      %705 = vmatprep.subr.bf16.mxu0 0
      %706 = vmatpush2.bf16.msra.mxu0 0
      %707 = vmatprep.mubr.bf16.mxu0 0
      %708 = vmatmul.mubr.bf16.gmra.mxu0 %v416
      %v709 = vpop.f32.mrf.mxu0
      %v710 = vadd.f32 %v649, %v709
      %v711 = vpop.f32.mrf.mxu0
      %v712 = vpop.f32.mrf.mxu0
      %v713 = vadd.f32 %v652, %v712
      %v714 = vpop.f32.mrf.mxu0
      %715 = vmatprep.mubr.bf16.mxu0 0
      %716 = vmatmul.mubr.bf16.gmra.mxu0 %v419
      %v717 = vpop.f32.mrf.mxu0
      %v718 = vadd.f32 %v657, %v717
      %v719 = vpop.f32.mrf.mxu0
      %v720 = vpop.f32.mrf.mxu0
      %v721 = vadd.f32 %v660, %v720
      %v722 = vpop.f32.mrf.mxu0
      %723 = vdwg.mxu0
      %s724 = scalar_lea.vmem [#allocation2], 8
      %v725 = vld [vmem:[%s724] sm:$0xf]
      %v726 = vld [vmem:[%s724 + $0x4] sm:$0xf]
      %v727 = vld [vmem:[%s724 + $0x8] sm:$0xf]
      %v728 = vld [vmem:[%s724 + $0xc] sm:$0xf]
      %s729 = scalar_lea.vmem %s2, 96
      %v730 = vld [vmem:[%s729] sm:$0xf]
      %v731 = vld [vmem:[%s729 + $0x4] sm:$0xf]
      %v732 = vld [vmem:[%s729 + $0x8] sm:$0xf]
      %v733 = vld [vmem:[%s729 + $0xc] sm:$0xf]
      %v738 = vunpack.c.l.b16 %v725
      %v739 = vunpack.c.l.b16 %v726
      %v740 = vunpack.c.l.b16 %v727
      %v741 = vunpack.c.l.b16 %v728
      %v742 = vpack.c.b16 %v739, %v738
      %v743 = vpack.c.b16 %v741, %v740
      %v748 = vunpack.c.l.b16 %v730
      %v749 = vunpack.c.l.b16 %v731
      %v750 = vunpack.c.l.b16 %v732
      %v751 = vunpack.c.l.b16 %v733
      %v752 = vpack.c.b16 %v749, %v748
      %v753 = vpack.c.b16 %v751, %v750
      %v757 = vsel %vm337, %v742, 0
      %v760 = vsel %vm337, %v743, 0
      %762 = vmatprep.subr.bf16.mxu0 0
      %763 = vmatpush1.bf16.msra.mxu0 0
      %764 = vmatprep.subr.bf16.mxu0 0
      %765 = vmatpush1.bf16.msra.mxu0 0
      %766 = vmatprep.subr.bf16.mxu0 0
      %767 = vmatpush1.bf16.msra.mxu0 0
      %768 = vmatprep.subr.bf16.mxu0 0
      %769 = vmatpush1.bf16.msra.mxu0 0
      %770 = vmatprep.subr.bf16.mxu0 0
      %771 = vmatpush1.bf16.msra.mxu0 0
      %772 = vmatprep.subr.bf16.mxu0 0
      %773 = vmatpush1.bf16.msra.mxu0 0
      %774 = vmatprep.subr.bf16.mxu0 0
      %775 = vmatpush1.bf16.msra.mxu0 %v753
      %776 = vmatprep.subr.bf16.mxu0 0
      %777 = vmatpush1.bf16.msra.mxu0 %v752
      %778 = vmatprep.subr.bf16.mxu0 0
      %779 = vmatpush2.bf16.msra.mxu0 0
      %780 = vmatprep.subr.bf16.mxu0 0
      %781 = vmatpush2.bf16.msra.mxu0 0
      %782 = vmatprep.subr.bf16.mxu0 0
      %783 = vmatpush2.bf16.msra.mxu0 0
      %784 = vmatprep.subr.bf16.mxu0 0
      %785 = vmatpush2.bf16.msra.mxu0 0
      %786 = vmatprep.subr.bf16.mxu0 0
      %787 = vmatpush2.bf16.msra.mxu0 0
      %788 = vmatprep.subr.bf16.mxu0 0
      %789 = vmatpush2.bf16.msra.mxu0 0
      %790 = vmatprep.subr.bf16.mxu0 0
      %791 = vmatpush2.bf16.msra.mxu0 0
      %792 = vmatprep.subr.bf16.mxu0 0
      %793 = vmatpush2.bf16.msra.mxu0 0
      %794 = vmatprep.mubr.bf16.mxu0 0
      %795 = vmatmul.mubr.bf16.gmra.mxu0 %v757
      %v796 = vpop.f32.mrf.mxu0
      %v797 = vadd.f32 0.0, %v796
      %v798 = vpop.f32.mrf.mxu0
      %v799 = vpop.f32.mrf.mxu0
      %v800 = vadd.f32 0.0, %v799
      %v801 = vpop.f32.mrf.mxu0
      %802 = vmatprep.mubr.bf16.mxu0 0
      %803 = vmatmul.mubr.bf16.gmra.mxu0 %v760
      %v804 = vpop.f32.mrf.mxu0
      %v805 = vadd.f32 0.0, %v804
      %v806 = vpop.f32.mrf.mxu0
      %v807 = vpop.f32.mrf.mxu0
      %v808 = vadd.f32 0.0, %v807
      %v809 = vpop.f32.mrf.mxu0
      %810 = vdwg.mxu0
      %v811 = vadd.f32 %v456, %v797
      %v812 = vadd.f32 %v459, %v800
      %v813 = vadd.f32 %v464, %v805
      %v814 = vadd.f32 %v467, %v808
      %s815 = scalar_lea.vmem %s2, 112
      %v816 = vld [vmem:[%s815] sm:$0xf]
      %v817 = vld [vmem:[%s815 + $0x4] sm:$0xf]
      %v818 = vld [vmem:[%s815 + $0x8] sm:$0xf]
      %v819 = vld [vmem:[%s815 + $0xc] sm:$0xf]
      %v824 = vunpack.c.l.b16 %v816
      %v825 = vunpack.c.l.b16 %v817
      %v826 = vunpack.c.l.b16 %v818
      %v827 = vunpack.c.l.b16 %v819
      %v828 = vpack.c.b16 %v825, %v824
      %v829 = vpack.c.b16 %v827, %v826
      %832 = vmatprep.subr.bf16.mxu0 0
      %833 = vmatpush1.bf16.msra.mxu0 0
      %834 = vmatprep.subr.bf16.mxu0 0
      %835 = vmatpush1.bf16.msra.mxu0 0
      %836 = vmatprep.subr.bf16.mxu0 0
      %837 = vmatpush1.bf16.msra.mxu0 0
      %838 = vmatprep.subr.bf16.mxu0 0
      %839 = vmatpush1.bf16.msra.mxu0 0
      %840 = vmatprep.subr.bf16.mxu0 0
      %841 = vmatpush1.bf16.msra.mxu0 0
      %842 = vmatprep.subr.bf16.mxu0 0
      %843 = vmatpush1.bf16.msra.mxu0 0
      %844 = vmatprep.subr.bf16.mxu0 0
      %845 = vmatpush1.bf16.msra.mxu0 %v829
      %846 = vmatprep.subr.bf16.mxu0 0
      %847 = vmatpush1.bf16.msra.mxu0 %v828
      %848 = vmatprep.subr.bf16.mxu0 0
      %849 = vmatpush2.bf16.msra.mxu0 0
      %850 = vmatprep.subr.bf16.mxu0 0
      %851 = vmatpush2.bf16.msra.mxu0 0
      %852 = vmatprep.subr.bf16.mxu0 0
      %853 = vmatpush2.bf16.msra.mxu0 0
      %854 = vmatprep.subr.bf16.mxu0 0
      %855 = vmatpush2.bf16.msra.mxu0 0
      %856 = vmatprep.subr.bf16.mxu0 0
      %857 = vmatpush2.bf16.msra.mxu0 0
      %858 = vmatprep.subr.bf16.mxu0 0
      %859 = vmatpush2.bf16.msra.mxu0 0
      %860 = vmatprep.subr.bf16.mxu0 0
      %861 = vmatpush2.bf16.msra.mxu0 0
      %862 = vmatprep.subr.bf16.mxu0 0
      %863 = vmatpush2.bf16.msra.mxu0 0
      %864 = vmatprep.mubr.bf16.mxu0 0
      %865 = vmatmul.mubr.bf16.gmra.mxu0 %v757
      %v866 = vpop.f32.mrf.mxu0
      %v867 = vadd.f32 0.0, %v866
      %v868 = vpop.f32.mrf.mxu0
      %v869 = vpop.f32.mrf.mxu0
      %v870 = vadd.f32 0.0, %v869
      %v871 = vpop.f32.mrf.mxu0
      %872 = vmatprep.mubr.bf16.mxu0 0
      %873 = vmatmul.mubr.bf16.gmra.mxu0 %v760
      %v874 = vpop.f32.mrf.mxu0
      %v875 = vadd.f32 0.0, %v874
      %v876 = vpop.f32.mrf.mxu0
      %v877 = vpop.f32.mrf.mxu0
      %v878 = vadd.f32 0.0, %v877
      %v879 = vpop.f32.mrf.mxu0
      %880 = vdwg.mxu0
      %v881 = vadd.f32 %v583, %v867
      %v882 = vadd.f32 %v586, %v870
      %v883 = vadd.f32 %v591, %v875
      %v884 = vadd.f32 %v594, %v878
      %s885 = scalar_lea.vmem %s2, 128
      %v886 = vld [vmem:[%s885] sm:$0xf]
      %v887 = vld [vmem:[%s885 + $0x4] sm:$0xf]
      %v888 = vld [vmem:[%s885 + $0x8] sm:$0xf]
      %v889 = vld [vmem:[%s885 + $0xc] sm:$0xf]
      %v894 = vunpack.c.l.b16 %v886
      %v895 = vunpack.c.l.b16 %v887
      %v896 = vunpack.c.l.b16 %v888
      %v897 = vunpack.c.l.b16 %v889
      %v898 = vpack.c.b16 %v895, %v894
      %v899 = vpack.c.b16 %v897, %v896
      %902 = vmatprep.subr.bf16.mxu0 0
      %903 = vmatpush1.bf16.msra.mxu0 0
      %904 = vmatprep.subr.bf16.mxu0 0
      %905 = vmatpush1.bf16.msra.mxu0 0
      %906 = vmatprep.subr.bf16.mxu0 0
      %907 = vmatpush1.bf16.msra.mxu0 0
      %908 = vmatprep.subr.bf16.mxu0 0
      %909 = vmatpush1.bf16.msra.mxu0 0
      %910 = vmatprep.subr.bf16.mxu0 0
      %911 = vmatpush1.bf16.msra.mxu0 0
      %912 = vmatprep.subr.bf16.mxu0 0
      %913 = vmatpush1.bf16.msra.mxu0 0
      %914 = vmatprep.subr.bf16.mxu0 0
      %915 = vmatpush1.bf16.msra.mxu0 %v899
      %916 = vmatprep.subr.bf16.mxu0 0
      %917 = vmatpush1.bf16.msra.mxu0 %v898
      %918 = vmatprep.subr.bf16.mxu0 0
      %919 = vmatpush2.bf16.msra.mxu0 0
      %920 = vmatprep.subr.bf16.mxu0 0
      %921 = vmatpush2.bf16.msra.mxu0 0
      %922 = vmatprep.subr.bf16.mxu0 0
      %923 = vmatpush2.bf16.msra.mxu0 0
      %924 = vmatprep.subr.bf16.mxu0 0
      %925 = vmatpush2.bf16.msra.mxu0 0
      %926 = vmatprep.subr.bf16.mxu0 0
      %927 = vmatpush2.bf16.msra.mxu0 0
      %928 = vmatprep.subr.bf16.mxu0 0
      %929 = vmatpush2.bf16.msra.mxu0 0
      %930 = vmatprep.subr.bf16.mxu0 0
      %931 = vmatpush2.bf16.msra.mxu0 0
      %932 = vmatprep.subr.bf16.mxu0 0
      %933 = vmatpush2.bf16.msra.mxu0 0
      %934 = vmatprep.mubr.bf16.mxu0 0
      %935 = vmatmul.mubr.bf16.gmra.mxu0 %v757
      %v936 = vpop.f32.mrf.mxu0
      %v937 = vadd.f32 0.0, %v936
      %v938 = vpop.f32.mrf.mxu0
      %v939 = vpop.f32.mrf.mxu0
      %v940 = vadd.f32 0.0, %v939
      %v941 = vpop.f32.mrf.mxu0
      %942 = vmatprep.mubr.bf16.mxu0 0
      %943 = vmatmul.mubr.bf16.gmra.mxu0 %v760
      %v944 = vpop.f32.mrf.mxu0
      %v945 = vadd.f32 0.0, %v944
      %v946 = vpop.f32.mrf.mxu0
      %v947 = vpop.f32.mrf.mxu0
      %v948 = vadd.f32 0.0, %v947
      %v949 = vpop.f32.mrf.mxu0
      %950 = vdwg.mxu0
      %v951 = vadd.f32 %v710, %v937
      %v952 = vadd.f32 %v713, %v940
      %v953 = vadd.f32 %v718, %v945
      %v954 = vadd.f32 %v721, %v948
      %v955 = vrot.slane %v811, 7
      %v956 = vrot.slane %v812, 7
      %v957 = vrot.slane %v813, 7
      %v958 = vrot.slane %v814, 7
      %v959 = vrot.slane %v951, 1
      %v960 = vrot.slane %v952, 1
      %v961 = vrot.slane %v953, 1
      %v962 = vrot.slane %v954, 1
      %v963 = vlaneseq
      %v964 = vshrl.u32 %v963, 7
      %vm965 = vcmp.gt.s32.totalorder %v964, 0
      %v966 = vsel %vm965, 1, 0
      %vm967 = vcmp.eq.s32.totalorder %v966, 1
      %v968 = vsel %vm967, %v955, 0.0
      %v969 = vsel %vm967, %v956, 0.0
      %v970 = vsel %vm967, %v957, 0.0
      %v971 = vsel %vm967, %v958, 0.0
      %v972 = vadd.f32 %v881, %v968
      %v973 = vadd.f32 %v882, %v969
      %v974 = vadd.f32 %v883, %v970
      %v975 = vadd.f32 %v884, %v971
      %vm976 = vcmp.lt.s32.totalorder %v964, 7
      %v977 = vsel %vm976, 1, 0
      %vm978 = vcmp.eq.s32.totalorder %v977, 1
      %v979 = vsel %vm978, %v959, 0.0
      %v980 = vsel %vm978, %v960, 0.0
      %v981 = vsel %vm978, %v961, 0.0
      %v982 = vsel %vm978, %v962, 0.0
      %v983 = vadd.f32 %v972, %v979
      %v984 = vadd.f32 %v973, %v980
      %v985 = vadd.f32 %v974, %v981
      %v986 = vadd.f32 %v975, %v982
      %v987 = vld [vmem:[%s3] sm:$0x1]
      %v989 = vlaneseq
      %v990 = vshrl.u32 %v989, 7
      %v991 = vsub.s32 0, %v990
      %v992 = vrot.slane %v987, %v991
      %v994 = vadd.f32 %v983, %v992
      %v995 = vadd.f32 %v984, %v992
      %v996 = vadd.f32 %v985, %v992
      %v997 = vadd.f32 %v986, %v992
      %v998 = vpack.c.bf16 %v994, %v994
      %v999 = vpack.c.bf16 %v995, %v995
      %v1000 = vpack.c.bf16 %v996, %v996
      %v1001 = vpack.c.bf16 %v997, %v997
      %vm1002 = vcmask 125952
      %1003 = vst.msk [vmem:[%s269] sm:$0xf] %vm1002, %v998
      %1004 = vst.msk [vmem:[%s269 + $0x4] sm:$0xf] %vm1002, %v999
      %1005 = vst.msk [vmem:[%s269 + $0x8] sm:$0xf] %vm1002, %v1000
      %1006 = vst.msk [vmem:[%s269 + $0xc] sm:$0xf] %vm1002, %v1001
      %s1007 = smul.u32 4, %s20
      %p1008 = scmp.lt.s32.totalorder %s19, 1
      %s1009 = scalar_select %p1008, %s19, 1
      %p1010 = scmp.lt.s32.totalorder %s1007, 7
      %s1011 = scalar_select %p1010, %s1007, 7
      %s1012 = smul.addr %s1009, 8
      %s1013 = sadd.s32 %s1011, %s1012
      %s1014 = smul.addr %s1013, 4
      %s1015 = scalar_lea.vmem %s4, %s1014
      // Predicated region
      $region37: #{depth_pro_forward.9} parent=35 // pred_check
        %p1016 = pneg %p145
      $region38: #{depth_pro_forward.9} parent=35 // pred_check_branch
        %1018 = sbr.rel (%p1016) target = $region40
      $region39: #{depth_pro_forward.9} parent=35 // pred_region
        %s1019 = smul.u32 4, %s20
      $region40: #{depth_pro_forward.9} parent=35 // pred_fallthru
        _
    $region36: #{depth_pro_forward.9} parent=5 // pred_fallthru
      _
    %p1020 = scmp.le.s32.totalorder 2, %s10
    // Predicated region
    $region41: #{depth_pro_forward.9} parent=5 // pred_check
      %p1021 = pneg %p1020
    $region42: #{depth_pro_forward.9} parent=5 // pred_check_branch
      %1023 = sbr.rel (%p1021) target = $region44
    $region43: #{depth_pro_forward.9} parent=5 // pred_region
      %s1024 = ssub.s32 %s10, 2
      // Predicated region
      $region45: #{depth_pro_forward.9} parent=43 // pred_check
        %p1025 = pneg %p151
      $region46: #{depth_pro_forward.9} parent=43 // pred_check_branch
        %1027 = sbr.rel (%p1025) target = $region48
      $region47: #{depth_pro_forward.9} parent=43 // pred_region
        %s1028 = smul.u32 4, %s22
        %p1029 = scmp.lt.s32.totalorder %s21, 1
        %s1030 = scalar_select %p1029, %s21, 1
        %p1031 = scmp.lt.s32.totalorder %s1028, 7
        %s1032 = scalar_select %p1031, %s1028, 7
        %s1033 = smul.addr %s1030, 8
        %s1034 = sadd.s32 %s1032, %s1033
        %s1035 = smul.addr %s1034, 4
        %s1036 = scalar_lea.vmem %s4, %s1035
      $region48: #{depth_pro_forward.9} parent=43 // pred_fallthru
        _
    $region44: #{depth_pro_forward.9} parent=5 // pred_fallthru
      _
  $region6: #{depth_pro_forward.9} parent=0 // loop_footer
    %s14 = sadd.s32 1, %s10
  $region7: #{depth_pro_forward.9} parent=0 // loop_footer_branch
    %9 = sbr.rel target = $region3
  $region8: #{depth_pro_forward.9} parent=0 // loop_exit
    _

// kernel: depth_pro_forward.8
$region0: #{depth_pro_forward.8}
  #allocation0 [shape = 'u32[]', space=smem, size = 0x4, offset = 0x4, fixed_abs, tag = 'smem constant byte address 0x4 - core index']
  #allocation1 [shape = 'u32[144,128]{1,0:T(1,128)}', space=vmem, size = 0x12000, scoped, tag = 'internal scratch']
  %s0 = inlined_call_operand.vmem [shape: bf16[2,8,8,32], index: 0, kind: input, shape index: {}]
  %s1 = inlined_call_operand.vmem [shape: bf16[32,32], index: 1, kind: input, shape index: {}]
  %s2 = inlined_call_operand.vmem [shape: f32[1,32], index: 2, kind: input, shape index: {}]
  %s3 = inlined_call_operand.vmem [shape: bf16[2,8,8,32], index: 3, kind: output, shape index: {}]
  %s4 = sld [smem:[#allocation0]]
  $region45: #{depth_pro_forward.8} parent=0
    _
  %s6 = ssub.s32 1, %s4
  %s7 = scalar_select 0, %s6, %s4
  loop: start=0, step=1, limit=6
  $region2: #{depth_pro_forward.8} parent=0 // loop_pre_header
    _
  $region3: #{depth_pro_forward.8} parent=0 // loop_header
    %s9 = sphi 0, %s13
    %p10 = scmp.ge.s32.totalorder %s9, 6
    %s16 = sphi 0, %s28
    %s17 = sphi 0, %s24
    %s18 = sphi 0, %s16
    %s19 = sphi 0, %s17
    %s20 = sphi 0, %s18
    %s21 = sphi 0, %s19
    %s33 = sphi 0, %s35
    %s36 = sphi 0, %s33
    %s37 = sphi 0, %s36
    %s53 = sphi 0, %s37
    %s57 = sphi 0, %s57
    %s59 = sphi 0, %s57
    %s60 = sphi 0, %s59
    %s74 = sphi 0, %s60
    %s78 = sphi 0, %s78
    %s80 = sphi 0, %s78
    %s81 = sphi 0, %s80
    %s95 = sphi 0, %s81
    %s103 = sphi 0, %s105
    %s106 = sphi 0, %s103
    %s107 = sphi 0, %s106
    %s123 = sphi 0, %s107
  $region4: #{depth_pro_forward.8} parent=0 // loop_header_branch
    %12 = sbr.rel (%p10) target = $region8
  $region5: #{depth_pro_forward.8} parent=0 // loop_body
    %s14 = ssub.s32 %s9, 1
    %s15 = ssub.s32 %s9, 2
    %s22 = sadd.s32 1, %s17
    %p23 = scmp.ge.s32.totalorder %s22, 2
    %s24 = scalar_select %p23, 0, %s22
    %s25 = sadd.s32 1, %s16
    %s26 = scalar_select %p23, %s25, %s16
    %p27 = scmp.ge.s32.totalorder %s26, 2
    %s28 = scalar_select %p27, 0, %s26
    %s29 = ssub.s32 %s16, %s28
    %s30 = ssub.s32 %s17, %s24
    %s31 = sor.u32 %s29, %s30
    %p32 = scmp.eq.s32.totalorder %s31, 0
    %s34 = sadd.s32 %s33, 1
    %s35 = scalar_select %p32, %s33, %s34
    %p38 = pneg %p32
    %p39 = scmp.eq.s32.totalorder %s9, 3
    %p40 = por %p38, %p39
    %p41 = scmp.ne.s32.totalorder %s33, %s36
    %p42 = scmp.eq.s32.totalorder %s9, 0
    %p43 = por %p41, %p42
    %p44 = scmp.ne.s32.totalorder %s33, %s36
    %p45 = scmp.eq.s32.totalorder %s14, 3
    %p46 = por %p44, %p45
    %p47 = scmp.ne.s32.totalorder %s36, %s37
    %p48 = scmp.eq.s32.totalorder %s14, 0
    %p49 = por %p47, %p48
    %p50 = scmp.ne.s32.totalorder %s36, %s37
    %p51 = scmp.eq.s32.totalorder %s15, 3
    %p52 = por %p50, %p51
    %p54 = scmp.ne.s32.totalorder %s37, %s53
    %p55 = scmp.eq.s32.totalorder %s15, 0
    %p56 = por %p54, %p55
    %s58 = sadd.s32 %s57, 1
    %p61 = scmp.eq.s32.totalorder %s9, 3
    %p62 = scmp.ne.s32.totalorder %s57, %s59
    %p63 = scmp.eq.s32.totalorder %s9, 0
    %p64 = por %p62, %p63
    %p65 = scmp.ne.s32.totalorder %s57, %s59
    %p66 = scmp.eq.s32.totalorder %s14, 3
    %p67 = por %p65, %p66
    %p68 = scmp.ne.s32.totalorder %s59, %s60
    %p69 = scmp.eq.s32.totalorder %s14, 0
    %p70 = por %p68, %p69
    %p71 = scmp.ne.s32.totalorder %s59, %s60
    %p72 = scmp.eq.s32.totalorder %s15, 3
    %p73 = por %p71, %p72
    %p75 = scmp.ne.s32.totalorder %s60, %s74
    %p76 = scmp.eq.s32.totalorder %s15, 0
    %p77 = por %p75, %p76
    %s79 = sadd.s32 %s78, 1
    %p82 = scmp.eq.s32.totalorder %s9, 3
    %p83 = scmp.ne.s32.totalorder %s78, %s80
    %p84 = scmp.eq.s32.totalorder %s9, 0
    %p85 = por %p83, %p84
    %p86 = scmp.ne.s32.totalorder %s78, %s80
    %p87 = scmp.eq.s32.totalorder %s14, 3
    %p88 = por %p86, %p87
    %p89 = scmp.ne.s32.totalorder %s80, %s81
    %p90 = scmp.eq.s32.totalorder %s14, 0
    %p91 = por %p89, %p90
    %p92 = scmp.ne.s32.totalorder %s80, %s81
    %p93 = scmp.eq.s32.totalorder %s15, 3
    %p94 = por %p92, %p93
    %p96 = scmp.ne.s32.totalorder %s81, %s95
    %p97 = scmp.eq.s32.totalorder %s15, 0
    %p98 = por %p96, %p97
    %s99 = ssub.s32 %s16, %s28
    %s100 = ssub.s32 %s17, %s24
    %s101 = sor.u32 %s99, %s100
    %p102 = scmp.eq.s32.totalorder %s101, 0
    %s104 = sadd.s32 %s103, 1
    %s105 = scalar_select %p102, %s103, %s104
    %p108 = pneg %p102
    %p109 = scmp.eq.s32.totalorder %s9, 3
    %p110 = por %p108, %p109
    %p111 = scmp.ne.s32.totalorder %s103, %s106
    %p112 = scmp.eq.s32.totalorder %s9, 0
    %p113 = por %p111, %p112
    %p114 = scmp.ne.s32.totalorder %s103, %s106
    %p115 = scmp.eq.s32.totalorder %s14, 3
    %p116 = por %p114, %p115
    %p117 = scmp.ne.s32.totalorder %s106, %s107
    %p118 = scmp.eq.s32.totalorder %s14, 0
    %p119 = por %p117, %p118
    %p120 = scmp.ne.s32.totalorder %s106, %s107
    %p121 = scmp.eq.s32.totalorder %s15, 3
    %p122 = por %p120, %p121
    %p124 = scmp.ne.s32.totalorder %s107, %s123
    %p125 = scmp.eq.s32.totalorder %s15, 0
    %p126 = por %p124, %p125
    %p127 = scmp.le.s32.totalorder 1, %s9
    %p128 = scmp.lt.s32.totalorder %s9, 5
    %p129 = pnand %p127, %p128
    %p130 = pneg %p129
    // Predicated region
    $region9: #{depth_pro_forward.8} parent=5 // pred_check
      _
    $region10: #{depth_pro_forward.8} parent=5 // pred_check_branch
      %132 = sbr.rel (%p129) target = $region12
    $region11: #{depth_pro_forward.8} parent=5 // pred_region
      %s133 = ssub.s32 %s9, 1
      // Predicated region
      $region13: #{depth_pro_forward.8} parent=11 // pred_check
        %p134 = pneg %p70
      $region14: #{depth_pro_forward.8} parent=11 // pred_check_branch
        %136 = sbr.rel (%p134) target = $region16
      $region15: #{depth_pro_forward.8} parent=11 // pred_region
        _
      $region16: #{depth_pro_forward.8} parent=11 // pred_fallthru
        _
      // Predicated region
      $region17: #{depth_pro_forward.8} parent=11 // pred_check
        %p137 = pneg %p91
      $region18: #{depth_pro_forward.8} parent=11 // pred_check_branch
        %139 = sbr.rel (%p137) target = $region20
      $region19: #{depth_pro_forward.8} parent=11 // pred_region
        _
      $region20: #{depth_pro_forward.8} parent=11 // pred_fallthru
        _
    $region12: #{depth_pro_forward.8} parent=5 // pred_fallthru
      _
    %p140 = scmp.lt.s32.totalorder %s9, 4
    // Predicated region
    $region21: #{depth_pro_forward.8} parent=5 // pred_check
      %p141 = pneg %p140
    $region22: #{depth_pro_forward.8} parent=5 // pred_check_branch
      %143 = sbr.rel (%p141) target = $region24
    $region23: #{depth_pro_forward.8} parent=5 // pred_region
      // Predicated region
      $region25: #{depth_pro_forward.8} parent=23 // pred_check
        %p144 = pneg %p43
      $region26: #{depth_pro_forward.8} parent=23 // pred_check_branch
        %146 = sbr.rel (%p144) target = $region28
      $region27: #{depth_pro_forward.8} parent=23 // pred_region
        %s147 = smul.u32 4, %s17
        %p148 = scmp.lt.s32.totalorder %s16, 1
        %s149 = scalar_select %p148, %s16, 1
        %p150 = scmp.lt.s32.totalorder %s147, 7
        %s151 = scalar_select %p150, %s147, 7
        %s152 = smul.addr %s149, 8
        %s153 = sadd.s32 %s151, %s152
        %s154 = smul.addr %s153, 4
        %s155 = scalar_lea.vmem %s0, %s154
        %s156 = smul.u32 4, %s17
      $region28: #{depth_pro_forward.8} parent=23 // pred_fallthru
        _
    $region24: #{depth_pro_forward.8} parent=5 // pred_fallthru
      _
    %p157 = scmp.le.s32.totalorder 1, %s9
    %p158 = scmp.lt.s32.totalorder %s9, 5
    %p159 = pnand %p157, %p158
    %p160 = pneg %p159
    // Predicated region
    $region29: #{depth_pro_forward.8} parent=5 // pred_check
      _
    $region30: #{depth_pro_forward.8} parent=5 // pred_check_branch
      %162 = sbr.rel (%p159) target = $region32
    $region31: #{depth_pro_forward.8} parent=5 // pred_region
      %s163 = ssub.s32 %s9, 1
      %s164 = smul.u32 4, %s19
      %p165 = scmp.lt.s32.totalorder %s18, 1
      %s166 = scalar_select %p165, %s18, 1
      %p167 = scmp.lt.s32.totalorder %s164, 7
      %s168 = scalar_select %p167, %s164, 7
      %s169 = smul.addr %s166, 8
      %s170 = sadd.s32 %s168, %s169
      %s171 = smul.addr %s170, 4
      %s172 = scalar_lea.vmem %s0, %s171
      %p173 = pneg %p49
      %p174 = pneg %p46
      %p175 = pneg %p70
      %p176 = pneg %p67
      %p177 = pneg %p91
      %p178 = pneg %p88
      %p179 = pneg %p119
      %p180 = pneg %p116
      %s181 = smul.u32 4, %s19
      %p182 = scmp.lt.s32.totalorder %s18, 1
      %s183 = scalar_select %p182, %s18, 1
      %p184 = scmp.lt.s32.totalorder %s181, 7
      %s185 = scalar_select %p184, %s181, 7
      %s186 = smul.addr %s183, 8
      %s187 = sadd.s32 %s185, %s186
      %s188 = smul.addr %s187, 4
      %s189 = scalar_lea.vmem %s3, %s188
      %s190 = smul.u32 4, %s19
      %p191 = scmp.lt.s32.totalorder %s18, 1
      %s192 = scalar_select %p191, %s18, 1
      %p193 = scmp.lt.s32.totalorder %s190, 7
      %s194 = scalar_select %p193, %s190, 7
      %s195 = smul.addr %s192, 8
      %s196 = sadd.s32 %s194, %s195
      %s197 = smul.addr %s196, 4
      %s198 = scalar_lea.vmem %s0, %s197
      %s199 = smul.u32 4, %s19
      %s200 = smul.u32 4, %s19
      %p201 = scmp.lt.s32.totalorder %s18, 1
      %s202 = scalar_select %p201, %s18, 1
      %p203 = scmp.lt.s32.totalorder %s200, 7
      %s204 = scalar_select %p203, %s200, 7
      %s205 = smul.addr %s202, 8
      %s206 = sadd.s32 %s204, %s205
      %s207 = smul.addr %s206, 4
      %s208 = scalar_lea.vmem %s3, %s207
      %s209 = smul.u32 4, %s19
      %v211 = vld [vmem:[%s198] sm:$0xf]
      %v212 = vld [vmem:[%s198 + $0x4] sm:$0xf]
      %v213 = vld [vmem:[%s198 + $0x8] sm:$0xf]
      %v214 = vld [vmem:[%s198 + $0xc] sm:$0xf]
      %v215 = vld [vmem:[%s1] sm:$0xf]
      %v216 = vld [vmem:[%s1 + $0x4] sm:$0xf]
      %v217 = vld [vmem:[%s1 + $0x8] sm:$0xf]
      %v218 = vld [vmem:[%s1 + $0xc] sm:$0xf]
      %v219 = vld [vmem:[%s2] sm:$0x1]
      %v221 = vlaneseq
      %v222 = vshrl.u32 %v221, 7
      %v223 = vsub.s32 0, %v222
      %v224 = vrot.slane %v219, %v223
      %v230 = vunpack.c.l.b16 %v211
      %v231 = vunpack.c.l.b16 %v212
      %v232 = vunpack.c.l.b16 %v213
      %v233 = vunpack.c.l.b16 %v214
      %v234 = vpack.c.b16 %v231, %v230
      %v235 = vpack.c.b16 %v233, %v232
      %v240 = vunpack.c.l.b16 %v215
      %v241 = vunpack.c.l.b16 %v216
      %v242 = vunpack.c.l.b16 %v217
      %v243 = vunpack.c.l.b16 %v218
      %v244 = vpack.c.b16 %v241, %v240
      %v245 = vpack.c.b16 %v243, %v242
      %vm248 = vcmask 261120
      %v250 = vsel %vm248, %v234, 0
      %v253 = vsel %vm248, %v235, 0
      %255 = vmatprep.subr.bf16.mxu0 0
      %256 = vmatpush1.bf16.msra.mxu0 0
      %257 = vmatprep.subr.bf16.mxu0 0
      %258 = vmatpush1.bf16.msra.mxu0 0
      %259 = vmatprep.subr.bf16.mxu0 0
      %260 = vmatpush1.bf16.msra.mxu0 0
      %261 = vmatprep.subr.bf16.mxu0 0
      %262 = vmatpush1.bf16.msra.mxu0 0
      %263 = vmatprep.subr.bf16.mxu0 0
      %264 = vmatpush1.bf16.msra.mxu0 0
      %265 = vmatprep.subr.bf16.mxu0 0
      %266 = vmatpush1.bf16.msra.mxu0 0
      %267 = vmatprep.subr.bf16.mxu0 0
      %268 = vmatpush1.bf16.msra.mxu0 %v245
      %269 = vmatprep.subr.bf16.mxu0 0
      %270 = vmatpush1.bf16.msra.mxu0 %v244
      %271 = vmatprep.subr.bf16.mxu0 0
      %272 = vmatpush2.bf16.msra.mxu0 0
      %273 = vmatprep.subr.bf16.mxu0 0
      %274 = vmatpush2.bf16.msra.mxu0 0
      %275 = vmatprep.subr.bf16.mxu0 0
      %276 = vmatpush2.bf16.msra.mxu0 0
      %277 = vmatprep.subr.bf16.mxu0 0
      %278 = vmatpush2.bf16.msra.mxu0 0
      %279 = vmatprep.subr.bf16.mxu0 0
      %280 = vmatpush2.bf16.msra.mxu0 0
      %281 = vmatprep.subr.bf16.mxu0 0
      %282 = vmatpush2.bf16.msra.mxu0 0
      %283 = vmatprep.subr.bf16.mxu0 0
      %284 = vmatpush2.bf16.msra.mxu0 0
      %285 = vmatprep.subr.bf16.mxu0 0
      %286 = vmatpush2.bf16.msra.mxu0 0
      %287 = vmatprep.mubr.bf16.mxu0 0
      %288 = vmatmul.mubr.bf16.gmra.mxu0 %v250
      %v289 = vpop.f32.mrf.mxu0
      %v290 = vadd.f32 %v224, %v289
      %v291 = vpop.f32.mrf.mxu0
      %v292 = vpop.f32.mrf.mxu0
      %v293 = vadd.f32 %v224, %v292
      %v294 = vpop.f32.mrf.mxu0
      %295 = vmatprep.mubr.bf16.mxu0 0
      %296 = vmatmul.mubr.bf16.gmra.mxu0 %v253
      %v297 = vpop.f32.mrf.mxu0
      %v298 = vadd.f32 %v224, %v297
      %v299 = vpop.f32.mrf.mxu0
      %v300 = vpop.f32.mrf.mxu0
      %v301 = vadd.f32 %v224, %v300
      %v302 = vpop.f32.mrf.mxu0
      %303 = vdwg.mxu0
      %v304 = vpack.c.bf16 %v290, %v290
      %v305 = vpack.c.bf16 %v293, %v293
      %v306 = vpack.c.bf16 %v298, %v298
      %v307 = vpack.c.bf16 %v301, %v301
      %vm308 = vcmask 257024
      %309 = vst.msk [vmem:[%s208] sm:$0xf] %vm308, %v304
      %310 = vst.msk [vmem:[%s208 + $0x4] sm:$0xf] %vm308, %v305
      %311 = vst.msk [vmem:[%s208 + $0x8] sm:$0xf] %vm308, %v306
      %312 = vst.msk [vmem:[%s208 + $0xc] sm:$0xf] %vm308, %v307
      %s313 = smul.u32 4, %s19
      %p314 = scmp.lt.s32.totalorder %s18, 1
      %s315 = scalar_select %p314, %s18, 1
      %p316 = scmp.lt.s32.totalorder %s313, 7
      %s317 = scalar_select %p316, %s313, 7
      %s318 = smul.addr %s315, 8
      %s319 = sadd.s32 %s317, %s318
      %s320 = smul.addr %s319, 4
      %s321 = scalar_lea.vmem %s3, %s320
      // Predicated region
      $region33: #{depth_pro_forward.8} parent=31 // pred_check
        %p322 = pneg %p116
      $region34: #{depth_pro_forward.8} parent=31 // pred_check_branch
        %324 = sbr.rel (%p322) target = $region36
      $region35: #{depth_pro_forward.8} parent=31 // pred_region
        %s325 = smul.u32 4, %s19
      $region36: #{depth_pro_forward.8} parent=31 // pred_fallthru
        _
    $region32: #{depth_pro_forward.8} parent=5 // pred_fallthru
      _
    %p326 = scmp.le.s32.totalorder 2, %s9
    // Predicated region
    $region37: #{depth_pro_forward.8} parent=5 // pred_check
      %p327 = pneg %p326
    $region38: #{depth_pro_forward.8} parent=5 // pred_check_branch
      %329 = sbr.rel (%p327) target = $region40
    $region39: #{depth_pro_forward.8} parent=5 // pred_region
      %s330 = ssub.s32 %s9, 2
      // Predicated region
      $region41: #{depth_pro_forward.8} parent=39 // pred_check
        %p331 = pneg %p122
      $region42: #{depth_pro_forward.8} parent=39 // pred_check_branch
        %333 = sbr.rel (%p331) target = $region44
      $region43: #{depth_pro_forward.8} parent=39 // pred_region
        %s334 = smul.u32 4, %s21
        %p335 = scmp.lt.s32.totalorder %s20, 1
        %s336 = scalar_select %p335, %s20, 1
        %p337 = scmp.lt.s32.totalorder %s334, 7
        %s338 = scalar_select %p337, %s334, 7
        %s339 = smul.addr %s336, 8
        %s340 = sadd.s32 %s338, %s339
        %s341 = smul.addr %s340, 4
        %s342 = scalar_lea.vmem %s3, %s341
      $region44: #{depth_pro_forward.8} parent=39 // pred_fallthru
        _
    $region40: #{depth_pro_forward.8} parent=5 // pred_fallthru
      _
  $region6: #{depth_pro_forward.8} parent=0 // loop_footer
    %s13 = sadd.s32 1, %s9
  $region7: #{depth_pro_forward.8} parent=0 // loop_footer_branch
    %8 = sbr.rel target = $region3
  $region8: #{depth_pro_forward.8} parent=0 // loop_exit
    _

// kernel: depth_pro_forward.11
$region0: #{depth_pro_forward.11}
  #allocation0 [shape = 'u32[]', space=smem, size = 0x4, offset = 0x4, fixed_abs, tag = 'smem constant byte address 0x4 - core index']
  #allocation1 [shape = 'u32[144,128]{1,0:T(1,128)}', space=vmem, size = 0x12000, scoped, tag = 'internal scratch']
  #allocation2 [shape = 'bf16[10,16,16]{2,1,0:T(8,128)(2,1)}', space=vmem, size = 0xa000, scoped, tag = 'scratch operand']
  #allocation3 [shape = 'f32[1,1]{1,0:T(1,128)S(1)}', space=vmem, size = 0x200, scoped, tag = 'scoped memory for depth_pro_forward.11']
  %s0 = inlined_call_operand.vmem [shape: bf16[2,16,16,16], index: 0, kind: input, shape index: {}]
  %s1 = inlined_call_operand.vmem [shape: bf16[2,2,2,16,16], index: 1, kind: input, shape index: {}]
  %s2 = inlined_call_operand.vmem [shape: bf16[3,3,16,8], index: 2, kind: input, shape index: {}]
  %s3 = inlined_call_operand.vmem [shape: f32[1,8], index: 3, kind: input, shape index: {}]
  %s4 = inlined_call_operand.vmem [shape: f32[1,8], index: 4, kind: input, shape index: {}]
  %s5 = inlined_call_operand.<no memory space> [shape: f32[1,1], index: 5, kind: input, shape index: {}]
  %s6 = inlined_call_operand.hbm [shape: f32[2,16,16], index: 6, kind: output, shape index: {}]
  %s7 = sld [smem:[#allocation0]]
  $region57: #{depth_pro_forward.11} parent=0
    _
  %s9 = ssub.s32 1, %s7
  %s10 = scalar_select 0, %s9, %s7
  %v11 = vstv %s5
  %12 = vst [vmem:[#allocation3] sm:$0x1] %v11
  $region1: #{depth_pro_forward.11} parent=0
    #allocation4 [shape = 'u8[8192]{0}', space=vmem, size = 0x2000, scoped, tag = 'output window, operand 0']
    #allocation5 [shape = 's32[2]{0}', space=sflag, size = 0x8, scoped, tag = 'scoped memory for depth_pro_forward.11']
    %13 = vsyncpa [#allocation5], 0
    %s14 = scalar_lea.sflag [#allocation5], 1
    %15 = vsyncpa %s14, 0
    loop: start=0, step=1, limit=6
    $region2: #{depth_pro_forward.11} parent=1 // loop_pre_header
      _
    $region3: #{depth_pro_forward.11} parent=1 // loop_header
      %s17 = sphi 0, %s21
      %p18 = scmp.ge.s32.totalorder %s17, 6
      %s24 = sphi 0, %s36
      %s25 = sphi 0, %s32
      %s26 = sphi 0, %s24
      %s27 = sphi 0, %s25
      %s28 = sphi 0, %s26
      %s29 = sphi 0, %s27
      %s41 = sphi 0, %s43
      %s44 = sphi 0, %s41
      %s45 = sphi 0, %s44
      %s61 = sphi 0, %s45
      %s69 = sphi 0, %s71
      %s72 = sphi 0, %s69
      %s73 = sphi 0, %s72
      %s89 = sphi 0, %s73
      %s93 = sphi 0, %s93
      %s95 = sphi 0, %s93
      %s96 = sphi 0, %s95
      %s110 = sphi 0, %s96
      %s114 = sphi 0, %s114
      %s116 = sphi 0, %s114
      %s117 = sphi 0, %s116
      %s131 = sphi 0, %s117
      %s135 = sphi 0, %s135
      %s137 = sphi 0, %s135
      %s138 = sphi 0, %s137
      %s152 = sphi 0, %s138
      %s156 = sphi 0, %s156
      %s158 = sphi 0, %s156
      %s159 = sphi 0, %s158
      %s173 = sphi 0, %s159
      %s181 = sphi 0, %s183
      %s184 = sphi 0, %s181
      %s185 = sphi 0, %s184
      %s201 = sphi 0, %s185
    $region4: #{depth_pro_forward.11} parent=1 // loop_header_branch
      %20 = sbr.rel (%p18) target = $region8
    $region5: #{depth_pro_forward.11} parent=1 // loop_body
      %s22 = ssub.s32 %s17, 1
      %s23 = ssub.s32 %s17, 2
      %s30 = sadd.s32 1, %s25
      %p31 = scmp.ge.s32.totalorder %s30, 2
      %s32 = scalar_select %p31, 0, %s30
      %s33 = sadd.s32 1, %s24
      %s34 = scalar_select %p31, %s33, %s24
      %p35 = scmp.ge.s32.totalorder %s34, 2
      %s36 = scalar_select %p35, 0, %s34
      %s37 = ssub.s32 %s24, %s36
      %s38 = ssub.s32 %s25, %s32
      %s39 = sor.u32 %s37, %s38
      %p40 = scmp.eq.s32.totalorder %s39, 0
      %s42 = sadd.s32 %s41, 1
      %s43 = scalar_select %p40, %s41, %s42
      %p46 = pneg %p40
      %p47 = scmp.eq.s32.totalorder %s17, 3
      %p48 = por %p46, %p47
      %p49 = scmp.ne.s32.totalorder %s41, %s44
      %p50 = scmp.eq.s32.totalorder %s17, 0
      %p51 = por %p49, %p50
      %p52 = scmp.ne.s32.totalorder %s41, %s44
      %p53 = scmp.eq.s32.totalorder %s22, 3
      %p54 = por %p52, %p53
      %p55 = scmp.ne.s32.totalorder %s44, %s45
      %p56 = scmp.eq.s32.totalorder %s22, 0
      %p57 = por %p55, %p56
      %p58 = scmp.ne.s32.totalorder %s44, %s45
      %p59 = scmp.eq.s32.totalorder %s23, 3
      %p60 = por %p58, %p59
      %p62 = scmp.ne.s32.totalorder %s45, %s61
      %p63 = scmp.eq.s32.totalorder %s23, 0
      %p64 = por %p62, %p63
      %s65 = ssub.s32 %s24, %s36
      %s66 = ssub.s32 %s25, %s32
      %s67 = sor.u32 %s65, %s66
      %p68 = scmp.eq.s32.totalorder %s67, 0
      %s70 = sadd.s32 %s69, 1
      %s71 = scalar_select %p68, %s69, %s70
      %p74 = pneg %p68
      %p75 = scmp.eq.s32.totalorder %s17, 3
      %p76 = por %p74, %p75
      %p77 = scmp.ne.s32.totalorder %s69, %s72
      %p78 = scmp.eq.s32.totalorder %s17, 0
      %p79 = por %p77, %p78
      %p80 = scmp.ne.s32.totalorder %s69, %s72
      %p81 = scmp.eq.s32.totalorder %s22, 3
      %p82 = por %p80, %p81
      %p83 = scmp.ne.s32.totalorder %s72, %s73
      %p84 = scmp.eq.s32.totalorder %s22, 0
      %p85 = por %p83, %p84
      %p86 = scmp.ne.s32.totalorder %s72, %s73
      %p87 = scmp.eq.s32.totalorder %s23, 3
      %p88 = por %p86, %p87
      %p90 = scmp.ne.s32.totalorder %s73, %s89
      %p91 = scmp.eq.s32.totalorder %s23, 0
      %p92 = por %p90, %p91
      %s94 = sadd.s32 %s93, 1
      %p97 = scmp.eq.s32.totalorder %s17, 3
      %p98 = scmp.ne.s32.totalorder %s93, %s95
      %p99 = scmp.eq.s32.totalorder %s17, 0
      %p100 = por %p98, %p99
      %p101 = scmp.ne.s32.totalorder %s93, %s95
      %p102 = scmp.eq.s32.totalorder %s22, 3
      %p103 = por %p101, %p102
      %p104 = scmp.ne.s32.totalorder %s95, %s96
      %p105 = scmp.eq.s32.totalorder %s22, 0
      %p106 = por %p104, %p105
      %p107 = scmp.ne.s32.totalorder %s95, %s96
      %p108 = scmp.eq.s32.totalorder %s23, 3
      %p109 = por %p107, %p108
      %p111 = scmp.ne.s32.totalorder %s96, %s110
      %p112 = scmp.eq.s32.totalorder %s23, 0
      %p113 = por %p111, %p112
      %s115 = sadd.s32 %s114, 1
      %p118 = scmp.eq.s32.totalorder %s17, 3
      %p119 = scmp.ne.s32.totalorder %s114, %s116
      %p120 = scmp.eq.s32.totalorder %s17, 0
      %p121 = por %p119, %p120
      %p122 = scmp.ne.s32.totalorder %s114, %s116
      %p123 = scmp.eq.s32.totalorder %s22, 3
      %p124 = por %p122, %p123
      %p125 = scmp.ne.s32.totalorder %s116, %s117
      %p126 = scmp.eq.s32.totalorder %s22, 0
      %p127 = por %p125, %p126
      %p128 = scmp.ne.s32.totalorder %s116, %s117
      %p129 = scmp.eq.s32.totalorder %s23, 3
      %p130 = por %p128, %p129
      %p132 = scmp.ne.s32.totalorder %s117, %s131
      %p133 = scmp.eq.s32.totalorder %s23, 0
      %p134 = por %p132, %p133
      %s136 = sadd.s32 %s135, 1
      %p139 = scmp.eq.s32.totalorder %s17, 3
      %p140 = scmp.ne.s32.totalorder %s135, %s137
      %p141 = scmp.eq.s32.totalorder %s17, 0
      %p142 = por %p140, %p141
      %p143 = scmp.ne.s32.totalorder %s135, %s137
      %p144 = scmp.eq.s32.totalorder %s22, 3
      %p145 = por %p143, %p144
      %p146 = scmp.ne.s32.totalorder %s137, %s138
      %p147 = scmp.eq.s32.totalorder %s22, 0
      %p148 = por %p146, %p147
      %p149 = scmp.ne.s32.totalorder %s137, %s138
      %p150 = scmp.eq.s32.totalorder %s23, 3
      %p151 = por %p149, %p150
      %p153 = scmp.ne.s32.totalorder %s138, %s152
      %p154 = scmp.eq.s32.totalorder %s23, 0
      %p155 = por %p153, %p154
      %s157 = sadd.s32 %s156, 1
      %p160 = scmp.eq.s32.totalorder %s17, 3
      %p161 = scmp.ne.s32.totalorder %s156, %s158
      %p162 = scmp.eq.s32.totalorder %s17, 0
      %p163 = por %p161, %p162
      %p164 = scmp.ne.s32.totalorder %s156, %s158
      %p165 = scmp.eq.s32.totalorder %s22, 3
      %p166 = por %p164, %p165
      %p167 = scmp.ne.s32.totalorder %s158, %s159
      %p168 = scmp.eq.s32.totalorder %s22, 0
      %p169 = por %p167, %p168
      %p170 = scmp.ne.s32.totalorder %s158, %s159
      %p171 = scmp.eq.s32.totalorder %s23, 3
      %p172 = por %p170, %p171
      %p174 = scmp.ne.s32.totalorder %s159, %s173
      %p175 = scmp.eq.s32.totalorder %s23, 0
      %p176 = por %p174, %p175
      %s177 = ssub.s32 %s24, %s36
      %s178 = ssub.s32 %s25, %s32
      %s179 = sor.u32 %s177, %s178
      %p180 = scmp.eq.s32.totalorder %s179, 0
      %s182 = sadd.s32 %s181, 1
      %s183 = scalar_select %p180, %s181, %s182
      %p186 = pneg %p180
      %p187 = scmp.eq.s32.totalorder %s17, 3
      %p188 = por %p186, %p187
      %p189 = scmp.ne.s32.totalorder %s181, %s184
      %p190 = scmp.eq.s32.totalorder %s17, 0
      %p191 = por %p189, %p190
      %p192 = scmp.ne.s32.totalorder %s181, %s184
      %p193 = scmp.eq.s32.totalorder %s22, 3
      %p194 = por %p192, %p193
      %p195 = scmp.ne.s32.totalorder %s184, %s185
      %p196 = scmp.eq.s32.totalorder %s22, 0
      %p197 = por %p195, %p196
      %p198 = scmp.ne.s32.totalorder %s184, %s185
      %p199 = scmp.eq.s32.totalorder %s23, 3
      %p200 = por %p198, %p199
      %p202 = scmp.ne.s32.totalorder %s185, %s201
      %p203 = scmp.eq.s32.totalorder %s23, 0
      %p204 = por %p202, %p203
      %p205 = scmp.le.s32.totalorder 1, %s17
      %p206 = scmp.lt.s32.totalorder %s17, 5
      %p207 = pnand %p205, %p206
      %p208 = pneg %p207
      // Predicated region
      $region9: #{depth_pro_forward.11} parent=5 // pred_check
        _
      $region10: #{depth_pro_forward.11} parent=5 // pred_check_branch
        %210 = sbr.rel (%p207) target = $region12
      $region11: #{depth_pro_forward.11} parent=5 // pred_region
        %s211 = ssub.s32 %s17, 1
        // Predicated region
        $region13: #{depth_pro_forward.11} parent=11 // pred_check
          %p212 = pneg %p106
        $region14: #{depth_pro_forward.11} parent=11 // pred_check_branch
          %214 = sbr.rel (%p212) target = $region16
        $region15: #{depth_pro_forward.11} parent=11 // pred_region
          _
        $region16: #{depth_pro_forward.11} parent=11 // pred_fallthru
          _
        // Predicated region
        $region17: #{depth_pro_forward.11} parent=11 // pred_check
          %p215 = pneg %p127
        $region18: #{depth_pro_forward.11} parent=11 // pred_check_branch
          %217 = sbr.rel (%p215) target = $region20
        $region19: #{depth_pro_forward.11} parent=11 // pred_region
          _
        $region20: #{depth_pro_forward.11} parent=11 // pred_fallthru
          _
        // Predicated region
        $region21: #{depth_pro_forward.11} parent=11 // pred_check
          %p218 = pneg %p148
        $region22: #{depth_pro_forward.11} parent=11 // pred_check_branch
          %220 = sbr.rel (%p218) target = $region24
        $region23: #{depth_pro_forward.11} parent=11 // pred_region
          _
        $region24: #{depth_pro_forward.11} parent=11 // pred_fallthru
          _
        // Predicated region
        $region25: #{depth_pro_forward.11} parent=11 // pred_check
          %p221 = pneg %p169
        $region26: #{depth_pro_forward.11} parent=11 // pred_check_branch
          %223 = sbr.rel (%p221) target = $region28
        $region27: #{depth_pro_forward.11} parent=11 // pred_region
          _
        $region28: #{depth_pro_forward.11} parent=11 // pred_fallthru
          _
      $region12: #{depth_pro_forward.11} parent=5 // pred_fallthru
        _
      %p224 = scmp.lt.s32.totalorder %s17, 4
      // Predicated region
      $region29: #{depth_pro_forward.11} parent=5 // pred_check
        %p225 = pneg %p224
      $region30: #{depth_pro_forward.11} parent=5 // pred_check_branch
        %227 = sbr.rel (%p225) target = $region32
      $region31: #{depth_pro_forward.11} parent=5 // pred_region
        // Predicated region
        $region33: #{depth_pro_forward.11} parent=31 // pred_check
          %p228 = pneg %p51
        $region34: #{depth_pro_forward.11} parent=31 // pred_check_branch
          %230 = sbr.rel (%p228) target = $region36
        $region35: #{depth_pro_forward.11} parent=31 // pred_region
          %s231 = smul.u32 8, %s25
          %p232 = scmp.lt.s32.totalorder %s24, 1
          %s233 = scalar_select %p232, %s24, 1
          %p234 = scmp.lt.s32.totalorder %s231, 15
          %s235 = scalar_select %p234, %s231, 15
          %s236 = smul.addr %s235, 2
          %s237 = smul.addr %s233, 32
          %s238 = sadd.s32 %s236, %s237
          %s239 = smul.addr %s238, 4
          %s240 = scalar_lea.vmem %s0, %s239
          %s241 = smul.u32 8, %s25
        $region36: #{depth_pro_forward.11} parent=31 // pred_fallthru
          _
        // Predicated region
        $region37: #{depth_pro_forward.11} parent=31 // pred_check
          %p242 = pneg %p79
        $region38: #{depth_pro_forward.11} parent=31 // pred_check_branch
          %244 = sbr.rel (%p242) target = $region40
        $region39: #{depth_pro_forward.11} parent=31 // pred_region
          %p245 = scmp.lt.s32.totalorder %s24, 1
          %s246 = scalar_select %p245, %s24, 1
          %p247 = scmp.lt.s32.totalorder %s25, 1
          %s248 = scalar_select %p247, %s25, 1
          %s249 = smul.addr %s248, 4
          %s250 = smul.addr %s246, 8
          %s251 = sadd.s32 %s249, %s250
          %s252 = smul.addr %s251, 4
          %s253 = scalar_lea.vmem %s1, %s252
        $region40: #{depth_pro_forward.11} parent=31 // pred_fallthru
          _
      $region32: #{depth_pro_forward.11} parent=5 // pred_fallthru
        _
      %p254 = scmp.le.s32.totalorder 1, %s17
      %p255 = scmp.lt.s32.totalorder %s17, 5
      %p256 = pnand %p254, %p255
      %p257 = pneg %p256
      // Predicated region
      $region41: #{depth_pro_forward.11} parent=5 // pred_check
        _
      $region42: #{depth_pro_forward.11} parent=5 // pred_check_branch
        %259 = sbr.rel (%p256) target = $region44
      $region43: #{depth_pro_forward.11} parent=5 // pred_region
        %s260 = ssub.s32 %s17, 1
        %s261 = smul.u32 8, %s27
        %p262 = scmp.lt.s32.totalorder %s26, 1
        %s263 = scalar_select %p262, %s26, 1
        %p264 = scmp.lt.s32.totalorder %s261, 15
        %s265 = scalar_select %p264, %s261, 15
        %s266 = smul.addr %s265, 2
        %s267 = smul.addr %s263, 32
        %s268 = sadd.s32 %s266, %s267
        %s269 = smul.addr %s268, 4
        %s270 = scalar_lea.vmem %s0, %s269
        %p271 = pneg %p57
        %p272 = pneg %p54
        %p273 = scmp.lt.s32.totalorder %s26, 1
        %s274 = scalar_select %p273, %s26, 1
        %p275 = scmp.lt.s32.totalorder %s27, 1
        %s276 = scalar_select %p275, %s27, 1
        %s277 = smul.addr %s276, 4
        %s278 = smul.addr %s274, 8
        %s279 = sadd.s32 %s277, %s278
        %s280 = smul.addr %s279, 4
        %s281 = scalar_lea.vmem %s1, %s280
        %p282 = pneg %p85
        %p283 = pneg %p82
        %p284 = pneg %p106
        %p285 = pneg %p103
        %p286 = pneg %p127
        %p287 = pneg %p124
        %p288 = pneg %p148
        %p289 = pneg %p145
        %p290 = pneg %p169
        %p291 = pneg %p166
        %p292 = pneg %p197
        %p293 = pneg %p194
        %s294 = sand.u32 %s184, 1
        %s295 = scalar_lea.sflag [#allocation5], %s294
        %s296 = sand.u32 %s184, 1
        %s297 = smul.addr %s296, 8
        %s298 = scalar_lea.vmem [#allocation4], %s297
        %s299 = smul.u32 8, %s27
        %p300 = scmp.lt.s32.totalorder %s26, 1
        %s301 = scalar_select %p300, %s26, 1
        %p302 = scmp.lt.s32.totalorder %s299, 15
        %s303 = scalar_select %p302, %s299, 15
        %s304 = smul.addr %s303, 2
        %s305 = smul.addr %s301, 32
        %s306 = sadd.s32 %s304, %s305
        %s307 = smul.addr %s306, 4
        %s308 = scalar_lea.vmem %s0, %s307
        %s309 = smul.u32 8, %s27
        %p310 = scmp.lt.s32.totalorder %s26, 1
        %s311 = scalar_select %p310, %s26, 1
        %p312 = scmp.lt.s32.totalorder %s27, 1
        %s313 = scalar_select %p312, %s27, 1
        %s314 = smul.addr %s313, 4
        %s315 = smul.addr %s311, 8
        %s316 = sadd.s32 %s314, %s315
        %s317 = smul.addr %s316, 4
        %s318 = scalar_lea.vmem %s1, %s317
        %v320 = vld [vmem:[%s318] sm:$0xf]
        %v321 = vld [vmem:[%s318 + $0x4] sm:$0xf]
        %vm322 = vcmask 125952
        %323 = vst.msk [vmem:[#allocation2] sm:$0xf] %vm322, %v320
        %324 = vst.msk [vmem:[#allocation2 + $0x4] sm:$0xf] %vm322, %v321
        %v325 = vld [vmem:[%s308] sm:$0xf]
        %v326 = vld [vmem:[%s308 + $0x4] sm:$0xf]
        %v327 = vld [vmem:[%s308 + $0x8] sm:$0xf]
        %v328 = vld [vmem:[%s308 + $0xc] sm:$0xf]
        %v329 = vld [vmem:[%s308 + $0x10] sm:$0xf]
        %v330 = vld [vmem:[%s308 + $0x14] sm:$0xf]
        %v331 = vld [vmem:[%s308 + $0x18] sm:$0xf]
        %v332 = vld [vmem:[%s308 + $0x1c] sm:$0xf]
        %v333 = vld [vmem:[%s308 + $0x20] sm:$0xf]
        %v334 = vld [vmem:[%s308 + $0x24] sm:$0xf]
        %v335 = vld [vmem:[%s308 + $0x28] sm:$0xf]
        %v336 = vld [vmem:[%s308 + $0x2c] sm:$0xf]
        %v337 = vld [vmem:[%s308 + $0x30] sm:$0xf]
        %v338 = vld [vmem:[%s308 + $0x34] sm:$0xf]
        %v339 = vld [vmem:[%s308 + $0x38] sm:$0xf]
        %v340 = vld [vmem:[%s308 + $0x3c] sm:$0xf]
        %s341 = scalar_lea.vmem [#allocation2], 8
        %342 = vst.msk [vmem:[%s341] sm:$0xf] %vm322, %v325
        %343 = vst.msk [vmem:[%s341 + $0x4] sm:$0xf] %vm322, %v326
        %344 = vst.msk [vmem:[%s341 + $0x8] sm:$0xf] %vm322, %v327
        %345 = vst.msk [vmem:[%s341 + $0xc] sm:$0xf] %vm322, %v328
        %346 = vst.msk [vmem:[%s341 + $0x10] sm:$0xf] %vm322, %v329
        %347 = vst.msk [vmem:[%s341 + $0x14] sm:$0xf] %vm322, %v330
        %348 = vst.msk [vmem:[%s341 + $0x18] sm:$0xf] %vm322, %v331
        %349 = vst.msk [vmem:[%s341 + $0x1c] sm:$0xf] %vm322, %v332
        %350 = vst.msk [vmem:[%s341 + $0x20] sm:$0xf] %vm322, %v333
        %351 = vst.msk [vmem:[%s341 + $0x24] sm:$0xf] %vm322, %v334
        %352 = vst.msk [vmem:[%s341 + $0x28] sm:$0xf] %vm322, %v335
        %353 = vst.msk [vmem:[%s341 + $0x2c] sm:$0xf] %vm322, %v336
        %354 = vst.msk [vmem:[%s341 + $0x30] sm:$0xf] %vm322, %v337
        %355 = vst.msk [vmem:[%s341 + $0x34] sm:$0xf] %vm322, %v338
        %356 = vst.msk [vmem:[%s341 + $0x38] sm:$0xf] %vm322, %v339
        %357 = vst.msk [vmem:[%s341 + $0x3c] sm:$0xf] %vm322, %v340
        %s358 = scalar_lea.vmem %s318, 8
        %v359 = vld [vmem:[%s358] sm:$0xf]
        %v360 = vld [vmem:[%s358 + $0x4] sm:$0xf]
        %s361 = scalar_lea.vmem [#allocation2], 72
        %362 = vst.msk [vmem:[%s361] sm:$0xf] %vm322, %v359
        %363 = vst.msk [vmem:[%s361 + $0x4] sm:$0xf] %vm322, %v360
        %v364 = vld [vmem:[#allocation2] sm:$0xf]
        %v365 = vld [vmem:[#allocation2 + $0x4] sm:$0xf]
        %v366 = vld [vmem:[#allocation2 + $0x8] sm:$0xf]
        %v367 = vld [vmem:[#allocation2 + $0xc] sm:$0xf]
        %v368 = vld [vmem:[#allocation2 + $0x10] sm:$0xf]
        %v369 = vld [vmem:[#allocation2 + $0x14] sm:$0xf]
        %v370 = vld [vmem:[#allocation2 + $0x18] sm:$0xf]
        %v371 = vld [vmem:[#allocation2 + $0x1c] sm:$0xf]
        %v372 = vld [vmem:[#allocation2 + $0x20] sm:$0xf]
        %v373 = vld [vmem:[#allocation2 + $0x24] sm:$0xf]
        %v374 = vld [vmem:[#allocation2 + $0x28] sm:$0xf]
        %v375 = vld [vmem:[#allocation2 + $0x2c] sm:$0xf]
        %v376 = vld [vmem:[#allocation2 + $0x30] sm:$0xf]
        %v377 = vld [vmem:[#allocation2 + $0x34] sm:$0xf]
        %v378 = vld [vmem:[#allocation2 + $0x38] sm:$0xf]
        %v379 = vld [vmem:[#allocation2 + $0x3c] sm:$0xf]
        %v380 = vld [vmem:[%s2] sm:$0xf]
        %v381 = vld [vmem:[%s2 + $0x4] sm:$0xf]
        %s382 = scalar_lea.vmem %s2, 8
        %v383 = vld [vmem:[%s382] sm:$0xf]
        %v384 = vld [vmem:[%s382 + $0x4] sm:$0xf]
        %s385 = scalar_lea.vmem %s2, 16
        %v386 = vld [vmem:[%s385] sm:$0xf]
        %v387 = vld [vmem:[%s385 + $0x4] sm:$0xf]
        %v388 = vld [vmem:[%s341] sm:$0xf]
        %v389 = vld [vmem:[%s341 + $0x4] sm:$0xf]
        %v390 = vld [vmem:[%s341 + $0x8] sm:$0xf]
        %v391 = vld [vmem:[%s341 + $0xc] sm:$0xf]
        %v392 = vld [vmem:[%s341 + $0x10] sm:$0xf]
        %v393 = vld [vmem:[%s341 + $0x14] sm:$0xf]
        %v394 = vld [vmem:[%s341 + $0x18] sm:$0xf]
        %v395 = vld [vmem:[%s341 + $0x1c] sm:$0xf]
        %v396 = vld [vmem:[%s341 + $0x20] sm:$0xf]
        %v397 = vld [vmem:[%s341 + $0x24] sm:$0xf]
        %v398 = vld [vmem:[%s341 + $0x28] sm:$0xf]
        %v399 = vld [vmem:[%s341 + $0x2c] sm:$0xf]
        %v400 = vld [vmem:[%s341 + $0x30] sm:$0xf]
        %v401 = vld [vmem:[%s341 + $0x34] sm:$0xf]
        %v402 = vld [vmem:[%s341 + $0x38] sm:$0xf]
        %v403 = vld [vmem:[%s341 + $0x3c] sm:$0xf]
        %s404 = scalar_lea.vmem %s2, 24
        %v405 = vld [vmem:[%s404] sm:$0xf]
        %v406 = vld [vmem:[%s404 + $0x4] sm:$0xf]
        %v423 = vunpack.c.l.b16 %v388
        %v424 = vunpack.c.l.b16 %v389
        %v425 = vunpack.c.l.b16 %v390
        %v426 = vunpack.c.l.b16 %v391
        %v427 = vunpack.c.l.b16 %v392
        %v428 = vunpack.c.l.b16 %v393
        %v429 = vunpack.c.l.b16 %v394
        %v430 = vunpack.c.l.b16 %v395
        %v431 = vunpack.c.l.b16 %v396
        %v432 = vunpack.c.l.b16 %v397
        %v433 = vunpack.c.l.b16 %v398
        %v434 = vunpack.c.l.b16 %v399
        %v435 = vunpack.c.l.b16 %v400
        %v436 = vunpack.c.l.b16 %v401
        %v437 = vunpack.c.l.b16 %v402
        %v438 = vunpack.c.l.b16 %v403
        %v439 = vpack.c.b16 %v424, %v423
        %v440 = vpack.c.b16 %v426, %v425
        %v441 = vpack.c.b16 %v428, %v427
        %v442 = vpack.c.b16 %v430, %v429
        %v443 = vpack.c.b16 %v432, %v431
        %v444 = vpack.c.b16 %v434, %v433
        %v445 = vpack.c.b16 %v436, %v435
        %v446 = vpack.c.b16 %v438, %v437
        %v449 = vunpack.c.l.b16 %v405
        %v450 = vunpack.c.l.b16 %v406
        %v451 = vpack.c.b16 %v450, %v449
        %vm453 = vcmask 130048
        %v455 = vsel %vm453, %v439, 0
        %v458 = vsel %vm453, %v440, 0
        %v461 = vsel %vm453, %v441, 0
        %v464 = vsel %vm453, %v442, 0
        %v467 = vsel %vm453, %v443, 0
        %v470 = vsel %vm453, %v444, 0
        %v473 = vsel %vm453, %v445, 0
        %v476 = vsel %vm453, %v446, 0
        %478 = vmatprep.subr.bf16.mxu0 0
        %479 = vmatpush1.bf16.msra.mxu0 0
        %480 = vmatprep.subr.bf16.mxu0 0
        %481 = vmatpush1.bf16.msra.mxu0 0
        %482 = vmatprep.subr.bf16.mxu0 0
        %483 = vmatpush1.bf16.msra.mxu0 0
        %484 = vmatprep.subr.bf16.mxu0 0
        %485 = vmatpush1.bf16.msra.mxu0 0
        %486 = vmatprep.subr.bf16.mxu0 0
        %487 = vmatpush1.bf16.msra.mxu0 0
        %488 = vmatprep.subr.bf16.mxu0 0
        %489 = vmatpush1.bf16.msra.mxu0 0
        %490 = vmatprep.subr.bf16.mxu0 0
        %491 = vmatpush1.bf16.msra.mxu0 0
        %492 = vmatprep.subr.bf16.mxu0 0
        %493 = vmatpush1.bf16.msra.mxu0 %v451
        %494 = vmatprep.subr.bf16.mxu0 0
        %495 = vmatpush2.bf16.msra.mxu0 0
        %496 = vmatprep.subr.bf16.mxu0 0
        %497 = vmatpush2.bf16.msra.mxu0 0
        %498 = vmatprep.subr.bf16.mxu0 0
        %499 = vmatpush2.bf16.msra.mxu0 0
        %500 = vmatprep.subr.bf16.mxu0 0
        %501 = vmatpush2.bf16.msra.mxu0 0
        %502 = vmatprep.subr.bf16.mxu0 0
        %503 = vmatpush2.bf16.msra.mxu0 0
        %504 = vmatprep.subr.bf16.mxu0 0
        %505 = vmatpush2.bf16.msra.mxu0 0
        %506 = vmatprep.subr.bf16.mxu0 0
        %507 = vmatpush2.bf16.msra.mxu0 0
        %508 = vmatprep.subr.bf16.mxu0 0
        %509 = vmatpush2.bf16.msra.mxu0 0
        %510 = vmatprep.mubr.bf16.mxu0 0
        %511 = vmatmul.mubr.bf16.gmra.mxu0 %v455
        %v512 = vpop.f32.mrf.mxu0
        %v513 = vadd.f32 0.0, %v512
        %v514 = vpop.f32.mrf.mxu0
        %v515 = vpop.f32.mrf.mxu0
        %v516 = vadd.f32 0.0, %v515
        %v517 = vpop.f32.mrf.mxu0
        %518 = vmatprep.mubr.bf16.mxu0 0
        %519 = vmatmul.mubr.bf16.gmra.mxu0 %v458
        %v520 = vpop.f32.mrf.mxu0
        %v521 = vadd.f32 0.0, %v520
        %v522 = vpop.f32.mrf.mxu0
        %v523 = vpop.f32.mrf.mxu0
        %v524 = vadd.f32 0.0, %v523
        %v525 = vpop.f32.mrf.mxu0
        %526 = vmatprep.mubr.bf16.mxu0 0
        %527 = vmatmul.mubr.bf16.gmra.mxu0 %v461
        %v528 = vpop.f32.mrf.mxu0
        %v529 = vadd.f32 0.0, %v528
        %v530 = vpop.f32.mrf.mxu0
        %v531 = vpop.f32.mrf.mxu0
        %v532 = vadd.f32 0.0, %v531
        %v533 = vpop.f32.mrf.mxu0
        %534 = vmatprep.mubr.bf16.mxu0 0
        %535 = vmatmul.mubr.bf16.gmra.mxu0 %v464
        %v536 = vpop.f32.mrf.mxu0
        %v537 = vadd.f32 0.0, %v536
        %v538 = vpop.f32.mrf.mxu0
        %v539 = vpop.f32.mrf.mxu0
        %v540 = vadd.f32 0.0, %v539
        %v541 = vpop.f32.mrf.mxu0
        %542 = vmatprep.mubr.bf16.mxu0 0
        %543 = vmatmul.mubr.bf16.gmra.mxu0 %v467
        %v544 = vpop.f32.mrf.mxu0
        %v545 = vadd.f32 0.0, %v544
        %v546 = vpop.f32.mrf.mxu0
        %v547 = vpop.f32.mrf.mxu0
        %v548 = vadd.f32 0.0, %v547
        %v549 = vpop.f32.mrf.mxu0
        %550 = vmatprep.mubr.bf16.mxu0 0
        %551 = vmatmul.mubr.bf16.gmra.mxu0 %v470
        %v552 = vpop.f32.mrf.mxu0
        %v553 = vadd.f32 0.0, %v552
        %v554 = vpop.f32.mrf.mxu0
        %v555 = vpop.f32.mrf.mxu0
        %v556 = vadd.f32 0.0, %v555
        %v557 = vpop.f32.mrf.mxu0
        %558 = vmatprep.mubr.bf16.mxu0 0
        %559 = vmatmul.mubr.bf16.gmra.mxu0 %v473
        %v560 = vpop.f32.mrf.mxu0
        %v561 = vadd.f32 0.0, %v560
        %v562 = vpop.f32.mrf.mxu0
        %v563 = vpop.f32.mrf.mxu0
        %v564 = vadd.f32 0.0, %v563
        %v565 = vpop.f32.mrf.mxu0
        %566 = vmatprep.mubr.bf16.mxu0 0
        %567 = vmatmul.mubr.bf16.gmra.mxu0 %v476
        %v568 = vpop.f32.mrf.mxu0
        %v569 = vadd.f32 0.0, %v568
        %v570 = vpop.f32.mrf.mxu0
        %v571 = vpop.f32.mrf.mxu0
        %v572 = vadd.f32 0.0, %v571
        %v573 = vpop.f32.mrf.mxu0
        %574 = vdwg.mxu0
        %v591 = vunpack.c.l.b16 %v364
        %v592 = vunpack.c.l.b16 %v365
        %v593 = vunpack.c.l.b16 %v366
        %v594 = vunpack.c.l.b16 %v367
        %v595 = vunpack.c.l.b16 %v368
        %v596 = vunpack.c.l.b16 %v369
        %v597 = vunpack.c.l.b16 %v370
        %v598 = vunpack.c.l.b16 %v371
        %v599 = vunpack.c.l.b16 %v372
        %v600 = vunpack.c.l.b16 %v373
        %v601 = vunpack.c.l.b16 %v374
        %v602 = vunpack.c.l.b16 %v375
        %v603 = vunpack.c.l.b16 %v376
        %v604 = vunpack.c.l.b16 %v377
        %v605 = vunpack.c.l.b16 %v378
        %v606 = vunpack.c.l.b16 %v379
        %v607 = vpack.c.b16 %v592, %v591
        %v608 = vpack.c.b16 %v594, %v593
        %v609 = vpack.c.b16 %v596, %v595
        %v610 = vpack.c.b16 %v598, %v597
        %v611 = vpack.c.b16 %v600, %v599
        %v612 = vpack.c.b16 %v602, %v601
        %v613 = vpack.c.b16 %v604, %v603
        %v614 = vpack.c.b16 %v606, %v605
        %v617 = vunpack.c.l.b16 %v380
        %v618 = vunpack.c.l.b16 %v381
        %v619 = vpack.c.b16 %v618, %v617
        %v622 = vsel %vm453, %v607, 0
        %v625 = vsel %vm453, %v608, 0
        %v628 = vsel %vm453, %v609, 0
        %v631 = vsel %vm453, %v610, 0
        %v634 = vsel %vm453, %v611, 0
        %v637 = vsel %vm453, %v612, 0
        %v640 = vsel %vm453, %v613, 0
        %v643 = vsel %vm453, %v614, 0
        %645 = vmatprep.subr.bf16.mxu0 0
        %646 = vmatpush1.bf16.msra.mxu0 0
        %647 = vmatprep.subr.bf16.mxu0 0
        %648 = vmatpush1.bf16.msra.mxu0 0
        %649 = vmatprep.subr.bf16.mxu0 0
        %650 = vmatpush1.bf16.msra.mxu0 0
        %651 = vmatprep.subr.bf16.mxu0 0
        %652 = vmatpush1.bf16.msra.mxu0 0
        %653 = vmatprep.subr.bf16.mxu0 0
        %654 = vmatpush1.bf16.msra.mxu0 0
        %655 = vmatprep.subr.bf16.mxu0 0
        %656 = vmatpush1.bf16.msra.mxu0 0
        %657 = vmatprep.subr.bf16.mxu0 0
        %658 = vmatpush1.bf16.msra.mxu0 0
        %659 = vmatprep.subr.bf16.mxu0 0
        %660 = vmatpush1.bf16.msra.mxu0 %v619
        %661 = vmatprep.subr.bf16.mxu0 0
        %662 = vmatpush2.bf16.msra.mxu0 0
        %663 = vmatprep.subr.bf16.mxu0 0
        %664 = vmatpush2.bf16.msra.mxu0 0
        %665 = vmatprep.subr.bf16.mxu0 0
        %666 = vmatpush2.bf16.msra.mxu0 0
        %667 = vmatprep.subr.bf16.mxu0 0
        %668 = vmatpush2.bf16.msra.mxu0 0
        %669 = vmatprep.subr.bf16.mxu0 0
        %670 = vmatpush2.bf16.msra.mxu0 0
        %671 = vmatprep.subr.bf16.mxu0 0
        %672 = vmatpush2.bf16.msra.mxu0 0
        %673 = vmatprep.subr.bf16.mxu0 0
        %674 = vmatpush2.bf16.msra.mxu0 0
        %675 = vmatprep.subr.bf16.mxu0 0
        %676 = vmatpush2.bf16.msra.mxu0 0
        %677 = vmatprep.mubr.bf16.mxu0 0
        %678 = vmatmul.mubr.bf16.gmra.mxu0 %v622
        %v679 = vpop.f32.mrf.mxu0
        %v680 = vadd.f32 %v513, %v679
        %v681 = vpop.f32.mrf.mxu0
        %v682 = vpop.f32.mrf.mxu0
        %v683 = vadd.f32 %v516, %v682
        %v684 = vpop.f32.mrf.mxu0
        %685 = vmatprep.mubr.bf16.mxu0 0
        %686 = vmatmul.mubr.bf16.gmra.mxu0 %v625
        %v687 = vpop.f32.mrf.mxu0
        %v688 = vadd.f32 %v521, %v687
        %v689 = vpop.f32.mrf.mxu0
        %v690 = vpop.f32.mrf.mxu0
        %v691 = vadd.f32 %v524, %v690
        %v692 = vpop.f32.mrf.mxu0
        %693 = vmatprep.mubr.bf16.mxu0 0
        %694 = vmatmul.mubr.bf16.gmra.mxu0 %v628
        %v695 = vpop.f32.mrf.mxu0
        %v696 = vadd.f32 %v529, %v695
        %v697 = vpop.f32.mrf.mxu0
        %v698 = vpop.f32.mrf.mxu0
        %v699 = vadd.f32 %v532, %v698
        %v700 = vpop.f32.mrf.mxu0
        %701 = vmatprep.mubr.bf16.mxu0 0
        %702 = vmatmul.mubr.bf16.gmra.mxu0 %v631
        %v703 = vpop.f32.mrf.mxu0
        %v704 = vadd.f32 %v537, %v703
        %v705 = vpop.f32.mrf.mxu0
        %v706 = vpop.f32.mrf.mxu0
        %v707 = vadd.f32 %v540, %v706
        %v708 = vpop.f32.mrf.mxu0
        %709 = vmatprep.mubr.bf16.mxu0 0
        %710 = vmatmul.mubr.bf16.gmra.mxu0 %v634
        %v711 = vpop.f32.mrf.mxu0
        %v712 = vadd.f32 %v545, %v711
        %v713 = vpop.f32.mrf.mxu0
        %v714 = vpop.f32.mrf.mxu0
        %v715 = vadd.f32 %v548, %v714
        %v716 = vpop.f32.mrf.mxu0
        %717 = vmatprep.mubr.bf16.mxu0 0
        %718 = vmatmul.mubr.bf16.gmra.mxu0 %v637
        %v719 = vpop.f32.mrf.mxu0
        %v720 = vadd.f32 %v553, %v719
        %v721 = vpop.f32.mrf.mxu0
        %v722 = vpop.f32.mrf.mxu0
        %v723 = vadd.f32 %v556, %v722
        %v724 = vpop.f32.mrf.mxu0
        %725 = vmatprep.mubr.bf16.mxu0 0
        %726 = vmatmul.mubr.bf16.gmra.mxu0 %v640
        %v727 = vpop.f32.mrf.mxu0
        %v728 = vadd.f32 %v561, %v727
        %v729 = vpop.f32.mrf.mxu0
        %v730 = vpop.f32.mrf.mxu0
        %v731 = vadd.f32 %v564, %v730
        %v732 = vpop.f32.mrf.mxu0
        %733 = vmatprep.mubr.bf16.mxu0 0
        %734 = vmatmul.mubr.bf16.gmra.mxu0 %v643
        %v735 = vpop.f32.mrf.mxu0
        %v736 = vadd.f32 %v569, %v735
        %v737 = vpop.f32.mrf.mxu0
        %v738 = vpop.f32.mrf.mxu0
        %v739 = vadd.f32 %v572, %v738
        %v740 = vpop.f32.mrf.mxu0
        %741 = vdwg.mxu0
        %s742 = scalar_lea.vmem %s2, 32
        %v743 = vld [vmem:[%s742] sm:$0xf]
        %v744 = vld [vmem:[%s742 + $0x4] sm:$0xf]
        %v747 = vunpack.c.l.b16 %v743
        %v748 = vunpack.c.l.b16 %v744
        %v749 = vpack.c.b16 %v748, %v747
        %751 = vmatprep.subr.bf16.mxu0 0
        %752 = vmatpush1.bf16.msra.mxu0 0
        %753 = vmatprep.subr.bf16.mxu0 0
        %754 = vmatpush1.bf16.msra.mxu0 0
        %755 = vmatprep.subr.bf16.mxu0 0
        %756 = vmatpush1.bf16.msra.mxu0 0
        %757 = vmatprep.subr.bf16.mxu0 0
        %758 = vmatpush1.bf16.msra.mxu0 0
        %759 = vmatprep.subr.bf16.mxu0 0
        %760 = vmatpush1.bf16.msra.mxu0 0
        %761 = vmatprep.subr.bf16.mxu0 0
        %762 = vmatpush1.bf16.msra.mxu0 0
        %763 = vmatprep.subr.bf16.mxu0 0
        %764 = vmatpush1.bf16.msra.mxu0 0
        %765 = vmatprep.subr.bf16.mxu0 0
        %766 = vmatpush1.bf16.msra.mxu0 %v749
        %767 = vmatprep.subr.bf16.mxu0 0
        %768 = vmatpush2.bf16.msra.mxu0 0
        %769 = vmatprep.subr.bf16.mxu0 0
        %770 = vmatpush2.bf16.msra.mxu0 0
        %771 = vmatprep.subr.bf16.mxu0 0
        %772 = vmatpush2.bf16.msra.mxu0 0
        %773 = vmatprep.subr.bf16.mxu0 0
        %774 = vmatpush2.bf16.msra.mxu0 0
        %775 = vmatprep.subr.bf16.mxu0 0
        %776 = vmatpush2.bf16.msra.mxu0 0
        %777 = vmatprep.subr.bf16.mxu0 0
        %778 = vmatpush2.bf16.msra.mxu0 0
        %779 = vmatprep.subr.bf16.mxu0 0
        %780 = vmatpush2.bf16.msra.mxu0 0
        %781 = vmatprep.subr.bf16.mxu0 0
        %782 = vmatpush2.bf16.msra.mxu0 0
        %783 = vmatprep.mubr.bf16.mxu0 0
        %784 = vmatmul.mubr.bf16.gmra.mxu0 %v455
        %v785 = vpop.f32.mrf.mxu0
        %v786 = vadd.f32 0.0, %v785
        %v787 = vpop.f32.mrf.mxu0
        %v788 = vpop.f32.mrf.mxu0
        %v789 = vadd.f32 0.0, %v788
        %v790 = vpop.f32.mrf.mxu0
        %791 = vmatprep.mubr.bf16.mxu0 0
        %792 = vmatmul.mubr.bf16.gmra.mxu0 %v458
        %v793 = vpop.f32.mrf.mxu0
        %v794 = vadd.f32 0.0, %v793
        %v795 = vpop.f32.mrf.mxu0
        %v796 = vpop.f32.mrf.mxu0
        %v797 = vadd.f32 0.0, %v796
        %v798 = vpop.f32.mrf.mxu0
        %799 = vmatprep.mubr.bf16.mxu0 0
        %800 = vmatmul.mubr.bf16.gmra.mxu0 %v461
        %v801 = vpop.f32.mrf.mxu0
        %v802 = vadd.f32 0.0, %v801
        %v803 = vpop.f32.mrf.mxu0
        %v804 = vpop.f32.mrf.mxu0
        %v805 = vadd.f32 0.0, %v804
        %v806 = vpop.f32.mrf.mxu0
        %807 = vmatprep.mubr.bf16.mxu0 0
        %808 = vmatmul.mubr.bf16.gmra.mxu0 %v464
        %v809 = vpop.f32.mrf.mxu0
        %v810 = vadd.f32 0.0, %v809
        %v811 = vpop.f32.mrf.mxu0
        %v812 = vpop.f32.mrf.mxu0
        %v813 = vadd.f32 0.0, %v812
        %v814 = vpop.f32.mrf.mxu0
        %815 = vmatprep.mubr.bf16.mxu0 0
        %816 = vmatmul.mubr.bf16.gmra.mxu0 %v467
        %v817 = vpop.f32.mrf.mxu0
        %v818 = vadd.f32 0.0, %v817
        %v819 = vpop.f32.mrf.mxu0
        %v820 = vpop.f32.mrf.mxu0
        %v821 = vadd.f32 0.0, %v820
        %v822 = vpop.f32.mrf.mxu0
        %823 = vmatprep.mubr.bf16.mxu0 0
        %824 = vmatmul.mubr.bf16.gmra.mxu0 %v470
        %v825 = vpop.f32.mrf.mxu0
        %v826 = vadd.f32 0.0, %v825
        %v827 = vpop.f32.mrf.mxu0
        %v828 = vpop.f32.mrf.mxu0
        %v829 = vadd.f32 0.0, %v828
        %v830 = vpop.f32.mrf.mxu0
        %831 = vmatprep.mubr.bf16.mxu0 0
        %832 = vmatmul.mubr.bf16.gmra.mxu0 %v473
        %v833 = vpop.f32.mrf.mxu0
        %v834 = vadd.f32 0.0, %v833
        %v835 = vpop.f32.mrf.mxu0
        %v836 = vpop.f32.mrf.mxu0
        %v837 = vadd.f32 0.0, %v836
        %v838 = vpop.f32.mrf.mxu0
        %839 = vmatprep.mubr.bf16.mxu0 0
        %840 = vmatmul.mubr.bf16.gmra.mxu0 %v476
        %v841 = vpop.f32.mrf.mxu0
        %v842 = vadd.f32 0.0, %v841
        %v843 = vpop.f32.mrf.mxu0
        %v844 = vpop.f32.mrf.mxu0
        %v845 = vadd.f32 0.0, %v844
        %v846 = vpop.f32.mrf.mxu0
        %847 = vdwg.mxu0
        %v850 = vunpack.c.l.b16 %v383
        %v851 = vunpack.c.l.b16 %v384
        %v852 = vpack.c.b16 %v851, %v850
        %854 = vmatprep.subr.bf16.mxu0 0
        %855 = vmatpush1.bf16.msra.mxu0 0
        %856 = vmatprep.subr.bf16.mxu0 0
        %857 = vmatpush1.bf16.msra.mxu0 0
        %858 = vmatprep.subr.bf16.mxu0 0
        %859 = vmatpush1.bf16.msra.mxu0 0
        %860 = vmatprep.subr.bf16.mxu0 0
        %861 = vmatpush1.bf16.msra.mxu0 0
        %862 = vmatprep.subr.bf16.mxu0 0
        %863 = vmatpush1.bf16.msra.mxu0 0
        %864 = vmatprep.subr.bf16.mxu0 0
        %865 = vmatpush1.bf16.msra.mxu0 0
        %866 = vmatprep.subr.bf16.mxu0 0
        %867 = vmatpush1.bf16.msra.mxu0 0
        %868 = vmatprep.subr.bf16.mxu0 0
        %869 = vmatpush1.bf16.msra.mxu0 %v852
        %870 = vmatprep.subr.bf16.mxu0 0
        %871 = vmatpush2.bf16.msra.mxu0 0
        %872 = vmatprep.subr.bf16.mxu0 0
        %873 = vmatpush2.bf16.msra.mxu0 0
        %874 = vmatprep.subr.bf16.mxu0 0
        %875 = vmatpush2.bf16.msra.mxu0 0
        %876 = vmatprep.subr.bf16.mxu0 0
        %877 = vmatpush2.bf16.msra.mxu0 0
        %878 = vmatprep.subr.bf16.mxu0 0
        %879 = vmatpush2.bf16.msra.mxu0 0
        %880 = vmatprep.subr.bf16.mxu0 0
        %881 = vmatpush2.bf16.msra.mxu0 0
        %882 = vmatprep.subr.bf16.mxu0 0
        %883 = vmatpush2.bf16.msra.mxu0 0
        %884 = vmatprep.subr.bf16.mxu0 0
        %885 = vmatpush2.bf16.msra.mxu0 0
        %886 = vmatprep.mubr.bf16.mxu0 0
        %887 = vmatmul.mubr.bf16.gmra.mxu0 %v622
        %v888 = vpop.f32.mrf.mxu0
        %v889 = vadd.f32 %v786, %v888
        %v890 = vpop.f32.mrf.mxu0
        %v891 = vpop.f32.mrf.mxu0
        %v892 = vadd.f32 %v789, %v891
        %v893 = vpop.f32.mrf.mxu0
        %894 = vmatprep.mubr.bf16.mxu0 0
        %895 = vmatmul.mubr.bf16.gmra.mxu0 %v625
        %v896 = vpop.f32.mrf.mxu0
        %v897 = vadd.f32 %v794, %v896
        %v898 = vpop.f32.mrf.mxu0
        %v899 = vpop.f32.mrf.mxu0
        %v900 = vadd.f32 %v797, %v899
        %v901 = vpop.f32.mrf.mxu0
        %902 = vmatprep.mubr.bf16.mxu0 0
        %903 = vmatmul.mubr.bf16.gmra.mxu0 %v628
        %v904 = vpop.f32.mrf.mxu0
        %v905 = vadd.f32 %v802, %v904
        %v906 = vpop.f32.mrf.mxu0
        %v907 = vpop.f32.mrf.mxu0
        %v908 = vadd.f32 %v805, %v907
        %v909 = vpop.f32.mrf.mxu0
        %910 = vmatprep.mubr.bf16.mxu0 0
        %911 = vmatmul.mubr.bf16.gmra.mxu0 %v631
        %v912 = vpop.f32.mrf.mxu0
        %v913 = vadd.f32 %v810, %v912
        %v914 = vpop.f32.mrf.mxu0
        %v915 = vpop.f32.mrf.mxu0
        %v916 = vadd.f32 %v813, %v915
        %v917 = vpop.f32.mrf.mxu0
        %918 = vmatprep.mubr.bf16.mxu0 0
        %919 = vmatmul.mubr.bf16.gmra.mxu0 %v634
        %v920 = vpop.f32.mrf.mxu0
        %v921 = vadd.f32 %v818, %v920
        %v922 = vpop.f32.mrf.mxu0
        %v923 = vpop.f32.mrf.mxu0
        %v924 = vadd.f32 %v821, %v923
        %v925 = vpop.f32.mrf.mxu0
        %926 = vmatprep.mubr.bf16.mxu0 0
        %927 = vmatmul.mubr.bf16.gmra.mxu0 %v637
        %v928 = vpop.f32.mrf.mxu0
        %v929 = vadd.f32 %v826, %v928
        %v930 = vpop.f32.mrf.mxu0
        %v931 = vpop.f32.mrf.mxu0
        %v932 = vadd.f32 %v829, %v931
        %v933 = vpop.f32.mrf.mxu0
        %934 = vmatprep.mubr.bf16.mxu0 0
        %935 = vmatmul.mubr.bf16.gmra.mxu0 %v640
        %v936 = vpop.f32.mrf.mxu0
        %v937 = vadd.f32 %v834, %v936
        %v938 = vpop.f32.mrf.mxu0
        %v939 = vpop.f32.mrf.mxu0
        %v940 = vadd.f32 %v837, %v939
        %v941 = vpop.f32.mrf.mxu0
        %942 = vmatprep.mubr.bf16.mxu0 0
        %943 = vmatmul.mubr.bf16.gmra.mxu0 %v643
        %v944 = vpop.f32.mrf.mxu0
        %v945 = vadd.f32 %v842, %v944
        %v946 = vpop.f32.mrf.mxu0
        %v947 = vpop.f32.mrf.mxu0
        %v948 = vadd.f32 %v845, %v947
        %v949 = vpop.f32.mrf.mxu0
        %950 = vdwg.mxu0
        %s951 = scalar_lea.vmem %s2, 40
        %v952 = vld [vmem:[%s951] sm:$0xf]
        %v953 = vld [vmem:[%s951 + $0x4] sm:$0xf]
        %v956 = vunpack.c.l.b16 %v952
        %v957 = vunpack.c.l.b16 %v953
        %v958 = vpack.c.b16 %v957, %v956
        %960 = vmatprep.subr.bf16.mxu0 0
        %961 = vmatpush1.bf16.msra.mxu0 0
        %962 = vmatprep.subr.bf16.mxu0 0
        %963 = vmatpush1.bf16.msra.mxu0 0
        %964 = vmatprep.subr.bf16.mxu0 0
        %965 = vmatpush1.bf16.msra.mxu0 0
        %966 = vmatprep.subr.bf16.mxu0 0
        %967 = vmatpush1.bf16.msra.mxu0 0
        %968 = vmatprep.subr.bf16.mxu0 0
        %969 = vmatpush1.bf16.msra.mxu0 0
        %970 = vmatprep.subr.bf16.mxu0 0
        %971 = vmatpush1.bf16.msra.mxu0 0
        %972 = vmatprep.subr.bf16.mxu0 0
        %973 = vmatpush1.bf16.msra.mxu0 0
        %974 = vmatprep.subr.bf16.mxu0 0
        %975 = vmatpush1.bf16.msra.mxu0 %v958
        %976 = vmatprep.subr.bf16.mxu0 0
        %977 = vmatpush2.bf16.msra.mxu0 0
        %978 = vmatprep.subr.bf16.mxu0 0
        %979 = vmatpush2.bf16.msra.mxu0 0
        %980 = vmatprep.subr.bf16.mxu0 0
        %981 = vmatpush2.bf16.msra.mxu0 0
        %982 = vmatprep.subr.bf16.mxu0 0
        %983 = vmatpush2.bf16.msra.mxu0 0
        %984 = vmatprep.subr.bf16.mxu0 0
        %985 = vmatpush2.bf16.msra.mxu0 0
        %986 = vmatprep.subr.bf16.mxu0 0
        %987 = vmatpush2.bf16.msra.mxu0 0
        %988 = vmatprep.subr.bf16.mxu0 0
        %989 = vmatpush2.bf16.msra.mxu0 0
        %990 = vmatprep.subr.bf16.mxu0 0
        %991 = vmatpush2.bf16.msra.mxu0 0
        %992 = vmatprep.mubr.bf16.mxu0 0
        %993 = vmatmul.mubr.bf16.gmra.mxu0 %v455
        %v994 = vpop.f32.mrf.mxu0
        %v995 = vadd.f32 0.0, %v994
        %v996 = vpop.f32.mrf.mxu0
        %v997 = vpop.f32.mrf.mxu0
        %v998 = vadd.f32 0.0, %v997
        %v999 = vpop.f32.mrf.mxu0
        %1000 = vmatprep.mubr.bf16.mxu0 0
        %1001 = vmatmul.mubr.bf16.gmra.mxu0 %v458
        %v1002 = vpop.f32.mrf.mxu0
        %v1003 = vadd.f32 0.0, %v1002
        %v1004 = vpop.f32.mrf.mxu0
        %v1005 = vpop.f32.mrf.mxu0
        %v1006 = vadd.f32 0.0, %v1005
        %v1007 = vpop.f32.mrf.mxu0
        %1008 = vmatprep.mubr.bf16.mxu0 0
        %1009 = vmatmul.mubr.bf16.gmra.mxu0 %v461
        %v1010 = vpop.f32.mrf.mxu0
        %v1011 = vadd.f32 0.0, %v1010
        %v1012 = vpop.f32.mrf.mxu0
        %v1013 = vpop.f32.mrf.mxu0
        %v1014 = vadd.f32 0.0, %v1013
        %v1015 = vpop.f32.mrf.mxu0
        %1016 = vmatprep.mubr.bf16.mxu0 0
        %1017 = vmatmul.mubr.bf16.gmra.mxu0 %v464
        %v1018 = vpop.f32.mrf.mxu0
        %v1019 = vadd.f32 0.0, %v1018
        %v1020 = vpop.f32.mrf.mxu0
        %v1021 = vpop.f32.mrf.mxu0
        %v1022 = vadd.f32 0.0, %v1021
        %v1023 = vpop.f32.mrf.mxu0
        %1024 = vmatprep.mubr.bf16.mxu0 0
        %1025 = vmatmul.mubr.bf16.gmra.mxu0 %v467
        %v1026 = vpop.f32.mrf.mxu0
        %v1027 = vadd.f32 0.0, %v1026
        %v1028 = vpop.f32.mrf.mxu0
        %v1029 = vpop.f32.mrf.mxu0
        %v1030 = vadd.f32 0.0, %v1029
        %v1031 = vpop.f32.mrf.mxu0
        %1032 = vmatprep.mubr.bf16.mxu0 0
        %1033 = vmatmul.mubr.bf16.gmra.mxu0 %v470
        %v1034 = vpop.f32.mrf.mxu0
        %v1035 = vadd.f32 0.0, %v1034
        %v1036 = vpop.f32.mrf.mxu0
        %v1037 = vpop.f32.mrf.mxu0
        %v1038 = vadd.f32 0.0, %v1037
        %v1039 = vpop.f32.mrf.mxu0
        %1040 = vmatprep.mubr.bf16.mxu0 0
        %1041 = vmatmul.mubr.bf16.gmra.mxu0 %v473
        %v1042 = vpop.f32.mrf.mxu0
        %v1043 = vadd.f32 0.0, %v1042
        %v1044 = vpop.f32.mrf.mxu0
        %v1045 = vpop.f32.mrf.mxu0
        %v1046 = vadd.f32 0.0, %v1045
        %v1047 = vpop.f32.mrf.mxu0
        %1048 = vmatprep.mubr.bf16.mxu0 0
        %1049 = vmatmul.mubr.bf16.gmra.mxu0 %v476
        %v1050 = vpop.f32.mrf.mxu0
        %v1051 = vadd.f32 0.0, %v1050
        %v1052 = vpop.f32.mrf.mxu0
        %v1053 = vpop.f32.mrf.mxu0
        %v1054 = vadd.f32 0.0, %v1053
        %v1055 = vpop.f32.mrf.mxu0
        %1056 = vdwg.mxu0
        %v1059 = vunpack.c.l.b16 %v386
        %v1060 = vunpack.c.l.b16 %v387
        %v1061 = vpack.c.b16 %v1060, %v1059
        %1063 = vmatprep.subr.bf16.mxu0 0
        %1064 = vmatpush1.bf16.msra.mxu0 0
        %1065 = vmatprep.subr.bf16.mxu0 0
        %1066 = vmatpush1.bf16.msra.mxu0 0
        %1067 = vmatprep.subr.bf16.mxu0 0
        %1068 = vmatpush1.bf16.msra.mxu0 0
        %1069 = vmatprep.subr.bf16.mxu0 0
        %1070 = vmatpush1.bf16.msra.mxu0 0
        %1071 = vmatprep.subr.bf16.mxu0 0
        %1072 = vmatpush1.bf16.msra.mxu0 0
        %1073 = vmatprep.subr.bf16.mxu0 0
        %1074 = vmatpush1.bf16.msra.mxu0 0
        %1075 = vmatprep.subr.bf16.mxu0 0
        %1076 = vmatpush1.bf16.msra.mxu0 0
        %1077 = vmatprep.subr.bf16.mxu0 0
        %1078 = vmatpush1.bf16.msra.mxu0 %v1061
        %1079 = vmatprep.subr.bf16.mxu0 0
        %1080 = vmatpush2.bf16.msra.mxu0 0
        %1081 = vmatprep.subr.bf16.mxu0 0
        %1082 = vmatpush2.bf16.msra.mxu0 0
        %1083 = vmatprep.subr.bf16.mxu0 0
        %1084 = vmatpush2.bf16.msra.mxu0 0
        %1085 = vmatprep.subr.bf16.mxu0 0
        %1086 = vmatpush2.bf16.msra.mxu0 0
        %1087 = vmatprep.subr.bf16.mxu0 0
        %1088 = vmatpush2.bf16.msra.mxu0 0
        %1089 = vmatprep.subr.bf16.mxu0 0
        %1090 = vmatpush2.bf16.msra.mxu0 0
        %1091 = vmatprep.subr.bf16.mxu0 0
        %1092 = vmatpush2.bf16.msra.mxu0 0
        %1093 = vmatprep.subr.bf16.mxu0 0
        %1094 = vmatpush2.bf16.msra.mxu0 0
        %1095 = vmatprep.mubr.bf16.mxu0 0
        %1096 = vmatmul.mubr.bf16.gmra.mxu0 %v622
        %v1097 = vpop.f32.mrf.mxu0
        %v1098 = vadd.f32 %v995, %v1097
        %v1099 = vpop.f32.mrf.mxu0
        %v1100 = vpop.f32.mrf.mxu0
        %v1101 = vadd.f32 %v998, %v1100
        %v1102 = vpop.f32.mrf.mxu0
        %1103 = vmatprep.mubr.bf16.mxu0 0
        %1104 = vmatmul.mubr.bf16.gmra.mxu0 %v625
        %v1105 = vpop.f32.mrf.mxu0
        %v1106 = vadd.f32 %v1003, %v1105
        %v1107 = vpop.f32.mrf.mxu0
        %v1108 = vpop.f32.mrf.mxu0
        %v1109 = vadd.f32 %v1006, %v1108
        %v1110 = vpop.f32.mrf.mxu0
        %1111 = vmatprep.mubr.bf16.mxu0 0
        %1112 = vmatmul.mubr.bf16.gmra.mxu0 %v628
        %v1113 = vpop.f32.mrf.mxu0
        %v1114 = vadd.f32 %v1011, %v1113
        %v1115 = vpop.f32.mrf.mxu0
        %v1116 = vpop.f32.mrf.mxu0
        %v1117 = vadd.f32 %v1014, %v1116
        %v1118 = vpop.f32.mrf.mxu0
        %1119 = vmatprep.mubr.bf16.mxu0 0
        %1120 = vmatmul.mubr.bf16.gmra.mxu0 %v631
        %v1121 = vpop.f32.mrf.mxu0
        %v1122 = vadd.f32 %v1019, %v1121
        %v1123 = vpop.f32.mrf.mxu0
        %v1124 = vpop.f32.mrf.mxu0
        %v1125 = vadd.f32 %v1022, %v1124
        %v1126 = vpop.f32.mrf.mxu0
        %1127 = vmatprep.mubr.bf16.mxu0 0
        %1128 = vmatmul.mubr.bf16.gmra.mxu0 %v634
        %v1129 = vpop.f32.mrf.mxu0
        %v1130 = vadd.f32 %v1027, %v1129
        %v1131 = vpop.f32.mrf.mxu0
        %v1132 = vpop.f32.mrf.mxu0
        %v1133 = vadd.f32 %v1030, %v1132
        %v1134 = vpop.f32.mrf.mxu0
        %1135 = vmatprep.mubr.bf16.mxu0 0
        %1136 = vmatmul.mubr.bf16.gmra.mxu0 %v637
        %v1137 = vpop.f32.mrf.mxu0
        %v1138 = vadd.f32 %v1035, %v1137
        %v1139 = vpop.f32.mrf.mxu0
        %v1140 = vpop.f32.mrf.mxu0
        %v1141 = vadd.f32 %v1038, %v1140
        %v1142 = vpop.f32.mrf.mxu0
        %1143 = vmatprep.mubr.bf16.mxu0 0
        %1144 = vmatmul.mubr.bf16.gmra.mxu0 %v640
        %v1145 = vpop.f32.mrf.mxu0
        %v1146 = vadd.f32 %v1043, %v1145
        %v1147 = vpop.f32.mrf.mxu0
        %v1148 = vpop.f32.mrf.mxu0
        %v1149 = vadd.f32 %v1046, %v1148
        %v1150 = vpop.f32.mrf.mxu0
        %1151 = vmatprep.mubr.bf16.mxu0 0
        %1152 = vmatmul.mubr.bf16.gmra.mxu0 %v643
        %v1153 = vpop.f32.mrf.mxu0
        %v1154 = vadd.f32 %v1051, %v1153
        %v1155 = vpop.f32.mrf.mxu0
        %v1156 = vpop.f32.mrf.mxu0
        %v1157 = vadd.f32 %v1054, %v1156
        %v1158 = vpop.f32.mrf.mxu0
        %1159 = vdwg.mxu0
        %s1160 = scalar_lea.vmem [#allocation2], 16
        %v1161 = vld [vmem:[%s1160] sm:$0xf]
        %v1162 = vld [vmem:[%s1160 + $0x4] sm:$0xf]
        %v1163 = vld [vmem:[%s1160 + $0x8] sm:$0xf]
        %v1164 = vld [vmem:[%s1160 + $0xc] sm:$0xf]
        %v1165 = vld [vmem:[%s1160 + $0x10] sm:$0xf]
        %v1166 = vld [vmem:[%s1160 + $0x14] sm:$0xf]
        %v1167 = vld [vmem:[%s1160 + $0x18] sm:$0xf]
        %v1168 = vld [vmem:[%s1160 + $0x1c] sm:$0xf]
        %v1169 = vld [vmem:[%s1160 + $0x20] sm:$0xf]
        %v1170 = vld [vmem:[%s1160 + $0x24] sm:$0xf]
        %v1171 = vld [vmem:[%s1160 + $0x28] sm:$0xf]
        %v1172 = vld [vmem:[%s1160 + $0x2c] sm:$0xf]
        %v1173 = vld [vmem:[%s1160 + $0x30] sm:$0xf]
        %v1174 = vld [vmem:[%s1160 + $0x34] sm:$0xf]
        %v1175 = vld [vmem:[%s1160 + $0x38] sm:$0xf]
        %v1176 = vld [vmem:[%s1160 + $0x3c] sm:$0xf]
        %s1177 = scalar_lea.vmem %s2, 48
        %v1178 = vld [vmem:[%s1177] sm:$0xf]
        %v1179 = vld [vmem:[%s1177 + $0x4] sm:$0xf]
        %v1196 = vunpack.c.l.b16 %v1161
        %v1197 = vunpack.c.l.b16 %v1162
        %v1198 = vunpack.c.l.b16 %v1163
        %v1199 = vunpack.c.l.b16 %v1164
        %v1200 = vunpack.c.l.b16 %v1165
        %v1201 = vunpack.c.l.b16 %v1166
        %v1202 = vunpack.c.l.b16 %v1167
        %v1203 = vunpack.c.l.b16 %v1168
        %v1204 = vunpack.c.l.b16 %v1169
        %v1205 = vunpack.c.l.b16 %v1170
        %v1206 = vunpack.c.l.b16 %v1171
        %v1207 = vunpack.c.l.b16 %v1172
        %v1208 = vunpack.c.l.b16 %v1173
        %v1209 = vunpack.c.l.b16 %v1174
        %v1210 = vunpack.c.l.b16 %v1175
        %v1211 = vunpack.c.l.b16 %v1176
        %v1212 = vpack.c.b16 %v1197, %v1196
        %v1213 = vpack.c.b16 %v1199, %v1198
        %v1214 = vpack.c.b16 %v1201, %v1200
        %v1215 = vpack.c.b16 %v1203, %v1202
        %v1216 = vpack.c.b16 %v1205, %v1204
        %v1217 = vpack.c.b16 %v1207, %v1206
        %v1218 = vpack.c.b16 %v1209, %v1208
        %v1219 = vpack.c.b16 %v1211, %v1210
        %v1222 = vunpack.c.l.b16 %v1178
        %v1223 = vunpack.c.l.b16 %v1179
        %v1224 = vpack.c.b16 %v1223, %v1222
        %v1227 = vsel %vm453, %v1212, 0
        %v1230 = vsel %vm453, %v1213, 0
        %v1233 = vsel %vm453, %v1214, 0
        %v1236 = vsel %vm453, %v1215, 0
        %v1239 = vsel %vm453, %v1216, 0
        %v1242 = vsel %vm453, %v1217, 0
        %v1245 = vsel %vm453, %v1218, 0
        %v1248 = vsel %vm453, %v1219, 0
        %1250 = vmatprep.subr.bf16.mxu0 0
        %1251 = vmatpush1.bf16.msra.mxu0 0
        %1252 = vmatprep.subr.bf16.mxu0 0
        %1253 = vmatpush1.bf16.msra.mxu0 0
        %1254 = vmatprep.subr.bf16.mxu0 0
        %1255 = vmatpush1.bf16.msra.mxu0 0
        %1256 = vmatprep.subr.bf16.mxu0 0
        %1257 = vmatpush1.bf16.msra.mxu0 0
        %1258 = vmatprep.subr.bf16.mxu0 0
        %1259 = vmatpush1.bf16.msra.mxu0 0
        %1260 = vmatprep.subr.bf16.mxu0 0
        %1261 = vmatpush1.bf16.msra.mxu0 0
        %1262 = vmatprep.subr.bf16.mxu0 0
        %1263 = vmatpush1.bf16.msra.mxu0 0
        %1264 = vmatprep.subr.bf16.mxu0 0
        %1265 = vmatpush1.bf16.msra.mxu0 %v1224
        %1266 = vmatprep.subr.bf16.mxu0 0
        %1267 = vmatpush2.bf16.msra.mxu0 0
        %1268 = vmatprep.subr.bf16.mxu0 0
        %1269 = vmatpush2.bf16.msra.mxu0 0
        %1270 = vmatprep.subr.bf16.mxu0 0
        %1271 = vmatpush2.bf16.msra.mxu0 0
        %1272 = vmatprep.subr.bf16.mxu0 0
        %1273 = vmatpush2.bf16.msra.mxu0 0
        %1274 = vmatprep.subr.bf16.mxu0 0
        %1275 = vmatpush2.bf16.msra.mxu0 0
        %1276 = vmatprep.subr.bf16.mxu0 0
        %1277 = vmatpush2.bf16.msra.mxu0 0
        %1278 = vmatprep.subr.bf16.mxu0 0
        %1279 = vmatpush2.bf16.msra.mxu0 0
        %1280 = vmatprep.subr.bf16.mxu0 0
        %1281 = vmatpush2.bf16.msra.mxu0 0
        %1282 = vmatprep.mubr.bf16.mxu0 0
        %1283 = vmatmul.mubr.bf16.gmra.mxu0 %v1227
        %v1284 = vpop.f32.mrf.mxu0
        %v1285 = vadd.f32 0.0, %v1284
        %v1286 = vpop.f32.mrf.mxu0
        %v1287 = vpop.f32.mrf.mxu0
        %v1288 = vadd.f32 0.0, %v1287
        %v1289 = vpop.f32.mrf.mxu0
        %1290 = vmatprep.mubr.bf16.mxu0 0
        %1291 = vmatmul.mubr.bf16.gmra.mxu0 %v1230
        %v1292 = vpop.f32.mrf.mxu0
        %v1293 = vadd.f32 0.0, %v1292
        %v1294 = vpop.f32.mrf.mxu0
        %v1295 = vpop.f32.mrf.mxu0
        %v1296 = vadd.f32 0.0, %v1295
        %v1297 = vpop.f32.mrf.mxu0
        %1298 = vmatprep.mubr.bf16.mxu0 0
        %1299 = vmatmul.mubr.bf16.gmra.mxu0 %v1233
        %v1300 = vpop.f32.mrf.mxu0
        %v1301 = vadd.f32 0.0, %v1300
        %v1302 = vpop.f32.mrf.mxu0
        %v1303 = vpop.f32.mrf.mxu0
        %v1304 = vadd.f32 0.0, %v1303
        %v1305 = vpop.f32.mrf.mxu0
        %1306 = vmatprep.mubr.bf16.mxu0 0
        %1307 = vmatmul.mubr.bf16.gmra.mxu0 %v1236
        %v1308 = vpop.f32.mrf.mxu0
        %v1309 = vadd.f32 0.0, %v1308
        %v1310 = vpop.f32.mrf.mxu0
        %v1311 = vpop.f32.mrf.mxu0
        %v1312 = vadd.f32 0.0, %v1311
        %v1313 = vpop.f32.mrf.mxu0
        %1314 = vmatprep.mubr.bf16.mxu0 0
        %1315 = vmatmul.mubr.bf16.gmra.mxu0 %v1239
        %v1316 = vpop.f32.mrf.mxu0
        %v1317 = vadd.f32 0.0, %v1316
        %v1318 = vpop.f32.mrf.mxu0
        %v1319 = vpop.f32.mrf.mxu0
        %v1320 = vadd.f32 0.0, %v1319
        %v1321 = vpop.f32.mrf.mxu0
        %1322 = vmatprep.mubr.bf16.mxu0 0
        %1323 = vmatmul.mubr.bf16.gmra.mxu0 %v1242
        %v1324 = vpop.f32.mrf.mxu0
        %v1325 = vadd.f32 0.0, %v1324
        %v1326 = vpop.f32.mrf.mxu0
        %v1327 = vpop.f32.mrf.mxu0
        %v1328 = vadd.f32 0.0, %v1327
        %v1329 = vpop.f32.mrf.mxu0
        %1330 = vmatprep.mubr.bf16.mxu0 0
        %1331 = vmatmul.mubr.bf16.gmra.mxu0 %v1245
        %v1332 = vpop.f32.mrf.mxu0
        %v1333 = vadd.f32 0.0, %v1332
        %v1334 = vpop.f32.mrf.mxu0
        %v1335 = vpop.f32.mrf.mxu0
        %v1336 = vadd.f32 0.0, %v1335
        %v1337 = vpop.f32.mrf.mxu0
        %1338 = vmatprep.mubr.bf16.mxu0 0
        %1339 = vmatmul.mubr.bf16.gmra.mxu0 %v1248
        %v1340 = vpop.f32.mrf.mxu0
        %v1341 = vadd.f32 0.0, %v1340
        %v1342 = vpop.f32.mrf.mxu0
        %v1343 = vpop.f32.mrf.mxu0
        %v1344 = vadd.f32 0.0, %v1343
        %v1345 = vpop.f32.mrf.mxu0
        %1346 = vdwg.mxu0
        %v1347 = vadd.f32 %v680, %v1285
        %v1348 = vadd.f32 %v683, %v1288
        %v1349 = vadd.f32 %v688, %v1293
        %v1350 = vadd.f32 %v691, %v1296
        %v1351 = vadd.f32 %v696, %v1301
        %v1352 = vadd.f32 %v699, %v1304
        %v1353 = vadd.f32 %v704, %v1309
        %v1354 = vadd.f32 %v707, %v1312
        %v1355 = vadd.f32 %v712, %v1317
        %v1356 = vadd.f32 %v715, %v1320
        %v1357 = vadd.f32 %v720, %v1325
        %v1358 = vadd.f32 %v723, %v1328
        %v1359 = vadd.f32 %v728, %v1333
        %v1360 = vadd.f32 %v731, %v1336
        %v1361 = vadd.f32 %v736, %v1341
        %v1362 = vadd.f32 %v739, %v1344
        %s1363 = scalar_lea.vmem %s2, 56
        %v1364 = vld [vmem:[%s1363] sm:$0xf]
        %v1365 = vld [vmem:[%s1363 + $0x4] sm:$0xf]
        %v1368 = vunpack.c.l.b16 %v1364
        %v1369 = vunpack.c.l.b16 %v1365
        %v1370 = vpack.c.b16 %v1369, %v1368
        %1372 = vmatprep.subr.bf16.mxu0 0
        %1373 = vmatpush1.bf16.msra.mxu0 0
        %1374 = vmatprep.subr.bf16.mxu0 0
        %1375 = vmatpush1.bf16.msra.mxu0 0
        %1376 = vmatprep.subr.bf16.mxu0 0
        %1377 = vmatpush1.bf16.msra.mxu0 0
        %1378 = vmatprep.subr.bf16.mxu0 0
        %1379 = vmatpush1.bf16.msra.mxu0 0
        %1380 = vmatprep.subr.bf16.mxu0 0
        %1381 = vmatpush1.bf16.msra.mxu0 0
        %1382 = vmatprep.subr.bf16.mxu0 0
        %1383 = vmatpush1.bf16.msra.mxu0 0
        %1384 = vmatprep.subr.bf16.mxu0 0
        %1385 = vmatpush1.bf16.msra.mxu0 0
        %1386 = vmatprep.subr.bf16.mxu0 0
        %1387 = vmatpush1.bf16.msra.mxu0 %v1370
        %1388 = vmatprep.subr.bf16.mxu0 0
        %1389 = vmatpush2.bf16.msra.mxu0 0
        %1390 = vmatprep.subr.bf16.mxu0 0
        %1391 = vmatpush2.bf16.msra.mxu0 0
        %1392 = vmatprep.subr.bf16.mxu0 0
        %1393 = vmatpush2.bf16.msra.mxu0 0
        %1394 = vmatprep.subr.bf16.mxu0 0
        %1395 = vmatpush2.bf16.msra.mxu0 0
        %1396 = vmatprep.subr.bf16.mxu0 0
        %1397 = vmatpush2.bf16.msra.mxu0 0
        %1398 = vmatprep.subr.bf16.mxu0 0
        %1399 = vmatpush2.bf16.msra.mxu0 0
        %1400 = vmatprep.subr.bf16.mxu0 0
        %1401 = vmatpush2.bf16.msra.mxu0 0
        %1402 = vmatprep.subr.bf16.mxu0 0
        %1403 = vmatpush2.bf16.msra.mxu0 0
        %1404 = vmatprep.mubr.bf16.mxu0 0
        %1405 = vmatmul.mubr.bf16.gmra.mxu0 %v1227
        %v1406 = vpop.f32.mrf.mxu0
        %v1407 = vadd.f32 0.0, %v1406
        %v1408 = vpop.f32.mrf.mxu0
        %v1409 = vpop.f32.mrf.mxu0
        %v1410 = vadd.f32 0.0, %v1409
        %v1411 = vpop.f32.mrf.mxu0
        %1412 = vmatprep.mubr.bf16.mxu0 0
        %1413 = vmatmul.mubr.bf16.gmra.mxu0 %v1230
        %v1414 = vpop.f32.mrf.mxu0
        %v1415 = vadd.f32 0.0, %v1414
        %v1416 = vpop.f32.mrf.mxu0
        %v1417 = vpop.f32.mrf.mxu0
        %v1418 = vadd.f32 0.0, %v1417
        %v1419 = vpop.f32.mrf.mxu0
        %1420 = vmatprep.mubr.bf16.mxu0 0
        %1421 = vmatmul.mubr.bf16.gmra.mxu0 %v1233
        %v1422 = vpop.f32.mrf.mxu0
        %v1423 = vadd.f32 0.0, %v1422
        %v1424 = vpop.f32.mrf.mxu0
        %v1425 = vpop.f32.mrf.mxu0
        %v1426 = vadd.f32 0.0, %v1425
        %v1427 = vpop.f32.mrf.mxu0
        %1428 = vmatprep.mubr.bf16.mxu0 0
        %1429 = vmatmul.mubr.bf16.gmra.mxu0 %v1236
        %v1430 = vpop.f32.mrf.mxu0
        %v1431 = vadd.f32 0.0, %v1430
        %v1432 = vpop.f32.mrf.mxu0
        %v1433 = vpop.f32.mrf.mxu0
        %v1434 = vadd.f32 0.0, %v1433
        %v1435 = vpop.f32.mrf.mxu0
        %1436 = vmatprep.mubr.bf16.mxu0 0
        %1437 = vmatmul.mubr.bf16.gmra.mxu0 %v1239
        %v1438 = vpop.f32.mrf.mxu0
        %v1439 = vadd.f32 0.0, %v1438
        %v1440 = vpop.f32.mrf.mxu0
        %v1441 = vpop.f32.mrf.mxu0
        %v1442 = vadd.f32 0.0, %v1441
        %v1443 = vpop.f32.mrf.mxu0
        %1444 = vmatprep.mubr.bf16.mxu0 0
        %1445 = vmatmul.mubr.bf16.gmra.mxu0 %v1242
        %v1446 = vpop.f32.mrf.mxu0
        %v1447 = vadd.f32 0.0, %v1446
        %v1448 = vpop.f32.mrf.mxu0
        %v1449 = vpop.f32.mrf.mxu0
        %v1450 = vadd.f32 0.0, %v1449
        %v1451 = vpop.f32.mrf.mxu0
        %1452 = vmatprep.mubr.bf16.mxu0 0
        %1453 = vmatmul.mubr.bf16.gmra.mxu0 %v1245
        %v1454 = vpop.f32.mrf.mxu0
        %v1455 = vadd.f32 0.0, %v1454
        %v1456 = vpop.f32.mrf.mxu0
        %v1457 = vpop.f32.mrf.mxu0
        %v1458 = vadd.f32 0.0, %v1457
        %v1459 = vpop.f32.mrf.mxu0
        %1460 = vmatprep.mubr.bf16.mxu0 0
        %1461 = vmatmul.mubr.bf16.gmra.mxu0 %v1248
        %v1462 = vpop.f32.mrf.mxu0
        %v1463 = vadd.f32 0.0, %v1462
        %v1464 = vpop.f32.mrf.mxu0
        %v1465 = vpop.f32.mrf.mxu0
        %v1466 = vadd.f32 0.0, %v1465
        %v1467 = vpop.f32.mrf.mxu0
        %1468 = vdwg.mxu0
        %v1469 = vadd.f32 %v889, %v1407
        %v1470 = vadd.f32 %v892, %v1410
        %v1471 = vadd.f32 %v897, %v1415
        %v1472 = vadd.f32 %v900, %v1418
        %v1473 = vadd.f32 %v905, %v1423
        %v1474 = vadd.f32 %v908, %v1426
        %v1475 = vadd.f32 %v913, %v1431
        %v1476 = vadd.f32 %v916, %v1434
        %v1477 = vadd.f32 %v921, %v1439
        %v1478 = vadd.f32 %v924, %v1442
        %v1479 = vadd.f32 %v929, %v1447
        %v1480 = vadd.f32 %v932, %v1450
        %v1481 = vadd.f32 %v937, %v1455
        %v1482 = vadd.f32 %v940, %v1458
        %v1483 = vadd.f32 %v945, %v1463
        %v1484 = vadd.f32 %v948, %v1466
        %s1485 = scalar_lea.vmem %s2, 64
        %v1486 = vld [vmem:[%s1485] sm:$0xf]
        %v1487 = vld [vmem:[%s1485 + $0x4] sm:$0xf]
        %v1490 = vunpack.c.l.b16 %v1486
        %v1491 = vunpack.c.l.b16 %v1487
        %v1492 = vpack.c.b16 %v1491, %v1490
        %1494 = vmatprep.subr.bf16.mxu0 0
        %1495 = vmatpush1.bf16.msra.mxu0 0
        %1496 = vmatprep.subr.bf16.mxu0 0
        %1497 = vmatpush1.bf16.msra.mxu0 0
        %1498 = vmatprep.subr.bf16.mxu0 0
        %1499 = vmatpush1.bf16.msra.mxu0 0
        %1500 = vmatprep.subr.bf16.mxu0 0
        %1501 = vmatpush1.bf16.msra.mxu0 0
        %1502 = vmatprep.subr.bf16.mxu0 0
        %1503 = vmatpush1.bf16.msra.mxu0 0
        %1504 = vmatprep.subr.bf16.mxu0 0
        %1505 = vmatpush1.bf16.msra.mxu0 0
        %1506 = vmatprep.subr.bf16.mxu0 0
        %1507 = vmatpush1.bf16.msra.mxu0 0
        %1508 = vmatprep.subr.bf16.mxu0 0
        %1509 = vmatpush1.bf16.msra.mxu0 %v1492
        %1510 = vmatprep.subr.bf16.mxu0 0
        %1511 = vmatpush2.bf16.msra.mxu0 0
        %1512 = vmatprep.subr.bf16.mxu0 0
        %1513 = vmatpush2.bf16.msra.mxu0 0
        %1514 = vmatprep.subr.bf16.mxu0 0
        %1515 = vmatpush2.bf16.msra.mxu0 0
        %1516 = vmatprep.subr.bf16.mxu0 0
        %1517 = vmatpush2.bf16.msra.mxu0 0
        %1518 = vmatprep.subr.bf16.mxu0 0
        %1519 = vmatpush2.bf16.msra.mxu0 0
        %1520 = vmatprep.subr.bf16.mxu0 0
        %1521 = vmatpush2.bf16.msra.mxu0 0
        %1522 = vmatprep.subr.bf16.mxu0 0
        %1523 = vmatpush2.bf16.msra.mxu0 0
        %1524 = vmatprep.subr.bf16.mxu0 0
        %1525 = vmatpush2.bf16.msra.mxu0 0
        %1526 = vmatprep.mubr.bf16.mxu0 0
        %1527 = vmatmul.mubr.bf16.gmra.mxu0 %v1227
        %v1528 = vpop.f32.mrf.mxu0
        %v1529 = vadd.f32 0.0, %v1528
        %v1530 = vpop.f32.mrf.mxu0
        %v1531 = vpop.f32.mrf.mxu0
        %v1532 = vadd.f32 0.0, %v1531
        %v1533 = vpop.f32.mrf.mxu0
        %1534 = vmatprep.mubr.bf16.mxu0 0
        %1535 = vmatmul.mubr.bf16.gmra.mxu0 %v1230
        %v1536 = vpop.f32.mrf.mxu0
        %v1537 = vadd.f32 0.0, %v1536
        %v1538 = vpop.f32.mrf.mxu0
        %v1539 = vpop.f32.mrf.mxu0
        %v1540 = vadd.f32 0.0, %v1539
        %v1541 = vpop.f32.mrf.mxu0
        %1542 = vmatprep.mubr.bf16.mxu0 0
        %1543 = vmatmul.mubr.bf16.gmra.mxu0 %v1233
        %v1544 = vpop.f32.mrf.mxu0
        %v1545 = vadd.f32 0.0, %v1544
        %v1546 = vpop.f32.mrf.mxu0
        %v1547 = vpop.f32.mrf.mxu0
        %v1548 = vadd.f32 0.0, %v1547
        %v1549 = vpop.f32.mrf.mxu0
        %1550 = vmatprep.mubr.bf16.mxu0 0
        %1551 = vmatmul.mubr.bf16.gmra.mxu0 %v1236
        %v1552 = vpop.f32.mrf.mxu0
        %v1553 = vadd.f32 0.0, %v1552
        %v1554 = vpop.f32.mrf.mxu0
        %v1555 = vpop.f32.mrf.mxu0
        %v1556 = vadd.f32 0.0, %v1555
        %v1557 = vpop.f32.mrf.mxu0
        %1558 = vmatprep.mubr.bf16.mxu0 0
        %1559 = vmatmul.mubr.bf16.gmra.mxu0 %v1239
        %v1560 = vpop.f32.mrf.mxu0
        %v1561 = vadd.f32 0.0, %v1560
        %v1562 = vpop.f32.mrf.mxu0
        %v1563 = vpop.f32.mrf.mxu0
        %v1564 = vadd.f32 0.0, %v1563
        %v1565 = vpop.f32.mrf.mxu0
        %1566 = vmatprep.mubr.bf16.mxu0 0
        %1567 = vmatmul.mubr.bf16.gmra.mxu0 %v1242
        %v1568 = vpop.f32.mrf.mxu0
        %v1569 = vadd.f32 0.0, %v1568
        %v1570 = vpop.f32.mrf.mxu0
        %v1571 = vpop.f32.mrf.mxu0
        %v1572 = vadd.f32 0.0, %v1571
        %v1573 = vpop.f32.mrf.mxu0
        %1574 = vmatprep.mubr.bf16.mxu0 0
        %1575 = vmatmul.mubr.bf16.gmra.mxu0 %v1245
        %v1576 = vpop.f32.mrf.mxu0
        %v1577 = vadd.f32 0.0, %v1576
        %v1578 = vpop.f32.mrf.mxu0
        %v1579 = vpop.f32.mrf.mxu0
        %v1580 = vadd.f32 0.0, %v1579
        %v1581 = vpop.f32.mrf.mxu0
        %1582 = vmatprep.mubr.bf16.mxu0 0
        %1583 = vmatmul.mubr.bf16.gmra.mxu0 %v1248
        %v1584 = vpop.f32.mrf.mxu0
        %v1585 = vadd.f32 0.0, %v1584
        %v1586 = vpop.f32.mrf.mxu0
        %v1587 = vpop.f32.mrf.mxu0
        %v1588 = vadd.f32 0.0, %v1587
        %v1589 = vpop.f32.mrf.mxu0
        %1590 = vdwg.mxu0
        %v1591 = vadd.f32 %v1098, %v1529
        %v1592 = vadd.f32 %v1101, %v1532
        %v1593 = vadd.f32 %v1106, %v1537
        %v1594 = vadd.f32 %v1109, %v1540
        %v1595 = vadd.f32 %v1114, %v1545
        %v1596 = vadd.f32 %v1117, %v1548
        %v1597 = vadd.f32 %v1122, %v1553
        %v1598 = vadd.f32 %v1125, %v1556
        %v1599 = vadd.f32 %v1130, %v1561
        %v1600 = vadd.f32 %v1133, %v1564
        %v1601 = vadd.f32 %v1138, %v1569
        %v1602 = vadd.f32 %v1141, %v1572
        %v1603 = vadd.f32 %v1146, %v1577
        %v1604 = vadd.f32 %v1149, %v1580
        %v1605 = vadd.f32 %v1154, %v1585
        %v1606 = vadd.f32 %v1157, %v1588
        %v1607 = vrot.slane %v1347, 7
        %v1608 = vrot.slane %v1349, 7
        %v1609 = vrot.slane %v1351, 7
        %v1610 = vrot.slane %v1353, 7
        %v1611 = vrot.slane %v1355, 7
        %v1612 = vrot.slane %v1357, 7
        %v1613 = vrot.slane %v1359, 7
        %v1614 = vrot.slane %v1361, 7
        %v1615 = vrot.slane %v1348, 7
        %v1616 = vrot.slane %v1350, 7
        %v1617 = vrot.slane %v1352, 7
        %v1618 = vrot.slane %v1354, 7
        %v1619 = vrot.slane %v1356, 7
        %v1620 = vrot.slane %v1358, 7
        %v1621 = vrot.slane %v1360, 7
        %v1622 = vrot.slane %v1362, 7
        %v1623 = vlaneseq
        %v1624 = vshrl.u32 %v1623, 7
        %vm1625 = vcmp.lt.s32.totalorder %v1624, 1
        %v1626 = vsel %vm1625, %v1607, %v1615
        %v1627 = vsel %vm1625, %v1608, %v1616
        %v1628 = vsel %vm1625, %v1609, %v1617
        %v1629 = vsel %vm1625, %v1610, %v1618
        %v1630 = vsel %vm1625, %v1611, %v1619
        %v1631 = vsel %vm1625, %v1612, %v1620
        %v1632 = vsel %vm1625, %v1613, %v1621
        %v1633 = vsel %vm1625, %v1614, %v1622
        %v1634 = vsel %vm1625, %v1615, %v1607
        %v1635 = vsel %vm1625, %v1616, %v1608
        %v1636 = vsel %vm1625, %v1617, %v1609
        %v1637 = vsel %vm1625, %v1618, %v1610
        %v1638 = vsel %vm1625, %v1619, %v1611
        %v1639 = vsel %vm1625, %v1620, %v1612
        %v1640 = vsel %vm1625, %v1621, %v1613
        %v1641 = vsel %vm1625, %v1622, %v1614
        %v1642 = vrot.slane %v1591, 1
        %v1643 = vrot.slane %v1593, 1
        %v1644 = vrot.slane %v1595, 1
        %v1645 = vrot.slane %v1597, 1
        %v1646 = vrot.slane %v1599, 1
        %v1647 = vrot.slane %v1601, 1
        %v1648 = vrot.slane %v1603, 1
        %v1649 = vrot.slane %v1605, 1
        %v1650 = vrot.slane %v1592, 1
        %v1651 = vrot.slane %v1594, 1
        %v1652 = vrot.slane %v1596, 1
        %v1653 = vrot.slane %v1598, 1
        %v1654 = vrot.slane %v1600, 1
        %v1655 = vrot.slane %v1602, 1
        %v1656 = vrot.slane %v1604, 1
        %v1657 = vrot.slane %v1606, 1
        %vm1658 = vcmp.lt.s32.totalorder %v1624, 7
        %v1659 = vsel %vm1658, %v1642, %v1650
        %v1660 = vsel %vm1658, %v1643, %v1651
        %v1661 = vsel %vm1658, %v1644, %v1652
        %v1662 = vsel %vm1658, %v1645, %v1653
        %v1663 = vsel %vm1658, %v1646, %v1654
        %v1664 = vsel %vm1658, %v1647, %v1655
        %v1665 = vsel %vm1658, %v1648, %v1656
        %v1666 = vsel %vm1658, %v1649, %v1657
        %v1667 = vsel %vm1658, %v1650, %v1642
        %v1668 = vsel %vm1658, %v1651, %v1643
        %v1669 = vsel %vm1658, %v1652, %v1644
        %v1670 = vsel %vm1658, %v1653, %v1645
        %v1671 = vsel %vm1658, %v1654, %v1646
        %v1672 = vsel %vm1658, %v1655, %v1647
        %v1673 = vsel %vm1658, %v1656, %v1648
        %v1674 = vsel %vm1658, %v1657, %v1649
        %v1675 = vadd.s32 %v1624, 8
        %vm1676 = vcmp.gt.s32.totalorder %v1624, 0
        %vm1677 = vcmp.gt.s32.totalorder %v1675, 0
        %v1678 = vsel %vm1676, 1, 0
        %v1679 = vsel %vm1677, 1, 0
        %vm1680 = vcmp.eq.s32.totalorder %v1678, 1
        %vm1681 = vcmp.eq.s32.totalorder %v1679, 1
        %v1682 = vsel %vm1680, %v1634, 0.0
        %v1683 = vsel %vm1681, %v1626, 0.0
        %v1684 = vsel %vm1680, %v1635, 0.0
        %v1685 = vsel %vm1681, %v1627, 0.0
        %v1686 = vsel %vm1680, %v1636, 0.0
        %v1687 = vsel %vm1681, %v1628, 0.0
        %v1688 = vsel %vm1680, %v1637, 0.0
        %v1689 = vsel %vm1681, %v1629, 0.0
        %v1690 = vsel %vm1680, %v1638, 0.0
        %v1691 = vsel %vm1681, %v1630, 0.0
        %v1692 = vsel %vm1680, %v1639, 0.0
        %v1693 = vsel %vm1681, %v1631, 0.0
        %v1694 = vsel %vm1680, %v1640, 0.0
        %v1695 = vsel %vm1681, %v1632, 0.0
        %v1696 = vsel %vm1680, %v1641, 0.0
        %v1697 = vsel %vm1681, %v1633, 0.0
        %v1698 = vadd.f32 %v1469, %v1682
        %v1699 = vadd.f32 %v1470, %v1683
        %v1700 = vadd.f32 %v1471, %v1684
        %v1701 = vadd.f32 %v1472, %v1685
        %v1702 = vadd.f32 %v1473, %v1686
        %v1703 = vadd.f32 %v1474, %v1687
        %v1704 = vadd.f32 %v1475, %v1688
        %v1705 = vadd.f32 %v1476, %v1689
        %v1706 = vadd.f32 %v1477, %v1690
        %v1707 = vadd.f32 %v1478, %v1691
        %v1708 = vadd.f32 %v1479, %v1692
        %v1709 = vadd.f32 %v1480, %v1693
        %v1710 = vadd.f32 %v1481, %v1694
        %v1711 = vadd.f32 %v1482, %v1695
        %v1712 = vadd.f32 %v1483, %v1696
        %v1713 = vadd.f32 %v1484, %v1697
        %vm1714 = vcmp.lt.s32.totalorder %v1624, 15
        %vm1715 = vcmp.lt.s32.totalorder %v1675, 15
        %v1716 = vsel %vm1714, 1, 0
        %v1717 = vsel %vm1715, 1, 0
        %vm1718 = vcmp.eq.s32.totalorder %v1716, 1
        %vm1719 = vcmp.eq.s32.totalorder %v1717, 1
        %v1720 = vsel %vm1718, %v1659, 0.0
        %v1721 = vsel %vm1719, %v1667, 0.0
        %v1722 = vsel %vm1718, %v1660, 0.0
        %v1723 = vsel %vm1719, %v1668, 0.0
        %v1724 = vsel %vm1718, %v1661, 0.0
        %v1725 = vsel %vm1719, %v1669, 0.0
        %v1726 = vsel %vm1718, %v1662, 0.0
        %v1727 = vsel %vm1719, %v1670, 0.0
        %v1728 = vsel %vm1718, %v1663, 0.0
        %v1729 = vsel %vm1719, %v1671, 0.0
        %v1730 = vsel %vm1718, %v1664, 0.0
        %v1731 = vsel %vm1719, %v1672, 0.0
        %v1732 = vsel %vm1718, %v1665, 0.0
        %v1733 = vsel %vm1719, %v1673, 0.0
        %v1734 = vsel %vm1718, %v1666, 0.0
        %v1735 = vsel %vm1719, %v1674, 0.0
        %v1736 = vadd.f32 %v1698, %v1720
        %v1737 = vadd.f32 %v1699, %v1721
        %v1738 = vadd.f32 %v1700, %v1722
        %v1739 = vadd.f32 %v1701, %v1723
        %v1740 = vadd.f32 %v1702, %v1724
        %v1741 = vadd.f32 %v1703, %v1725
        %v1742 = vadd.f32 %v1704, %v1726
        %v1743 = vadd.f32 %v1705, %v1727
        %v1744 = vadd.f32 %v1706, %v1728
        %v1745 = vadd.f32 %v1707, %v1729
        %v1746 = vadd.f32 %v1708, %v1730
        %v1747 = vadd.f32 %v1709, %v1731
        %v1748 = vadd.f32 %v1710, %v1732
        %v1749 = vadd.f32 %v1711, %v1733
        %v1750 = vadd.f32 %v1712, %v1734
        %v1751 = vadd.f32 %v1713, %v1735
        %v1752 = vld [vmem:[%s3] sm:$0x1]
        %v1754 = vlaneseq
        %v1755 = vshrl.u32 %v1754, 7
        %v1756 = vsub.s32 0, %v1755
        %v1757 = vrot.slane %v1752, %v1756
        %v1759 = vadd.f32 %v1736, %v1757
        %v1760 = vadd.f32 %v1737, %v1757
        %v1761 = vadd.f32 %v1738, %v1757
        %v1762 = vadd.f32 %v1739, %v1757
        %v1763 = vadd.f32 %v1740, %v1757
        %v1764 = vadd.f32 %v1741, %v1757
        %v1765 = vadd.f32 %v1742, %v1757
        %v1766 = vadd.f32 %v1743, %v1757
        %v1767 = vadd.f32 %v1744, %v1757
        %v1768 = vadd.f32 %v1745, %v1757
        %v1769 = vadd.f32 %v1746, %v1757
        %v1770 = vadd.f32 %v1747, %v1757
        %v1771 = vadd.f32 %v1748, %v1757
        %v1772 = vadd.f32 %v1749, %v1757
        %v1773 = vadd.f32 %v1750, %v1757
        %v1774 = vadd.f32 %v1751, %v1757
        %v1775 = vmax.f32 %v1759, 0.0
        %v1776 = vmax.f32 %v1760, 0.0
        %v1777 = vmax.f32 %v1761, 0.0
        %v1778 = vmax.f32 %v1762, 0.0
        %v1779 = vmax.f32 %v1763, 0.0
        %v1780 = vmax.f32 %v1764, 0.0
        %v1781 = vmax.f32 %v1765, 0.0
        %v1782 = vmax.f32 %v1766, 0.0
        %v1783 = vmax.f32 %v1767, 0.0
        %v1784 = vmax.f32 %v1768, 0.0
        %v1785 = vmax.f32 %v1769, 0.0
        %v1786 = vmax.f32 %v1770, 0.0
        %v1787 = vmax.f32 %v1771, 0.0
        %v1788 = vmax.f32 %v1772, 0.0
        %v1789 = vmax.f32 %v1773, 0.0
        %v1790 = vmax.f32 %v1774, 0.0
        %v1791 = vld [vmem:[%s4] sm:$0x1]
        %v1793 = vlaneseq
        %v1794 = vshrl.u32 %v1793, 7
        %v1795 = vsub.s32 0, %v1794
        %v1796 = vrot.slane %v1791, %v1795
        %v1798 = vmul.f32 %v1775, %v1796
        %v1799 = vmul.f32 %v1776, %v1796
        %v1800 = vmul.f32 %v1777, %v1796
        %v1801 = vmul.f32 %v1778, %v1796
        %v1802 = vmul.f32 %v1779, %v1796
        %v1803 = vmul.f32 %v1780, %v1796
        %v1804 = vmul.f32 %v1781, %v1796
        %v1805 = vmul.f32 %v1782, %v1796
        %v1806 = vmul.f32 %v1783, %v1796
        %v1807 = vmul.f32 %v1784, %v1796
        %v1808 = vmul.f32 %v1785, %v1796
        %v1809 = vmul.f32 %v1786, %v1796
        %v1810 = vmul.f32 %v1787, %v1796
        %v1811 = vmul.f32 %v1788, %v1796
        %v1812 = vmul.f32 %v1789, %v1796
        %v1813 = vmul.f32 %v1790, %v1796
        %vm1814 = vcmask 64512
        %v1815 = vsel %vm1814, %v1798, 0.0
        %1816 = vadd.xlane.f32.xlu0 %v1815
        %v1817 = vpop.xlane.xlu0 %1816
        %v1818 = vsel %vm1814, %v1799, 0.0
        %1819 = vadd.xlane.f32.xlu0 %v1818
        %v1820 = vpop.xlane.xlu0 %1819
        %v1821 = vsel %vm1814, %v1800, 0.0
        %1822 = vadd.xlane.f32.xlu0 %v1821
        %v1823 = vpop.xlane.xlu0 %1822
        %v1824 = vsel %vm1814, %v1801, 0.0
        %1825 = vadd.xlane.f32.xlu0 %v1824
        %v1826 = vpop.xlane.xlu0 %1825
        %v1827 = vsel %vm1814, %v1802, 0.0
        %1828 = vadd.xlane.f32.xlu0 %v1827
        %v1829 = vpop.xlane.xlu0 %1828
        %v1830 = vsel %vm1814, %v1803, 0.0
        %1831 = vadd.xlane.f32.xlu0 %v1830
        %v1832 = vpop.xlane.xlu0 %1831
        %v1833 = vsel %vm1814, %v1804, 0.0
        %1834 = vadd.xlane.f32.xlu0 %v1833
        %v1835 = vpop.xlane.xlu0 %1834
        %v1836 = vsel %vm1814, %v1805, 0.0
        %1837 = vadd.xlane.f32.xlu0 %v1836
        %v1838 = vpop.xlane.xlu0 %1837
        %v1839 = vsel %vm1814, %v1806, 0.0
        %1840 = vadd.xlane.f32.xlu0 %v1839
        %v1841 = vpop.xlane.xlu0 %1840
        %v1842 = vsel %vm1814, %v1807, 0.0
        %1843 = vadd.xlane.f32.xlu0 %v1842
        %v1844 = vpop.xlane.xlu0 %1843
        %v1845 = vsel %vm1814, %v1808, 0.0
        %1846 = vadd.xlane.f32.xlu0 %v1845
        %v1847 = vpop.xlane.xlu0 %1846
        %v1848 = vsel %vm1814, %v1809, 0.0
        %1849 = vadd.xlane.f32.xlu0 %v1848
        %v1850 = vpop.xlane.xlu0 %1849
        %v1851 = vsel %vm1814, %v1810, 0.0
        %1852 = vadd.xlane.f32.xlu0 %v1851
        %v1853 = vpop.xlane.xlu0 %1852
        %v1854 = vsel %vm1814, %v1811, 0.0
        %1855 = vadd.xlane.f32.xlu0 %v1854
        %v1856 = vpop.xlane.xlu0 %1855
        %v1857 = vsel %vm1814, %v1812, 0.0
        %1858 = vadd.xlane.f32.xlu0 %v1857
        %v1859 = vpop.xlane.xlu0 %1858
        %v1860 = vsel %vm1814, %v1813, 0.0
        %1861 = vadd.xlane.f32.xlu0 %v1860
        %v1862 = vpop.xlane.xlu0 %1861
        %v1863 = vld [vmem:[#allocation3] sm:$0x1]
        %v1865 = vlaneseq
        %v1866 = vshrl.u32 %v1865, 7
        %v1867 = vsub.s32 0, %v1866
        %v1868 = vrot.slane %v1863, %v1867
        %1869 = vset.pattern.permute.xlu0 0
        %1870 = vperm.xlu0 %1869, %v1868
        %v1871 = vpop.permute.xlu0 %1870
        %v1873 = vadd.f32 %v1817, %v1871
        %v1874 = vadd.f32 %v1820, %v1871
        %v1875 = vadd.f32 %v1823, %v1871
        %v1876 = vadd.f32 %v1826, %v1871
        %v1877 = vadd.f32 %v1829, %v1871
        %v1878 = vadd.f32 %v1832, %v1871
        %v1879 = vadd.f32 %v1835, %v1871
        %v1880 = vadd.f32 %v1838, %v1871
        %v1881 = vadd.f32 %v1841, %v1871
        %v1882 = vadd.f32 %v1844, %v1871
        %v1883 = vadd.f32 %v1847, %v1871
        %v1884 = vadd.f32 %v1850, %v1871
        %v1885 = vadd.f32 %v1853, %v1871
        %v1886 = vadd.f32 %v1856, %v1871
        %v1887 = vadd.f32 %v1859, %v1871
        %v1888 = vadd.f32 %v1862, %v1871
        %v1889 = vmax.f32 %v1873, 0.0
        %v1890 = vmax.f32 %v1874, 0.0
        %v1891 = vmax.f32 %v1875, 0.0
        %v1892 = vmax.f32 %v1876, 0.0
        %v1893 = vmax.f32 %v1877, 0.0
        %v1894 = vmax.f32 %v1878, 0.0
        %v1895 = vmax.f32 %v1879, 0.0
        %v1896 = vmax.f32 %v1880, 0.0
        %v1897 = vmax.f32 %v1881, 0.0
        %v1898 = vmax.f32 %v1882, 0.0
        %v1899 = vmax.f32 %v1883, 0.0
        %v1900 = vmax.f32 %v1884, 0.0
        %v1901 = vmax.f32 %v1885, 0.0
        %v1902 = vmax.f32 %v1886, 0.0
        %v1903 = vmax.f32 %v1887, 0.0
        %v1904 = vmax.f32 %v1888, 0.0
        %v1921 = vlaneseq
        %v1922 = vand.u32 %v1921, 127
        %v1923 = vlaneseq
        %v1924 = vshrl.u32 %v1923, 7
        %v1925 = vsub.s32 %v1922, %v1924
        %v1926 = vrot.slane %v1889, %v1925
        %v1927 = vadd.s32 %v1922, 4294967288
        %v1928 = vlaneseq
        %v1929 = vshrl.u32 %v1928, 7
        %v1930 = vsub.s32 %v1927, %v1929
        %v1931 = vrot.slane %v1890, %v1930
        %vm1932 = vcmask 130112
        %v1933 = vsel %vm1932, %v1931, %v1926
        %v1934 = vlaneseq
        %v1935 = vshrl.u32 %v1934, 7
        %v1936 = vsub.s32 %v1922, %v1935
        %v1937 = vrot.slane %v1891, %v1936
        %v1938 = vlaneseq
        %v1939 = vshrl.u32 %v1938, 7
        %v1940 = vsub.s32 %v1927, %v1939
        %v1941 = vrot.slane %v1892, %v1940
        %v1942 = vsel %vm1932, %v1941, %v1937
        %v1943 = vlaneseq
        %v1944 = vshrl.u32 %v1943, 7
        %v1945 = vsub.s32 %v1922, %v1944
        %v1946 = vrot.slane %v1893, %v1945
        %v1947 = vlaneseq
        %v1948 = vshrl.u32 %v1947, 7
        %v1949 = vsub.s32 %v1927, %v1948
        %v1950 = vrot.slane %v1894, %v1949
        %v1951 = vsel %vm1932, %v1950, %v1946
        %v1952 = vlaneseq
        %v1953 = vshrl.u32 %v1952, 7
        %v1954 = vsub.s32 %v1922, %v1953
        %v1955 = vrot.slane %v1895, %v1954
        %v1956 = vlaneseq
        %v1957 = vshrl.u32 %v1956, 7
        %v1958 = vsub.s32 %v1927, %v1957
        %v1959 = vrot.slane %v1896, %v1958
        %v1960 = vsel %vm1932, %v1959, %v1955
        %v1961 = vlaneseq
        %v1962 = vshrl.u32 %v1961, 7
        %v1963 = vsub.s32 %v1922, %v1962
        %v1964 = vrot.slane %v1897, %v1963
        %v1965 = vlaneseq
        %v1966 = vshrl.u32 %v1965, 7
        %v1967 = vsub.s32 %v1927, %v1966
        %v1968 = vrot.slane %v1898, %v1967
        %v1969 = vsel %vm1932, %v1968, %v1964
        %v1970 = vlaneseq
        %v1971 = vshrl.u32 %v1970, 7
        %v1972 = vsub.s32 %v1922, %v1971
        %v1973 = vrot.slane %v1899, %v1972
        %v1974 = vlaneseq
        %v1975 = vshrl.u32 %v1974, 7
        %v1976 = vsub.s32 %v1927, %v1975
        %v1977 = vrot.slane %v1900, %v1976
        %v1978 = vsel %vm1932, %v1977, %v1973
        %v1979 = vlaneseq
        %v1980 = vshrl.u32 %v1979, 7
        %v1981 = vsub.s32 %v1922, %v1980
        %v1982 = vrot.slane %v1901, %v1981
        %v1983 = vlaneseq
        %v1984 = vshrl.u32 %v1983, 7
        %v1985 = vsub.s32 %v1927, %v1984
        %v1986 = vrot.slane %v1902, %v1985
        %v1987 = vsel %vm1932, %v1986, %v1982
        %v1988 = vlaneseq
        %v1989 = vshrl.u32 %v1988, 7
        %v1990 = vsub.s32 %v1922, %v1989
        %v1991 = vrot.slane %v1903, %v1990
        %v1992 = vlaneseq
        %v1993 = vshrl.u32 %v1992, 7
        %v1994 = vsub.s32 %v1927, %v1993
        %v1995 = vrot.slane %v1904, %v1994
        %v1996 = vsel %vm1932, %v1995, %v1991
        %vm1997 = vcmask 1041409
        %v1998 = vsel %vm1997, %v1942, %v1933
        %vm1999 = vcmask 1042434
        %v2000 = vsel %vm1999, %v1951, %v1998
        %vm2001 = vcmask 1043459
        %v2002 = vsel %vm2001, %v1960, %v2000
        %vm2003 = vcmask 1044484
        %v2004 = vsel %vm2003, %v1969, %v2002
        %vm2005 = vcmask 1045509
        %v2006 = vsel %vm2005, %v1978, %v2004
        %vm2007 = vcmask 1046534
        %v2008 = vsel %vm2007, %v1987, %v2006
        %vm2009 = vcmask 1047559
        %v2010 = vsel %vm2009, %v1996, %v2008
        %2012 = vst.msk [vmem:[%s298] sm:$0xff] %vm453, %v2010
        %s2013 = sand.u32 %s184, 1
        %s2014 = scalar_lea.sflag [#allocation5], %s2013
        %s2015 = sand.u32 %s184, 1
        %s2016 = smul.addr %s2015, 8
        %s2017 = scalar_lea.vmem [#allocation4], %s2016
        // Predicated region
        $region45: #{depth_pro_forward.11} parent=43 // pred_check
          %p2018 = pneg %p194
        $region46: #{depth_pro_forward.11} parent=43 // pred_check_branch
          %2020 = sbr.rel (%p2018) target = $region48
        $region47: #{depth_pro_forward.11} parent=43 // pred_region
          %s2022 = ssub.s32 128, 128
          %2023 = vsyncadd %s2014, %s2022
          %s2024 = smul.addr %s26, 2
          %s2025 = sadd.s32 %s27, %s2024
          %s2026 = smul.addr %s2025, 128
          %s2027 = scalar_lea.hbm %s6, %s2026
          %s2029 = sshll.u32 %s2017, 4
          %s2030 = int_to_ptr.vmem [resolvable:$true] %s2029
          %2032 = dma.vmem_to_hbm [thread:$0]  %s2030, 128, %s2027, %s2014
        $region48: #{depth_pro_forward.11} parent=43 // pred_fallthru
          _
      $region44: #{depth_pro_forward.11} parent=5 // pred_fallthru
        _
      %p2033 = scmp.le.s32.totalorder 2, %s17
      // Predicated region
      $region49: #{depth_pro_forward.11} parent=5 // pred_check
        %p2034 = pneg %p2033
      $region50: #{depth_pro_forward.11} parent=5 // pred_check_branch
        %2036 = sbr.rel (%p2034) target = $region52
      $region51: #{depth_pro_forward.11} parent=5 // pred_region
        %s2037 = ssub.s32 %s17, 2
        // Predicated region
        $region53: #{depth_pro_forward.11} parent=51 // pred_check
          %p2038 = pneg %p200
        $region54: #{depth_pro_forward.11} parent=51 // pred_check_branch
          %2040 = sbr.rel (%p2038) target = $region56
        $region55: #{depth_pro_forward.11} parent=51 // pred_region
          %s2041 = sand.u32 %s185, 1
          %s2042 = scalar_lea.sflag [#allocation5], %s2041
          %s2043 = sand.u32 %s185, 1
          %s2044 = smul.addr %s2043, 8
          %s2045 = scalar_lea.vmem [#allocation4], %s2044
          %2046 = dma.done %s2042, 128
        $region56: #{depth_pro_forward.11} parent=51 // pred_fallthru
          _
      $region52: #{depth_pro_forward.11} parent=5 // pred_fallthru
        _
    $region6: #{depth_pro_forward.11} parent=1 // loop_footer
      %s21 = sadd.s32 1, %s17
    $region7: #{depth_pro_forward.11} parent=1 // loop_footer_branch
      %16 = sbr.rel target = $region3
    $region8: #{depth_pro_forward.11} parent=1 // loop_exit
      _
    %2047 = vsyncpa [#allocation5], 1
    %s2048 = scalar_lea.sflag [#allocation5], 1
    %2049 = vsyncpa %s2048, 1

</llo_original>
